<compile_context>
chip_gen: v7x
topology: tpu7x:2x2x1
jax: 0.10.0
libtpu: 0.0.40
codegen_flags: <defaults>
</compile_context>

<pallas_src>
import functools

import jax
import jax.numpy as jnp
from jax.experimental import pallas as pl
from jax.experimental.pallas import tpu as pltpu


def siglip_attention_kernel(x_ref, wq_ref, bq_ref, wk_ref, bk_ref,
                            wv_ref, bv_ref, wo_ref, bo_ref,
                            out_ref, attn_ref, acc_ref,
                            *, heads_per_group, head_dim, scale, num_groups):
    g = pl.program_id(1)

    @pl.when(g == 0)
    def _init():
        acc_ref[...] = jnp.zeros_like(acc_ref)

    x = x_ref[0]                                  # (S, E)
    dtype = x.dtype

    # Per-group QKV projections. Weights arrive pre-transposed as
    # [E_in, group_width]; biases as [1, group_width].  Accumulate in f32.
    q = jnp.dot(x, wq_ref[...], preferred_element_type=jnp.float32) + bq_ref[0]
    k = jnp.dot(x, wk_ref[...], preferred_element_type=jnp.float32) + bk_ref[0]
    v = jnp.dot(x, wv_ref[...], preferred_element_type=jnp.float32) + bv_ref[0]
    # Fold the 1/sqrt(D) softmax scale into q once (instead of H*S*S scales).
    q = (q * scale).astype(dtype)
    k = k.astype(dtype)
    v = v.astype(dtype)

    group_acc = None
    for i in range(heads_per_group):              # static, small loop
        sl = slice(i * head_dim, (i + 1) * head_dim)
        qh = q[:, sl]                             # (S, D)
        kh = k[:, sl]                             # (S, D)
        vh = v[:, sl]                             # (S, D)

        # scores: contract head_dim directly (no explicit transpose of kh)
        s = jax.lax.dot_general(qh, kh, (((1,), (1,)), ((), ())),
                                preferred_element_type=jnp.float32)   # (S, S)
        s = s - jnp.max(s, axis=-1, keepdims=True)
        e = jnp.exp(s)
        # (S,1) reciprocal + broadcast multiply instead of (S,S) divides.
        inv = 1.0 / jnp.sum(e, axis=-1, keepdims=True)
        p = (e * inv).astype(dtype)               # matches .to(query.dtype)

        attn_ref[0, i] = p                        # per-head attn weights tile

        ho = jnp.dot(p, vh, preferred_element_type=jnp.float32).astype(dtype)
        # Per-head contribution to the output projection: (S,D) @ (D,E).
        c = jnp.dot(ho, wo_ref[i * head_dim:(i + 1) * head_dim, :],
                    preferred_element_type=jnp.float32)
        group_acc = c if group_acc is None else group_acc + c

    acc_ref[...] += group_acc

    @pl.when(g == num_groups - 1)
    def _finalize():
        out_ref[0] = (acc_ref[...] + bo_ref[0]).astype(out_ref.dtype)


def siglip_attention(hidden_states, params, num_heads):
    """hidden_states: [B, S, E]; params: PyTorch-style [E_out, E_in] weights."""
    B, S, E = hidden_states.shape
    head_dim = E // num_heads
    scale = head_dim ** (-0.5)

    # Head grouping: smallest group whose lane width (G*D) is a multiple of
    # 128; fall back to all heads (block == full dim, always layout-legal).
    G = num_heads
    for cand in range(1, num_heads + 1):
        if num_heads % cand == 0 and (cand * head_dim) % 128 == 0:
            G = cand
            break
    GW = G * head_dim
    num_groups = num_heads // G

    # Pre-transpose weights once in the wrapper (kernel sees [E_in, E_out]).
    wq_t = jnp.transpose(params["wq"])
    wk_t = jnp.transpose(params["wk"])
    wv_t = jnp.transpose(params["wv"])
    wo_t = jnp.transpose(params["wo"])
    bq = params["bq"].reshape(1, E)
    bk = params["bk"].reshape(1, E)
    bv = params["bv"].reshape(1, E)
    bo = params["bo"].reshape(1, E)

    kernel = functools.partial(
        siglip_attention_kernel,
        heads_per_group=G, head_dim=head_dim, scale=scale,
        num_groups=num_groups)

    qkv_w_spec = pl.BlockSpec((E, GW), lambda b, g: (0, g))   # per-group cols
    qkv_b_spec = pl.BlockSpec((1, GW), lambda b, g: (0, g))
    out_w_spec = pl.BlockSpec((GW, E), lambda b, g: (g, 0))   # per-group rows
    out_b_spec = pl.BlockSpec((1, E), lambda b, g: (0, 0))

    flops = 8 * B * S * E * E + 4 * B * num_heads * S * S * head_dim
    transcendentals = B * num_heads * S * S
    bytes_accessed = 4 * (2 * B * S * E + 4 * E * E + 4 * E
                          + B * num_heads * S * S)

    out, attn = pl.pallas_call(
        kernel,
        grid=(B, num_groups),
        in_specs=[
            pl.BlockSpec((1, S, E), lambda b, g: (b, 0, 0)),   # hidden_states
            qkv_w_spec, qkv_b_spec,                            # q_proj
            qkv_w_spec, qkv_b_spec,                            # k_proj
            qkv_w_spec, qkv_b_spec,                            # v_proj
            out_w_spec, out_b_spec,                            # out_proj
        ],
        out_specs=[
            pl.BlockSpec((1, S, E), lambda b, g: (b, 0, 0)),
            pl.BlockSpec((1, G, S, S), lambda b, g: (b, g, 0, 0)),
        ],
        out_shape=(
            jax.ShapeDtypeStruct((B, S, E), hidden_states.dtype),
            jax.ShapeDtypeStruct((B, num_heads, S, S), hidden_states.dtype),
        ),
        scratch_shapes=[pltpu.VMEM((S, E), jnp.float32)],
        compiler_params=pltpu.CompilerParams(
            dimension_semantics=("parallel", "arbitrary")),
        cost_estimate=pl.CostEstimate(
            flops=flops, transcendentals=transcendentals,
            bytes_accessed=bytes_accessed),
    )(hidden_states, wq_t, bq, wk_t, bk, wv_t, bv, wo_t, bo)
    return out, attn


def ref_attention(x, params, num_heads):
    """Pure-JAX reference matching the PyTorch forward."""
    B, S, E = x.shape
    D = E // num_heads
    scale = D ** (-0.5)
    q = x @ params["wq"].T + params["bq"]
    k = x @ params["wk"].T + params["bk"]
    v = x @ params["wv"].T + params["bv"]
    q = q.reshape(B, S, num_heads, D).transpose(0, 2, 1, 3)
    k = k.reshape(B, S, num_heads, D).transpose(0, 2, 1, 3)
    v = v.reshape(B, S, num_heads, D).transpose(0, 2, 1, 3)
    aw = jnp.einsum("bhqd,bhkd->bhqk", q, k) * scale
    aw = jax.nn.softmax(aw.astype(jnp.float32), axis=-1).astype(q.dtype)
    ao = jnp.einsum("bhqk,bhkd->bhqd", aw, v)
    ao = ao.transpose(0, 2, 1, 3).reshape(B, S, E)
    out = ao @ params["wo"].T + params["bo"]
    return out, aw


if __name__ == "__main__":
    # Small config consistent with SiglipAttention (lane-dense demo shapes):
    # hidden_size=256, 4 heads (head_dim=64), seq=128, batch=2.
    B, S, E, H = 2, 128, 256, 4
    key = jax.random.PRNGKey(0)
    keys = jax.random.split(key, 9)

    params = {
        "wq": 0.05 * jax.random.normal(keys[0], (E, E), jnp.float32),
        "bq": 0.05 * jax.random.normal(keys[1], (E,), jnp.float32),
        "wk": 0.05 * jax.random.normal(keys[2], (E, E), jnp.float32),
        "bk": 0.05 * jax.random.normal(keys[3], (E,), jnp.float32),
        "wv": 0.05 * jax.random.normal(keys[4], (E, E), jnp.float32),
        "bv": 0.05 * jax.random.normal(keys[5], (E,), jnp.float32),
        "wo": 0.05 * jax.random.normal(keys[6], (E, E), jnp.float32),
        "bo": 0.05 * jax.random.normal(keys[7], (E,), jnp.float32),
    }
    x = jax.random.normal(keys[8], (B, S, E), jnp.float32)

    out, attn = siglip_attention(x, params, num_heads=H)
    out, attn = jax.block_until_ready((out, attn))

    with jax.default_matmul_precision("highest"):
        ref_out, ref_attn = ref_attention(x, params, num_heads=H)

    assert out.shape == (B, S, E) and attn.shape == (B, H, S, S)
    assert jnp.allclose(out, ref_out, atol=2e-4, rtol=2e-4), \
        float(jnp.max(jnp.abs(out - ref_out)))
    assert jnp.allclose(attn, ref_attn, atol=2e-5, rtol=2e-5), \
        float(jnp.max(jnp.abs(attn - ref_attn)))

    print("KERNEL_OK")
</pallas_src>

<mosaic_0001>
module attributes {stable_mosaic.version = 11 : i64} {
  func.func @siglip_attention_kernel(%arg0: i32, %arg1: i32, %arg2: memref<1x128x256xf32, #tpu.memory_space<vmem>>, %arg3: memref<256x128xf32, #tpu.memory_space<vmem>>, %arg4: memref<1x128xf32, #tpu.memory_space<vmem>>, %arg5: memref<256x128xf32, #tpu.memory_space<vmem>>, %arg6: memref<1x128xf32, #tpu.memory_space<vmem>>, %arg7: memref<256x128xf32, #tpu.memory_space<vmem>>, %arg8: memref<1x128xf32, #tpu.memory_space<vmem>>, %arg9: memref<128x256xf32, #tpu.memory_space<vmem>>, %arg10: memref<1x256xf32, #tpu.memory_space<vmem>>, %arg11: memref<1x128x256xf32, #tpu.memory_space<vmem>>, %arg12: memref<1x2x128x128xf32, #tpu.memory_space<vmem>>, %arg13: memref<128x256xf32, #tpu.memory_space<vmem>>) attributes {dimension_semantics = [#tpu.dimension_semantics<parallel>, #tpu.dimension_semantics<arbitrary>], iteration_bounds = array<i64: 2, 2>, scalar_prefetch = 0 : i64, scratch_operands = 1 : i64, tpu.core_type = #tpu.core_type<tc>, window_params = [{transform_indices = @transform_0, window_bounds = array<i64: 1, 128, 256>}, {transform_indices = @transform_1, window_bounds = array<i64: 256, 128>}, {transform_indices = @transform_2, window_bounds = array<i64: 1, 128>}, {transform_indices = @transform_3, window_bounds = array<i64: 256, 128>}, {transform_indices = @transform_4, window_bounds = array<i64: 1, 128>}, {transform_indices = @transform_5, window_bounds = array<i64: 256, 128>}, {transform_indices = @transform_6, window_bounds = array<i64: 1, 128>}, {transform_indices = @transform_7, window_bounds = array<i64: 128, 256>}, {pipeline_mode = #tpu.pipeline_mode<synchronous>, transform_indices = @transform_8, window_bounds = array<i64: 1, 256>}, {transform_indices = @transform_9, window_bounds = array<i64: 1, 128, 256>}, {transform_indices = @transform_10, window_bounds = array<i64: 1, 2, 128, 128>}]} {
    %c0_i32 = arith.constant 0 : i32
    %0 = arith.cmpi eq, %arg1, %c0_i32 : i32
    %1 = arith.extui %0 : i1 to i32
    %c0_i32_0 = arith.constant 0 : i32
    %2 = arith.cmpi ne, %1, %c0_i32_0 : i32
    scf.if %2 {
      %cst_45 = arith.constant 0.000000e+00 : f32
      %77 = vector.broadcast %cst_45 : f32 to vector<128x256xf32>
      %c0_46 = arith.constant 0 : index
      %c0_47 = arith.constant 0 : index
      %78 = vector.load %arg13[%c0_46, %c0_47] : memref<128x256xf32, #tpu.memory_space<vmem>>, vector<128x256xf32>
      tpu.vector_store %arg13[%c0_46, %c0_47], %77 {strides = array<i32>} : memref<128x256xf32, #tpu.memory_space<vmem>>, vector<128x256xf32>,
    } else {
    }
    %c0 = arith.constant 0 : index
    %c0_1 = arith.constant 0 : index
    %c0_2 = arith.constant 0 : index
    %3 = vector.load %arg2[%c0, %c0_1, %c0_2] : memref<1x128x256xf32, #tpu.memory_space<vmem>>, vector<1x128x256xf32>
    %4 = vector.shape_cast %3 : vector<1x128x256xf32> to vector<128x256xf32>
    %c0_3 = arith.constant 0 : index
    %c0_4 = arith.constant 0 : index
    %5 = vector.load %arg3[%c0_3, %c0_4] : memref<256x128xf32, #tpu.memory_space<vmem>>, vector<256x128xf32>
    %cst = arith.constant dense<0.000000e+00> : vector<128x128xf32>
    %6 = tpu.matmul %4, %5, %cst {dimension_numbers = #tpu.dot_dimension_numbers<[1], [0], [0], [1], [0, 0, 1, 1], [], []>} : vector<128x256xf32>, vector<256x128xf32>, vector<128x128xf32> -> vector<128x128xf32>
    %c0_5 = arith.constant 0 : index
    %c0_6 = arith.constant 0 : index
    %7 = vector.load %arg4[%c0_5, %c0_6] : memref<1x128xf32, #tpu.memory_space<vmem>>, vector<1x128xf32>
    %8 = vector.shape_cast %7 : vector<1x128xf32> to vector<128xf32>
    %9 = vector.shape_cast %8 : vector<128xf32> to vector<1x128xf32>
    %10 = vector.broadcast %9 : vector<1x128xf32> to vector<128x128xf32>
    %11 = arith.addf %6, %10 : vector<128x128xf32>
    %c0_7 = arith.constant 0 : index
    %c0_8 = arith.constant 0 : index
    %12 = vector.load %arg5[%c0_7, %c0_8] : memref<256x128xf32, #tpu.memory_space<vmem>>, vector<256x128xf32>
    %cst_9 = arith.constant dense<0.000000e+00> : vector<128x128xf32>
    %13 = tpu.matmul %4, %12, %cst_9 {dimension_numbers = #tpu.dot_dimension_numbers<[1], [0], [0], [1], [0, 0, 1, 1], [], []>} : vector<128x256xf32>, vector<256x128xf32>, vector<128x128xf32> -> vector<128x128xf32>
    %c0_10 = arith.constant 0 : index
    %c0_11 = arith.constant 0 : index
    %14 = vector.load %arg6[%c0_10, %c0_11] : memref<1x128xf32, #tpu.memory_space<vmem>>, vector<1x128xf32>
    %15 = vector.shape_cast %14 : vector<1x128xf32> to vector<128xf32>
    %16 = vector.shape_cast %15 : vector<128xf32> to vector<1x128xf32>
    %17 = vector.broadcast %16 : vector<1x128xf32> to vector<128x128xf32>
    %18 = arith.addf %13, %17 : vector<128x128xf32>
    %c0_12 = arith.constant 0 : index
    %c0_13 = arith.constant 0 : index
    %19 = vector.load %arg7[%c0_12, %c0_13] : memref<256x128xf32, #tpu.memory_space<vmem>>, vector<256x128xf32>
    %cst_14 = arith.constant dense<0.000000e+00> : vector<128x128xf32>
    %20 = tpu.matmul %4, %19, %cst_14 {dimension_numbers = #tpu.dot_dimension_numbers<[1], [0], [0], [1], [0, 0, 1, 1], [], []>} : vector<128x256xf32>, vector<256x128xf32>, vector<128x128xf32> -> vector<128x128xf32>
    %c0_15 = arith.constant 0 : index
    %c0_16 = arith.constant 0 : index
    %21 = vector.load %arg8[%c0_15, %c0_16] : memref<1x128xf32, #tpu.memory_space<vmem>>, vector<1x128xf32>
    %22 = vector.shape_cast %21 : vector<1x128xf32> to vector<128xf32>
    %23 = vector.shape_cast %22 : vector<128xf32> to vector<1x128xf32>
    %24 = vector.broadcast %23 : vector<1x128xf32> to vector<128x128xf32>
    %25 = arith.addf %20, %24 : vector<128x128xf32>
    %cst_17 = arith.constant 1.250000e-01 : f32
    %26 = vector.broadcast %cst_17 : f32 to vector<128x128xf32>
    %27 = arith.mulf %11, %26 : vector<128x128xf32>
    %28 = vector.extract_strided_slice %27 {offsets = [0, 0], sizes = [128, 64], strides = [1, 1]} : vector<128x128xf32> to vector<128x64xf32>
    %29 = vector.extract_strided_slice %18 {offsets = [0, 0], sizes = [128, 64], strides = [1, 1]} : vector<128x128xf32> to vector<128x64xf32>
    %30 = vector.extract_strided_slice %25 {offsets = [0, 0], sizes = [128, 64], strides = [1, 1]} : vector<128x128xf32> to vector<128x64xf32>
    %cst_18 = arith.constant dense<0.000000e+00> : vector<128x128xf32>
    %31 = tpu.matmul %28, %29, %cst_18 {dimension_numbers = #tpu.dot_dimension_numbers<[1], [1], [0], [0], [0, 0, 1, 0], [], []>} : vector<128x64xf32>, vector<128x64xf32>, vector<128x128xf32> -> vector<128x128xf32>
    %cst_19 = arith.constant dense<0xFF800000> : vector<128xf32>
    %32 = vector.multi_reduction <maximumf>, %31, %cst_19 [1] : vector<128x128xf32> to vector<128xf32>
    %33 = vector.shape_cast %32 : vector<128xf32> to vector<128x1xf32>
    %34 = vector.broadcast %33 : vector<128x1xf32> to vector<128x128xf32>
    %35 = arith.subf %31, %34 : vector<128x128xf32>
    %36 = math.exp %35 : vector<128x128xf32>
    %cst_20 = arith.constant dense<0.000000e+00> : vector<128xf32>
    %37 = vector.multi_reduction <add>, %36, %cst_20 [1] : vector<128x128xf32> to vector<128xf32>
    %38 = vector.shape_cast %37 : vector<128xf32> to vector<128x1xf32>
    %cst_21 = arith.constant 1.000000e+00 : f32
    %39 = vector.broadcast %cst_21 : f32 to vector<128x1xf32>
    %40 = arith.divf %39, %38 : vector<128x1xf32>
    %41 = vector.broadcast %40 : vector<128x1xf32> to vector<128x128xf32>
    %42 = arith.mulf %36, %41 : vector<128x128xf32>
    %c0_22 = arith.constant 0 : index
    %c0_23 = arith.constant 0 : index
    %c0_24 = arith.constant 0 : index
    %c0_25 = arith.constant 0 : index
    %43 = vector.load %arg12[%c0_22, %c0_23, %c0_24, %c0_25] : memref<1x2x128x128xf32, #tpu.memory_space<vmem>>, vector<1x1x128x128xf32>
    %44 = vector.shape_cast %43 : vector<1x1x128x128xf32> to vector<128x128xf32>
    %45 = vector.shape_cast %42 : vector<128x128xf32> to vector<1x1x128x128xf32>
    tpu.vector_store %arg12[%c0_22, %c0_23, %c0_24, %c0_25], %45 {strides = array<i32>} : memref<1x2x128x128xf32, #tpu.memory_space<vmem>>, vector<1x1x128x128xf32>,
    %cst_26 = arith.constant dense<0.000000e+00> : vector<128x64xf32>
    %46 = tpu.matmul %42, %30, %cst_26 {dimension_numbers = #tpu.dot_dimension_numbers<[1], [0], [0], [1], [0, 0, 1, 1], [], []>} : vector<128x128xf32>, vector<128x64xf32>, vector<128x64xf32> -> vector<128x64xf32>
    %c0_27 = arith.constant 0 : index
    %c0_28 = arith.constant 0 : index
    %47 = vector.load %arg9[%c0_27, %c0_28] : memref<128x256xf32, #tpu.memory_space<vmem>>, vector<64x256xf32>
    %cst_29 = arith.constant dense<0.000000e+00> : vector<128x256xf32>
    %48 = tpu.matmul %46, %47, %cst_29 {dimension_numbers = #tpu.dot_dimension_numbers<[1], [0], [0], [1], [0, 0, 1, 1], [], []>} : vector<128x64xf32>, vector<64x256xf32>, vector<128x256xf32> -> vector<128x256xf32>
    %49 = vector.extract_strided_slice %27 {offsets = [0, 64], sizes = [128, 64], strides = [1, 1]} : vector<128x128xf32> to vector<128x64xf32>
    %50 = vector.extract_strided_slice %18 {offsets = [0, 64], sizes = [128, 64], strides = [1, 1]} : vector<128x128xf32> to vector<128x64xf32>
    %51 = vector.extract_strided_slice %25 {offsets = [0, 64], sizes = [128, 64], strides = [1, 1]} : vector<128x128xf32> to vector<128x64xf32>
    %cst_30 = arith.constant dense<0.000000e+00> : vector<128x128xf32>
    %52 = tpu.matmul %49, %50, %cst_30 {dimension_numbers = #tpu.dot_dimension_numbers<[1], [1], [0], [0], [0, 0, 1, 0], [], []>} : vector<128x64xf32>, vector<128x64xf32>, vector<128x128xf32> -> vector<128x128xf32>
    %cst_31 = arith.constant dense<0xFF800000> : vector<128xf32>
    %53 = vector.multi_reduction <maximumf>, %52, %cst_31 [1] : vector<128x128xf32> to vector<128xf32>
    %54 = vector.shape_cast %53 : vector<128xf32> to vector<128x1xf32>
    %55 = vector.broadcast %54 : vector<128x1xf32> to vector<128x128xf32>
    %56 = arith.subf %52, %55 : vector<128x128xf32>
    %57 = math.exp %56 : vector<128x128xf32>
    %cst_32 = arith.constant dense<0.000000e+00> : vector<128xf32>
    %58 = vector.multi_reduction <add>, %57, %cst_32 [1] : vector<128x128xf32> to vector<128xf32>
    %59 = vector.shape_cast %58 : vector<128xf32> to vector<128x1xf32>
    %cst_33 = arith.constant 1.000000e+00 : f32
    %60 = vector.broadcast %cst_33 : f32 to vector<128x1xf32>
    %61 = arith.divf %60, %59 : vector<128x1xf32>
    %62 = vector.broadcast %61 : vector<128x1xf32> to vector<128x128xf32>
    %63 = arith.mulf %57, %62 : vector<128x128xf32>
    %c0_34 = arith.constant 0 : index
    %c1 = arith.constant 1 : index
    %c0_35 = arith.constant 0 : index
    %c0_36 = arith.constant 0 : index
    %64 = vector.load %arg12[%c0_34, %c1, %c0_35, %c0_36] : memref<1x2x128x128xf32, #tpu.memory_space<vmem>>, vector<1x1x128x128xf32>
    %65 = vector.shape_cast %64 : vector<1x1x128x128xf32> to vector<128x128xf32>
    %66 = vector.shape_cast %63 : vector<128x128xf32> to vector<1x1x128x128xf32>
    tpu.vector_store %arg12[%c0_34, %c1, %c0_35, %c0_36], %66 {strides = array<i32>} : memref<1x2x128x128xf32, #tpu.memory_space<vmem>>, vector<1x1x128x128xf32>,
    %cst_37 = arith.constant dense<0.000000e+00> : vector<128x64xf32>
    %67 = tpu.matmul %63, %51, %cst_37 {dimension_numbers = #tpu.dot_dimension_numbers<[1], [0], [0], [1], [0, 0, 1, 1], [], []>} : vector<128x128xf32>, vector<128x64xf32>, vector<128x64xf32> -> vector<128x64xf32>
    %c64 = arith.constant 64 : index
    %c0_38 = arith.constant 0 : index
    %68 = vector.load %arg9[%c64, %c0_38] : memref<128x256xf32, #tpu.memory_space<vmem>>, vector<64x256xf32>
    %cst_39 = arith.constant dense<0.000000e+00> : vector<128x256xf32>
    %69 = tpu.matmul %67, %68, %cst_39 {dimension_numbers = #tpu.dot_dimension_numbers<[1], [0], [0], [1], [0, 0, 1, 1], [], []>} : vector<128x64xf32>, vector<64x256xf32>, vector<128x256xf32> -> vector<128x256xf32>
    %70 = arith.addf %48, %69 : vector<128x256xf32>
    %c0_40 = arith.constant 0 : index
    %c0_41 = arith.constant 0 : index
    %71 = vector.load %arg13[%c0_40, %c0_41] : memref<128x256xf32, #tpu.memory_space<vmem>>, vector<128x256xf32>
    %72 = arith.addf %71, %70 : vector<128x256xf32>
    %c0_42 = arith.constant 0 : index
    %c0_43 = arith.constant 0 : index
    %73 = vector.load %arg13[%c0_42, %c0_43] : memref<128x256xf32, #tpu.memory_space<vmem>>, vector<128x256xf32>
    tpu.vector_store %arg13[%c0_42, %c0_43], %72 {strides = array<i32>} : memref<128x256xf32, #tpu.memory_space<vmem>>, vector<128x256xf32>,
    %c1_i32 = arith.constant 1 : i32
    %74 = arith.cmpi eq, %arg1, %c1_i32 : i32
    %75 = arith.extui %74 : i1 to i32
    %c0_i32_44 = arith.constant 0 : i32
    %76 = arith.cmpi ne, %75, %c0_i32_44 : i32
    scf.if %76 {
      %c0_45 = arith.constant 0 : index
      %c0_46 = arith.constant 0 : index
      %77 = vector.load %arg13[%c0_45, %c0_46] : memref<128x256xf32, #tpu.memory_space<vmem>>, vector<128x256xf32>
      %c0_47 = arith.constant 0 : index
      %c0_48 = arith.constant 0 : index
      %78 = vector.load %arg10[%c0_47, %c0_48] : memref<1x256xf32, #tpu.memory_space<vmem>>, vector<1x256xf32>
      %79 = vector.shape_cast %78 : vector<1x256xf32> to vector<256xf32>
      %80 = vector.shape_cast %79 : vector<256xf32> to vector<1x256xf32>
      %81 = vector.broadcast %80 : vector<1x256xf32> to vector<128x256xf32>
      %82 = arith.addf %77, %81 : vector<128x256xf32>
      %c0_49 = arith.constant 0 : index
      %c0_50 = arith.constant 0 : index
      %c0_51 = arith.constant 0 : index
      %83 = vector.load %arg11[%c0_49, %c0_50, %c0_51] : memref<1x128x256xf32, #tpu.memory_space<vmem>>, vector<1x128x256xf32>
      %84 = vector.shape_cast %83 : vector<1x128x256xf32> to vector<128x256xf32>
      %85 = vector.shape_cast %82 : vector<128x256xf32> to vector<1x128x256xf32>
      tpu.vector_store %arg11[%c0_49, %c0_50, %c0_51], %85 {strides = array<i32>} : memref<1x128x256xf32, #tpu.memory_space<vmem>>, vector<1x128x256xf32>,
    } else {
    }
    return
  }
  func.func @transform_0(%arg0: i32, %arg1: i32) -> (i32, i32, i32) {
    %c0_i32 = arith.constant 0 : i32
    %c0_i32_0 = arith.constant 0 : i32
    %c0_i32_1 = arith.constant 0 : i32
    return %arg0, %c0_i32, %c0_i32_0 : i32, i32, i32
  }
  func.func @transform_1(%arg0: i32, %arg1: i32) -> (i32, i32) {
    %c0_i32 = arith.constant 0 : i32
    %c0_i32_0 = arith.constant 0 : i32
    return %c0_i32, %arg1 : i32, i32
  }
  func.func @transform_2(%arg0: i32, %arg1: i32) -> (i32, i32) {
    %c0_i32 = arith.constant 0 : i32
    %c0_i32_0 = arith.constant 0 : i32
    return %c0_i32, %arg1 : i32, i32
  }
  func.func @transform_3(%arg0: i32, %arg1: i32) -> (i32, i32) {
    %c0_i32 = arith.constant 0 : i32
    %c0_i32_0 = arith.constant 0 : i32
    return %c0_i32, %arg1 : i32, i32
  }
  func.func @transform_4(%arg0: i32, %arg1: i32) -> (i32, i32) {
    %c0_i32 = arith.constant 0 : i32
    %c0_i32_0 = arith.constant 0 : i32
    return %c0_i32, %arg1 : i32, i32
  }
  func.func @transform_5(%arg0: i32, %arg1: i32) -> (i32, i32) {
    %c0_i32 = arith.constant 0 : i32
    %c0_i32_0 = arith.constant 0 : i32
    return %c0_i32, %arg1 : i32, i32
  }
  func.func @transform_6(%arg0: i32, %arg1: i32) -> (i32, i32) {
    %c0_i32 = arith.constant 0 : i32
    %c0_i32_0 = arith.constant 0 : i32
    return %c0_i32, %arg1 : i32, i32
  }
  func.func @transform_7(%arg0: i32, %arg1: i32) -> (i32, i32) {
    %c0_i32 = arith.constant 0 : i32
    %c0_i32_0 = arith.constant 0 : i32
    return %arg1, %c0_i32 : i32, i32
  }
  func.func @transform_8(%arg0: i32, %arg1: i32) -> (i32, i32) {
    %c0_i32 = arith.constant 0 : i32
    %c0_i32_0 = arith.constant 0 : i32
    %c0_i32_1 = arith.constant 0 : i32
    return %c0_i32, %c0_i32_0 : i32, i32
  }
  func.func @transform_9(%arg0: i32, %arg1: i32) -> (i32, i32, i32) {
    %c0_i32 = arith.constant 0 : i32
    %c0_i32_0 = arith.constant 0 : i32
    %c0_i32_1 = arith.constant 0 : i32
    return %arg0, %c0_i32, %c0_i32_0 : i32, i32, i32
  }
  func.func @transform_10(%arg0: i32, %arg1: i32) -> (i32, i32, i32, i32) {
    %c0_i32 = arith.constant 0 : i32
    %c0_i32_0 = arith.constant 0 : i32
    %c0_i32_1 = arith.constant 0 : i32
    return %arg0, %arg1, %c0_i32, %c0_i32_0 : i32, i32, i32, i32
  }
}

</mosaic_0001>

<llo_original>
// kernel: tpu_custom_call.1
$region0: #{tpu_custom_call.1}
  #allocation0 [shape = 'u32[]', space=smem, size = 0x4, offset = 0x4, fixed_abs, tag = 'smem constant byte address 0x4 - core index']
  #allocation1 [shape = 'u32[144,128]{1,0:T(1,128)}', space=vmem, size = 0x12000, scoped, tag = 'internal scratch']
  #allocation2 [shape = 'f32[128,256]{1,0:T(8,128)}', space=vmem, size = 0x20000, scoped, tag = 'scratch operand']
  %s0 = inlined_call_operand.hbm [shape: f32[2,128,256], index: 0, kind: input, shape index: {}]
  %s1 = inlined_call_operand.hbm [shape: f32[256,256], index: 1, kind: input, shape index: {}]
  %s2 = inlined_call_operand.vmem [shape: f32[1,256], index: 2, kind: input, shape index: {}]
  %s3 = inlined_call_operand.hbm [shape: f32[256,256], index: 3, kind: input, shape index: {}]
  %s4 = inlined_call_operand.vmem [shape: f32[1,256], index: 4, kind: input, shape index: {}]
  %s5 = inlined_call_operand.hbm [shape: f32[256,256], index: 5, kind: input, shape index: {}]
  %s6 = inlined_call_operand.vmem [shape: f32[1,256], index: 6, kind: input, shape index: {}]
  %s7 = inlined_call_operand.hbm [shape: f32[256,256], index: 7, kind: input, shape index: {}]
  %s8 = inlined_call_operand.vmem [shape: f32[1,256], index: 8, kind: input, shape index: {}]
  %s9 = inlined_call_operand.hbm [shape: f32[2,128,256], index: 9, kind: output, shape index: {0}]
  %s10 = inlined_call_operand.hbm [shape: f32[2,4,128,128], index: 10, kind: output, shape index: {1}]
  %11 = xla_tuple %s9, %s10
  %s12 = sld [smem:[#allocation0]]
  $region105: #{tpu_custom_call.1} parent=0
    _
  %s14 = ssub.s32 1, %s12
  %s15 = scalar_select 0, %s14, %s12
  $region1: #{tpu_custom_call.1} parent=0
    #allocation3 [shape = 'u8[262144]{0}', space=vmem, size = 0x40000, scoped, tag = 'input window, operand 0']
    #allocation4 [shape = 's32[2]{0}', space=sflag, size = 0x8, scoped, tag = 'scoped memory for tpu_custom_call.1']
    #allocation5 [shape = 's32[2]{0}', space=sflag, size = 0x8, scoped, tag = 'scoped memory for tpu_custom_call.1']
    #allocation6 [shape = 'u8[262144]{0}', space=vmem, size = 0x40000, scoped, tag = 'input window, operand 1']
    #allocation7 [shape = 's32[2]{0}', space=sflag, size = 0x8, scoped, tag = 'scoped memory for tpu_custom_call.1']
    #allocation8 [shape = 'u8[262144]{0}', space=vmem, size = 0x40000, scoped, tag = 'input window, operand 3']
    #allocation9 [shape = 'u8[262144]{0}', space=vmem, size = 0x40000, scoped, tag = 'input window, operand 5']
    #allocation10 [shape = 's32[2]{0}', space=sflag, size = 0x8, scoped, tag = 'scoped memory for tpu_custom_call.1']
    #allocation11 [shape = 'u8[262144]{0}', space=vmem, size = 0x40000, scoped, tag = 'input window, operand 7']
    #allocation12 [shape = 'u8[262144]{0}', space=vmem, size = 0x40000, scoped, tag = 'output window, operand 0']
    #allocation13 [shape = 'u8[262144]{0}', space=vmem, size = 0x40000, scoped, tag = 'output window, operand 1']
    #allocation14 [shape = 's32[2]{0}', space=sflag, size = 0x8, scoped, tag = 'scoped memory for tpu_custom_call.1']
    %16 = vsyncpa [#allocation4], 0
    %s17 = scalar_lea.sflag [#allocation4], 1
    %18 = vsyncpa %s17, 0
    %19 = vsyncpa [#allocation7], 0
    %s20 = scalar_lea.sflag [#allocation7], 1
    %21 = vsyncpa %s20, 0
    %22 = vsyncpa [#allocation10], 0
    %s23 = scalar_lea.sflag [#allocation10], 1
    %24 = vsyncpa %s23, 0
    %25 = vsyncpa [#allocation5], 0
    %s26 = scalar_lea.sflag [#allocation5], 1
    %27 = vsyncpa %s26, 0
    %28 = vsyncpa [#allocation14], 0
    %s29 = scalar_lea.sflag [#allocation14], 1
    %30 = vsyncpa %s29, 0
    loop: start=0, step=1, limit=6
    $region2: #{tpu_custom_call.1} parent=1 // loop_pre_header
      _
    $region3: #{tpu_custom_call.1} parent=1 // loop_header
      %s32 = sphi 0, %s36
      %p33 = scmp.ge.s32.totalorder %s32, 6
      %s39 = sphi 0, %s51
      %s40 = sphi 0, %s47
      %s41 = sphi 0, %s39
      %s42 = sphi 0, %s40
      %s43 = sphi 0, %s41
      %s44 = sphi 0, %s42
      %s54 = sphi 0, %s56
      %s57 = sphi 0, %s54
      %s58 = sphi 0, %s57
      %s74 = sphi 0, %s58
      %s80 = sphi 0, %s82
      %s83 = sphi 0, %s80
      %s84 = sphi 0, %s83
      %s100 = sphi 0, %s84
      %s106 = sphi 0, %s108
      %s109 = sphi 0, %s106
      %s110 = sphi 0, %s109
      %s126 = sphi 0, %s110
      %s132 = sphi 0, %s134
      %s135 = sphi 0, %s132
      %s136 = sphi 0, %s135
      %s152 = sphi 0, %s136
      %s158 = sphi 0, %s160
      %s161 = sphi 0, %s158
      %s162 = sphi 0, %s161
      %s178 = sphi 0, %s162
      %s184 = sphi 0, %s186
      %s187 = sphi 0, %s184
      %s188 = sphi 0, %s187
      %s204 = sphi 0, %s188
      %s210 = sphi 0, %s212
      %s213 = sphi 0, %s210
      %s214 = sphi 0, %s213
      %s230 = sphi 0, %s214
      %s236 = sphi 0, %s238
      %s239 = sphi 0, %s236
      %s240 = sphi 0, %s239
      %s256 = sphi 0, %s240
      %s260 = sphi 0, %s260
      %s262 = sphi 0, %s260
      %s263 = sphi 0, %s262
      %s277 = sphi 0, %s263
      %s283 = sphi 0, %s285
      %s286 = sphi 0, %s283
      %s287 = sphi 0, %s286
      %s303 = sphi 0, %s287
      %s311 = sphi 0, %s313
      %s314 = sphi 0, %s311
      %s315 = sphi 0, %s314
      %s331 = sphi 0, %s315
    $region4: #{tpu_custom_call.1} parent=1 // loop_header_branch
      %35 = sbr.rel (%p33) target = $region8
    $region5: #{tpu_custom_call.1} parent=1 // loop_body
      %s37 = ssub.s32 %s32, 1
      %s38 = ssub.s32 %s32, 2
      %s45 = sadd.s32 1, %s40
      %p46 = scmp.ge.s32.totalorder %s45, 2
      %s47 = scalar_select %p46, 0, %s45
      %s48 = sadd.s32 1, %s39
      %s49 = scalar_select %p46, %s48, %s39
      %p50 = scmp.ge.s32.totalorder %s49, 2
      %s51 = scalar_select %p50, 0, %s49
      %s52 = ssub.s32 %s39, %s51
      %p53 = scmp.eq.s32.totalorder %s52, 0
      %s55 = sadd.s32 %s54, 1
      %s56 = scalar_select %p53, %s54, %s55
      %p59 = pneg %p53
      %p60 = scmp.eq.s32.totalorder %s32, 3
      %p61 = por %p59, %p60
      %p62 = scmp.ne.s32.totalorder %s54, %s57
      %p63 = scmp.eq.s32.totalorder %s32, 0
      %p64 = por %p62, %p63
      %p65 = scmp.ne.s32.totalorder %s54, %s57
      %p66 = scmp.eq.s32.totalorder %s37, 3
      %p67 = por %p65, %p66
      %p68 = scmp.ne.s32.totalorder %s57, %s58
      %p69 = scmp.eq.s32.totalorder %s37, 0
      %p70 = por %p68, %p69
      %p71 = scmp.ne.s32.totalorder %s57, %s58
      %p72 = scmp.eq.s32.totalorder %s38, 3
      %p73 = por %p71, %p72
      %p75 = scmp.ne.s32.totalorder %s58, %s74
      %p76 = scmp.eq.s32.totalorder %s38, 0
      %p77 = por %p75, %p76
      %s78 = ssub.s32 %s40, %s47
      %p79 = scmp.eq.s32.totalorder %s78, 0
      %s81 = sadd.s32 %s80, 1
      %s82 = scalar_select %p79, %s80, %s81
      %p85 = pneg %p79
      %p86 = scmp.eq.s32.totalorder %s32, 3
      %p87 = por %p85, %p86
      %p88 = scmp.ne.s32.totalorder %s80, %s83
      %p89 = scmp.eq.s32.totalorder %s32, 0
      %p90 = por %p88, %p89
      %p91 = scmp.ne.s32.totalorder %s80, %s83
      %p92 = scmp.eq.s32.totalorder %s37, 3
      %p93 = por %p91, %p92
      %p94 = scmp.ne.s32.totalorder %s83, %s84
      %p95 = scmp.eq.s32.totalorder %s37, 0
      %p96 = por %p94, %p95
      %p97 = scmp.ne.s32.totalorder %s83, %s84
      %p98 = scmp.eq.s32.totalorder %s38, 3
      %p99 = por %p97, %p98
      %p101 = scmp.ne.s32.totalorder %s84, %s100
      %p102 = scmp.eq.s32.totalorder %s38, 0
      %p103 = por %p101, %p102
      %s104 = ssub.s32 %s40, %s47
      %p105 = scmp.eq.s32.totalorder %s104, 0
      %s107 = sadd.s32 %s106, 1
      %s108 = scalar_select %p105, %s106, %s107
      %p111 = pneg %p105
      %p112 = scmp.eq.s32.totalorder %s32, 3
      %p113 = por %p111, %p112
      %p114 = scmp.ne.s32.totalorder %s106, %s109
      %p115 = scmp.eq.s32.totalorder %s32, 0
      %p116 = por %p114, %p115
      %p117 = scmp.ne.s32.totalorder %s106, %s109
      %p118 = scmp.eq.s32.totalorder %s37, 3
      %p119 = por %p117, %p118
      %p120 = scmp.ne.s32.totalorder %s109, %s110
      %p121 = scmp.eq.s32.totalorder %s37, 0
      %p122 = por %p120, %p121
      %p123 = scmp.ne.s32.totalorder %s109, %s110
      %p124 = scmp.eq.s32.totalorder %s38, 3
      %p125 = por %p123, %p124
      %p127 = scmp.ne.s32.totalorder %s110, %s126
      %p128 = scmp.eq.s32.totalorder %s38, 0
      %p129 = por %p127, %p128
      %s130 = ssub.s32 %s40, %s47
      %p131 = scmp.eq.s32.totalorder %s130, 0
      %s133 = sadd.s32 %s132, 1
      %s134 = scalar_select %p131, %s132, %s133
      %p137 = pneg %p131
      %p138 = scmp.eq.s32.totalorder %s32, 3
      %p139 = por %p137, %p138
      %p140 = scmp.ne.s32.totalorder %s132, %s135
      %p141 = scmp.eq.s32.totalorder %s32, 0
      %p142 = por %p140, %p141
      %p143 = scmp.ne.s32.totalorder %s132, %s135
      %p144 = scmp.eq.s32.totalorder %s37, 3
      %p145 = por %p143, %p144
      %p146 = scmp.ne.s32.totalorder %s135, %s136
      %p147 = scmp.eq.s32.totalorder %s37, 0
      %p148 = por %p146, %p147
      %p149 = scmp.ne.s32.totalorder %s135, %s136
      %p150 = scmp.eq.s32.totalorder %s38, 3
      %p151 = por %p149, %p150
      %p153 = scmp.ne.s32.totalorder %s136, %s152
      %p154 = scmp.eq.s32.totalorder %s38, 0
      %p155 = por %p153, %p154
      %s156 = ssub.s32 %s40, %s47
      %p157 = scmp.eq.s32.totalorder %s156, 0
      %s159 = sadd.s32 %s158, 1
      %s160 = scalar_select %p157, %s158, %s159
      %p163 = pneg %p157
      %p164 = scmp.eq.s32.totalorder %s32, 3
      %p165 = por %p163, %p164
      %p166 = scmp.ne.s32.totalorder %s158, %s161
      %p167 = scmp.eq.s32.totalorder %s32, 0
      %p168 = por %p166, %p167
      %p169 = scmp.ne.s32.totalorder %s158, %s161
      %p170 = scmp.eq.s32.totalorder %s37, 3
      %p171 = por %p169, %p170
      %p172 = scmp.ne.s32.totalorder %s161, %s162
      %p173 = scmp.eq.s32.totalorder %s37, 0
      %p174 = por %p172, %p173
      %p175 = scmp.ne.s32.totalorder %s161, %s162
      %p176 = scmp.eq.s32.totalorder %s38, 3
      %p177 = por %p175, %p176
      %p179 = scmp.ne.s32.totalorder %s162, %s178
      %p180 = scmp.eq.s32.totalorder %s38, 0
      %p181 = por %p179, %p180
      %s182 = ssub.s32 %s40, %s47
      %p183 = scmp.eq.s32.totalorder %s182, 0
      %s185 = sadd.s32 %s184, 1
      %s186 = scalar_select %p183, %s184, %s185
      %p189 = pneg %p183
      %p190 = scmp.eq.s32.totalorder %s32, 3
      %p191 = por %p189, %p190
      %p192 = scmp.ne.s32.totalorder %s184, %s187
      %p193 = scmp.eq.s32.totalorder %s32, 0
      %p194 = por %p192, %p193
      %p195 = scmp.ne.s32.totalorder %s184, %s187
      %p196 = scmp.eq.s32.totalorder %s37, 3
      %p197 = por %p195, %p196
      %p198 = scmp.ne.s32.totalorder %s187, %s188
      %p199 = scmp.eq.s32.totalorder %s37, 0
      %p200 = por %p198, %p199
      %p201 = scmp.ne.s32.totalorder %s187, %s188
      %p202 = scmp.eq.s32.totalorder %s38, 3
      %p203 = por %p201, %p202
      %p205 = scmp.ne.s32.totalorder %s188, %s204
      %p206 = scmp.eq.s32.totalorder %s38, 0
      %p207 = por %p205, %p206
      %s208 = ssub.s32 %s40, %s47
      %p209 = scmp.eq.s32.totalorder %s208, 0
      %s211 = sadd.s32 %s210, 1
      %s212 = scalar_select %p209, %s210, %s211
      %p215 = pneg %p209
      %p216 = scmp.eq.s32.totalorder %s32, 3
      %p217 = por %p215, %p216
      %p218 = scmp.ne.s32.totalorder %s210, %s213
      %p219 = scmp.eq.s32.totalorder %s32, 0
      %p220 = por %p218, %p219
      %p221 = scmp.ne.s32.totalorder %s210, %s213
      %p222 = scmp.eq.s32.totalorder %s37, 3
      %p223 = por %p221, %p222
      %p224 = scmp.ne.s32.totalorder %s213, %s214
      %p225 = scmp.eq.s32.totalorder %s37, 0
      %p226 = por %p224, %p225
      %p227 = scmp.ne.s32.totalorder %s213, %s214
      %p228 = scmp.eq.s32.totalorder %s38, 3
      %p229 = por %p227, %p228
      %p231 = scmp.ne.s32.totalorder %s214, %s230
      %p232 = scmp.eq.s32.totalorder %s38, 0
      %p233 = por %p231, %p232
      %s234 = ssub.s32 %s40, %s47
      %p235 = scmp.eq.s32.totalorder %s234, 0
      %s237 = sadd.s32 %s236, 1
      %s238 = scalar_select %p235, %s236, %s237
      %p241 = pneg %p235
      %p242 = scmp.eq.s32.totalorder %s32, 3
      %p243 = por %p241, %p242
      %p244 = scmp.ne.s32.totalorder %s236, %s239
      %p245 = scmp.eq.s32.totalorder %s32, 0
      %p246 = por %p244, %p245
      %p247 = scmp.ne.s32.totalorder %s236, %s239
      %p248 = scmp.eq.s32.totalorder %s37, 3
      %p249 = por %p247, %p248
      %p250 = scmp.ne.s32.totalorder %s239, %s240
      %p251 = scmp.eq.s32.totalorder %s37, 0
      %p252 = por %p250, %p251
      %p253 = scmp.ne.s32.totalorder %s239, %s240
      %p254 = scmp.eq.s32.totalorder %s38, 3
      %p255 = por %p253, %p254
      %p257 = scmp.ne.s32.totalorder %s240, %s256
      %p258 = scmp.eq.s32.totalorder %s38, 0
      %p259 = por %p257, %p258
      %s261 = sadd.s32 %s260, 1
      %p264 = scmp.eq.s32.totalorder %s32, 3
      %p265 = scmp.ne.s32.totalorder %s260, %s262
      %p266 = scmp.eq.s32.totalorder %s32, 0
      %p267 = por %p265, %p266
      %p268 = scmp.ne.s32.totalorder %s260, %s262
      %p269 = scmp.eq.s32.totalorder %s37, 3
      %p270 = por %p268, %p269
      %p271 = scmp.ne.s32.totalorder %s262, %s263
      %p272 = scmp.eq.s32.totalorder %s37, 0
      %p273 = por %p271, %p272
      %p274 = scmp.ne.s32.totalorder %s262, %s263
      %p275 = scmp.eq.s32.totalorder %s38, 3
      %p276 = por %p274, %p275
      %p278 = scmp.ne.s32.totalorder %s263, %s277
      %p279 = scmp.eq.s32.totalorder %s38, 0
      %p280 = por %p278, %p279
      %s281 = ssub.s32 %s39, %s51
      %p282 = scmp.eq.s32.totalorder %s281, 0
      %s284 = sadd.s32 %s283, 1
      %s285 = scalar_select %p282, %s283, %s284
      %p288 = pneg %p282
      %p289 = scmp.eq.s32.totalorder %s32, 3
      %p290 = por %p288, %p289
      %p291 = scmp.ne.s32.totalorder %s283, %s286
      %p292 = scmp.eq.s32.totalorder %s32, 0
      %p293 = por %p291, %p292
      %p294 = scmp.ne.s32.totalorder %s283, %s286
      %p295 = scmp.eq.s32.totalorder %s37, 3
      %p296 = por %p294, %p295
      %p297 = scmp.ne.s32.totalorder %s286, %s287
      %p298 = scmp.eq.s32.totalorder %s37, 0
      %p299 = por %p297, %p298
      %p300 = scmp.ne.s32.totalorder %s286, %s287
      %p301 = scmp.eq.s32.totalorder %s38, 3
      %p302 = por %p300, %p301
      %p304 = scmp.ne.s32.totalorder %s287, %s303
      %p305 = scmp.eq.s32.totalorder %s38, 0
      %p306 = por %p304, %p305
      %s307 = ssub.s32 %s39, %s51
      %s308 = ssub.s32 %s40, %s47
      %s309 = sor.u32 %s307, %s308
      %p310 = scmp.eq.s32.totalorder %s309, 0
      %s312 = sadd.s32 %s311, 1
      %s313 = scalar_select %p310, %s311, %s312
      %p316 = pneg %p310
      %p317 = scmp.eq.s32.totalorder %s32, 3
      %p318 = por %p316, %p317
      %p319 = scmp.ne.s32.totalorder %s311, %s314
      %p320 = scmp.eq.s32.totalorder %s32, 0
      %p321 = por %p319, %p320
      %p322 = scmp.ne.s32.totalorder %s311, %s314
      %p323 = scmp.eq.s32.totalorder %s37, 3
      %p324 = por %p322, %p323
      %p325 = scmp.ne.s32.totalorder %s314, %s315
      %p326 = scmp.eq.s32.totalorder %s37, 0
      %p327 = por %p325, %p326
      %p328 = scmp.ne.s32.totalorder %s314, %s315
      %p329 = scmp.eq.s32.totalorder %s38, 3
      %p330 = por %p328, %p329
      %p332 = scmp.ne.s32.totalorder %s315, %s331
      %p333 = scmp.eq.s32.totalorder %s38, 0
      %p334 = por %p332, %p333
      %p335 = scmp.le.s32.totalorder 1, %s32
      %p336 = scmp.lt.s32.totalorder %s32, 5
      %p337 = pnand %p335, %p336
      %p338 = pneg %p337
      // Predicated region
      $region9: #{tpu_custom_call.1} parent=5 // pred_check
        _
      $region10: #{tpu_custom_call.1} parent=5 // pred_check_branch
        %340 = sbr.rel (%p337) target = $region12
      $region11: #{tpu_custom_call.1} parent=5 // pred_region
        %s341 = ssub.s32 %s32, 1
        // Predicated region
        $region13: #{tpu_custom_call.1} parent=11 // pred_check
          %p342 = pneg %p273
        $region14: #{tpu_custom_call.1} parent=11 // pred_check_branch
          %344 = sbr.rel (%p342) target = $region16
        $region15: #{tpu_custom_call.1} parent=11 // pred_region
          _
        $region16: #{tpu_custom_call.1} parent=11 // pred_fallthru
          _
      $region12: #{tpu_custom_call.1} parent=5 // pred_fallthru
        _
      %p345 = scmp.lt.s32.totalorder %s32, 4
      // Predicated region
      $region17: #{tpu_custom_call.1} parent=5 // pred_check
        %p346 = pneg %p345
      $region18: #{tpu_custom_call.1} parent=5 // pred_check_branch
        %348 = sbr.rel (%p346) target = $region20
      $region19: #{tpu_custom_call.1} parent=5 // pred_region
        // Predicated region
        $region21: #{tpu_custom_call.1} parent=19 // pred_check
          %p349 = pneg %p64
        $region22: #{tpu_custom_call.1} parent=19 // pred_check_branch
          %351 = sbr.rel (%p349) target = $region24
        $region23: #{tpu_custom_call.1} parent=19 // pred_region
          %s352 = sand.u32 %s54, 1
          %s353 = scalar_lea.sflag [#allocation4], %s352
          %s354 = sand.u32 %s54, 1
          %s355 = smul.addr %s354, 256
          %s356 = scalar_lea.vmem [#allocation3], %s355
          %s358 = ssub.s32 4096, 4096
          %359 = vsyncadd %s353, %s358
          %s360 = smul.addr %s39, 32
          %s361 = smul.addr %s360, 128
          %s362 = scalar_lea.hbm %s0, %s361
          %s363 = sshll.u32 %s356, 4
          %s364 = int_to_ptr.vmem [resolvable:$true] %s363
          %369 = dma.hbm_to_vmem [thread:$0]  %s362, 4096, %s364, %s353, 256, 256, 16
        $region24: #{tpu_custom_call.1} parent=19 // pred_fallthru
          _
        // Predicated region
        $region25: #{tpu_custom_call.1} parent=19 // pred_check
          %p370 = pneg %p90
        $region26: #{tpu_custom_call.1} parent=19 // pred_check_branch
          %372 = sbr.rel (%p370) target = $region28
        $region27: #{tpu_custom_call.1} parent=19 // pred_region
          %s373 = sand.u32 %s32, 1
          %s374 = scalar_lea.sflag [#allocation7], %s373
          %s375 = sand.u32 %s80, 1
          %s376 = smul.addr %s375, 256
          %s377 = scalar_lea.vmem [#allocation6], %s376
          %s379 = ssub.s32 4096, 4096
          %380 = vsyncadd %s374, %s379
          %s381 = smul.addr %s40, 128
          %s382 = scalar_lea.hbm %s1, %s381
          %s383 = sshll.u32 %s377, 4
          %s384 = int_to_ptr.vmem [resolvable:$true] %s383
          %389 = dma.hbm_to_vmem [thread:$0]  %s382, 4096, %s384, %s374, 256, 128, 8
        $region28: #{tpu_custom_call.1} parent=19 // pred_fallthru
          _
        // Predicated region
        $region29: #{tpu_custom_call.1} parent=19 // pred_check
          %p390 = pneg %p116
        $region30: #{tpu_custom_call.1} parent=19 // pred_check_branch
          %392 = sbr.rel (%p390) target = $region32
        $region31: #{tpu_custom_call.1} parent=19 // pred_region
          %p393 = scmp.lt.s32.totalorder %s40, 1
          %s394 = scalar_select %p393, %s40, 1
          %s395 = scalar_lea.vmem %s2, %s394
        $region32: #{tpu_custom_call.1} parent=19 // pred_fallthru
          _
        // Predicated region
        $region33: #{tpu_custom_call.1} parent=19 // pred_check
          %p396 = pneg %p142
        $region34: #{tpu_custom_call.1} parent=19 // pred_check_branch
          %398 = sbr.rel (%p396) target = $region36
        $region35: #{tpu_custom_call.1} parent=19 // pred_region
          %s399 = sand.u32 %s32, 1
          %s400 = scalar_lea.sflag [#allocation7], %s399
          %s401 = sand.u32 %s132, 1
          %s402 = smul.addr %s401, 256
          %s403 = scalar_lea.vmem [#allocation8], %s402
          %s405 = ssub.s32 4096, 4096
          %406 = vsyncadd %s400, %s405
          %s407 = smul.addr %s40, 128
          %s408 = scalar_lea.hbm %s3, %s407
          %s409 = sshll.u32 %s403, 4
          %s410 = int_to_ptr.vmem [resolvable:$true] %s409
          %415 = dma.hbm_to_vmem [thread:$0]  %s408, 4096, %s410, %s400, 256, 128, 8
        $region36: #{tpu_custom_call.1} parent=19 // pred_fallthru
          _
        // Predicated region
        $region37: #{tpu_custom_call.1} parent=19 // pred_check
          %p416 = pneg %p168
        $region38: #{tpu_custom_call.1} parent=19 // pred_check_branch
          %418 = sbr.rel (%p416) target = $region40
        $region39: #{tpu_custom_call.1} parent=19 // pred_region
          %p419 = scmp.lt.s32.totalorder %s40, 1
          %s420 = scalar_select %p419, %s40, 1
          %s421 = scalar_lea.vmem %s4, %s420
        $region40: #{tpu_custom_call.1} parent=19 // pred_fallthru
          _
        // Predicated region
        $region41: #{tpu_custom_call.1} parent=19 // pred_check
          %p422 = pneg %p194
        $region42: #{tpu_custom_call.1} parent=19 // pred_check_branch
          %424 = sbr.rel (%p422) target = $region44
        $region43: #{tpu_custom_call.1} parent=19 // pred_region
          %s425 = sand.u32 %s32, 1
          %s426 = scalar_lea.sflag [#allocation10], %s425
          %s427 = sand.u32 %s184, 1
          %s428 = smul.addr %s427, 256
          %s429 = scalar_lea.vmem [#allocation9], %s428
          %s431 = ssub.s32 4096, 4096
          %432 = vsyncadd %s426, %s431
          %s433 = smul.addr %s40, 128
          %s434 = scalar_lea.hbm %s5, %s433
          %s435 = sshll.u32 %s429, 4
          %s436 = int_to_ptr.vmem [resolvable:$true] %s435
          %441 = dma.hbm_to_vmem [thread:$0]  %s434, 4096, %s436, %s426, 256, 128, 8
        $region44: #{tpu_custom_call.1} parent=19 // pred_fallthru
          _
        // Predicated region
        $region45: #{tpu_custom_call.1} parent=19 // pred_check
          %p442 = pneg %p220
        $region46: #{tpu_custom_call.1} parent=19 // pred_check_branch
          %444 = sbr.rel (%p442) target = $region48
        $region47: #{tpu_custom_call.1} parent=19 // pred_region
          %p445 = scmp.lt.s32.totalorder %s40, 1
          %s446 = scalar_select %p445, %s40, 1
          %s447 = scalar_lea.vmem %s6, %s446
        $region48: #{tpu_custom_call.1} parent=19 // pred_fallthru
          _
        // Predicated region
        $region49: #{tpu_custom_call.1} parent=19 // pred_check
          %p448 = pneg %p246
        $region50: #{tpu_custom_call.1} parent=19 // pred_check_branch
          %450 = sbr.rel (%p448) target = $region52
        $region51: #{tpu_custom_call.1} parent=19 // pred_region
          %s451 = sand.u32 %s32, 1
          %s452 = scalar_lea.sflag [#allocation10], %s451
          %s453 = sand.u32 %s236, 1
          %s454 = smul.addr %s453, 256
          %s455 = scalar_lea.vmem [#allocation11], %s454
          %s456 = smul.u32 16, %s40
          %s458 = ssub.s32 4096, 4096
          %459 = vsyncadd %s452, %s458
          %s460 = smul.addr %s456, 2
          %s461 = smul.addr %s460, 128
          %s462 = scalar_lea.hbm %s7, %s461
          %s463 = sshll.u32 %s455, 4
          %s464 = int_to_ptr.vmem [resolvable:$true] %s463
          %469 = dma.hbm_to_vmem [thread:$0]  %s462, 4096, %s464, %s452, 256, 256, 16
        $region52: #{tpu_custom_call.1} parent=19 // pred_fallthru
          _
      $region20: #{tpu_custom_call.1} parent=5 // pred_fallthru
        _
      %p470 = scmp.le.s32.totalorder 1, %s32
      %p471 = scmp.lt.s32.totalorder %s32, 5
      %p472 = pnand %p470, %p471
      %p473 = pneg %p472
      // Predicated region
      $region53: #{tpu_custom_call.1} parent=5 // pred_check
        _
      $region54: #{tpu_custom_call.1} parent=5 // pred_check_branch
        %475 = sbr.rel (%p472) target = $region56
      $region55: #{tpu_custom_call.1} parent=5 // pred_region
        %s476 = ssub.s32 %s32, 1
        %s477 = sand.u32 %s57, 1
        %s478 = scalar_lea.sflag [#allocation4], %s477
        %s479 = sand.u32 %s57, 1
        %s480 = smul.addr %s479, 256
        %s481 = scalar_lea.vmem [#allocation3], %s480
        // Predicated region
        $region57: #{tpu_custom_call.1} parent=55 // pred_check
          %p482 = pneg %p70
        $region58: #{tpu_custom_call.1} parent=55 // pred_check_branch
          %484 = sbr.rel (%p482) target = $region60
        $region59: #{tpu_custom_call.1} parent=55 // pred_region
          %485 = dma.done %s478, 4096
        $region60: #{tpu_custom_call.1} parent=55 // pred_fallthru
          _
        %s486 = sand.u32 %s37, 1
        %s487 = scalar_lea.sflag [#allocation7], %s486
        %s488 = sand.u32 %s83, 1
        %s489 = smul.addr %s488, 256
        %s490 = scalar_lea.vmem [#allocation6], %s489
        // Predicated region
        $region61: #{tpu_custom_call.1} parent=55 // pred_check
          %p491 = pneg %p96
        $region62: #{tpu_custom_call.1} parent=55 // pred_check_branch
          %493 = sbr.rel (%p491) target = $region64
        $region63: #{tpu_custom_call.1} parent=55 // pred_region
          %494 = dma.done %s487, 4096
        $region64: #{tpu_custom_call.1} parent=55 // pred_fallthru
          _
        %s495 = sand.u32 %s37, 1
        %s496 = scalar_lea.sflag [#allocation7], %s495
        %s497 = sand.u32 %s135, 1
        %s498 = smul.addr %s497, 256
        %s499 = scalar_lea.vmem [#allocation8], %s498
        // Predicated region
        $region65: #{tpu_custom_call.1} parent=55 // pred_check
          %p500 = pneg %p148
        $region66: #{tpu_custom_call.1} parent=55 // pred_check_branch
          %502 = sbr.rel (%p500) target = $region68
        $region67: #{tpu_custom_call.1} parent=55 // pred_region
          %503 = dma.done %s496, 4096
        $region68: #{tpu_custom_call.1} parent=55 // pred_fallthru
          _
        %s504 = sand.u32 %s37, 1
        %s505 = scalar_lea.sflag [#allocation10], %s504
        %s506 = sand.u32 %s187, 1
        %s507 = smul.addr %s506, 256
        %s508 = scalar_lea.vmem [#allocation9], %s507
        // Predicated region
        $region69: #{tpu_custom_call.1} parent=55 // pred_check
          %p509 = pneg %p200
        $region70: #{tpu_custom_call.1} parent=55 // pred_check_branch
          %511 = sbr.rel (%p509) target = $region72
        $region71: #{tpu_custom_call.1} parent=55 // pred_region
          %512 = dma.done %s505, 4096
        $region72: #{tpu_custom_call.1} parent=55 // pred_fallthru
          _
        %s513 = sand.u32 %s37, 1
        %s514 = scalar_lea.sflag [#allocation10], %s513
        %s515 = sand.u32 %s239, 1
        %s516 = smul.addr %s515, 256
        %s517 = scalar_lea.vmem [#allocation11], %s516
        // Predicated region
        $region73: #{tpu_custom_call.1} parent=55 // pred_check
          %p518 = pneg %p252
        $region74: #{tpu_custom_call.1} parent=55 // pred_check_branch
          %520 = sbr.rel (%p518) target = $region76
        $region75: #{tpu_custom_call.1} parent=55 // pred_region
          %521 = dma.done %s514, 4096
        $region76: #{tpu_custom_call.1} parent=55 // pred_fallthru
          _
        %s522 = sand.u32 %s57, 1
        %s523 = scalar_lea.sflag [#allocation4], %s522
        %s524 = sand.u32 %s57, 1
        %s525 = smul.addr %s524, 256
        %s526 = scalar_lea.vmem [#allocation3], %s525
        %p527 = pneg %p70
        %p528 = pneg %p67
        %s529 = sand.u32 %s37, 1
        %s530 = scalar_lea.sflag [#allocation7], %s529
        %s531 = sand.u32 %s83, 1
        %s532 = smul.addr %s531, 256
        %s533 = scalar_lea.vmem [#allocation6], %s532
        %p534 = pneg %p96
        %p535 = pneg %p93
        %p536 = scmp.lt.s32.totalorder %s42, 1
        %s537 = scalar_select %p536, %s42, 1
        %s538 = scalar_lea.vmem %s2, %s537
        %p539 = pneg %p122
        %p540 = pneg %p119
        %s541 = sand.u32 %s37, 1
        %s542 = scalar_lea.sflag [#allocation7], %s541
        %s543 = sand.u32 %s135, 1
        %s544 = smul.addr %s543, 256
        %s545 = scalar_lea.vmem [#allocation8], %s544
        %p546 = pneg %p148
        %p547 = pneg %p145
        %p548 = scmp.lt.s32.totalorder %s42, 1
        %s549 = scalar_select %p548, %s42, 1
        %s550 = scalar_lea.vmem %s4, %s549
        %p551 = pneg %p174
        %p552 = pneg %p171
        %s553 = sand.u32 %s37, 1
        %s554 = scalar_lea.sflag [#allocation10], %s553
        %s555 = sand.u32 %s187, 1
        %s556 = smul.addr %s555, 256
        %s557 = scalar_lea.vmem [#allocation9], %s556
        %p558 = pneg %p200
        %p559 = pneg %p197
        %p560 = scmp.lt.s32.totalorder %s42, 1
        %s561 = scalar_select %p560, %s42, 1
        %s562 = scalar_lea.vmem %s6, %s561
        %p563 = pneg %p226
        %p564 = pneg %p223
        %s565 = sand.u32 %s37, 1
        %s566 = scalar_lea.sflag [#allocation10], %s565
        %s567 = sand.u32 %s239, 1
        %s568 = smul.addr %s567, 256
        %s569 = scalar_lea.vmem [#allocation11], %s568
        %p570 = pneg %p252
        %p571 = pneg %p249
        %p572 = pneg %p273
        %p573 = pneg %p270
        %p574 = pneg %p299
        %p575 = pneg %p296
        %s576 = sand.u32 %s286, 1
        %s577 = scalar_lea.sflag [#allocation5], %s576
        %s578 = sand.u32 %s286, 1
        %s579 = smul.addr %s578, 256
        %s580 = scalar_lea.vmem [#allocation12], %s579
        %p581 = pneg %p327
        %p582 = pneg %p324
        %s583 = sand.u32 %s314, 1
        %s584 = scalar_lea.sflag [#allocation14], %s583
        %s585 = sand.u32 %s314, 1
        %s586 = smul.addr %s585, 256
        %s587 = scalar_lea.vmem [#allocation13], %s586
        %p588 = scmp.lt.s32.totalorder %s42, 1
        %s589 = scalar_select %p588, %s42, 1
        %s590 = scalar_lea.vmem %s2, %s589
        %p591 = scmp.lt.s32.totalorder %s42, 1
        %s592 = scalar_select %p591, %s42, 1
        %s593 = scalar_lea.vmem %s4, %s592
        %p594 = scmp.lt.s32.totalorder %s42, 1
        %s595 = scalar_select %p594, %s42, 1
        %s596 = scalar_lea.vmem %s6, %s595
        %s597 = smul.u32 16, %s42
        %s598 = smul.u32 2, %s42
        %p599 = scmp.eq.s32.totalorder %s42, 0
        // Predicated region
        $region77: #{tpu_custom_call.1} parent=55 // pred_check
          %p600 = pneg %p599
        $region78: #{tpu_custom_call.1} parent=55 // pred_check_branch
          %602 = sbr.rel (%p600) target = $region80
        $region79: #{tpu_custom_call.1} parent=55 // pred_region
          %603 = vst [vmem:[#allocation2] sm:$0xff] 0.0
          %604 = vst [vmem:[#allocation2 + $0x8] sm:$0xff] 0.0
          %605 = vst [vmem:[#allocation2 + $0x10] sm:$0xff] 0.0
          %606 = vst [vmem:[#allocation2 + $0x18] sm:$0xff] 0.0
          %607 = vst [vmem:[#allocation2 + $0x20] sm:$0xff] 0.0
          %608 = vst [vmem:[#allocation2 + $0x28] sm:$0xff] 0.0
          %609 = vst [vmem:[#allocation2 + $0x30] sm:$0xff] 0.0
          %610 = vst [vmem:[#allocation2 + $0x38] sm:$0xff] 0.0
          %611 = vst [vmem:[#allocation2 + $0x40] sm:$0xff] 0.0
          %612 = vst [vmem:[#allocation2 + $0x48] sm:$0xff] 0.0
          %613 = vst [vmem:[#allocation2 + $0x50] sm:$0xff] 0.0
          %614 = vst [vmem:[#allocation2 + $0x58] sm:$0xff] 0.0
          %615 = vst [vmem:[#allocation2 + $0x60] sm:$0xff] 0.0
          %616 = vst [vmem:[#allocation2 + $0x68] sm:$0xff] 0.0
          %617 = vst [vmem:[#allocation2 + $0x70] sm:$0xff] 0.0
          %618 = vst [vmem:[#allocation2 + $0x78] sm:$0xff] 0.0
          %619 = vst [vmem:[#allocation2 + $0x80] sm:$0xff] 0.0
          %620 = vst [vmem:[#allocation2 + $0x88] sm:$0xff] 0.0
          %621 = vst [vmem:[#allocation2 + $0x90] sm:$0xff] 0.0
          %622 = vst [vmem:[#allocation2 + $0x98] sm:$0xff] 0.0
          %623 = vst [vmem:[#allocation2 + $0xa0] sm:$0xff] 0.0
          %624 = vst [vmem:[#allocation2 + $0xa8] sm:$0xff] 0.0
          %625 = vst [vmem:[#allocation2 + $0xb0] sm:$0xff] 0.0
          %626 = vst [vmem:[#allocation2 + $0xb8] sm:$0xff] 0.0
          %627 = vst [vmem:[#allocation2 + $0xc0] sm:$0xff] 0.0
          %628 = vst [vmem:[#allocation2 + $0xc8] sm:$0xff] 0.0
          %629 = vst [vmem:[#allocation2 + $0xd0] sm:$0xff] 0.0
          %630 = vst [vmem:[#allocation2 + $0xd8] sm:$0xff] 0.0
          %631 = vst [vmem:[#allocation2 + $0xe0] sm:$0xff] 0.0
          %632 = vst [vmem:[#allocation2 + $0xe8] sm:$0xff] 0.0
          %633 = vst [vmem:[#allocation2 + $0xf0] sm:$0xff] 0.0
          %634 = vst [vmem:[#allocation2 + $0xf8] sm:$0xff] 0.0
        $region80: #{tpu_custom_call.1} parent=55 // pred_fallthru
          _
        %v635 = vld [vmem:[%s481] sm:$0xff]
        %v636 = vld [vmem:[%s481 + $0x8] sm:$0xff]
        %v637 = vld [vmem:[%s481 + $0x10] sm:$0xff]
        %v638 = vld [vmem:[%s481 + $0x18] sm:$0xff]
        %v639 = vld [vmem:[%s481 + $0x20] sm:$0xff]
        %v640 = vld [vmem:[%s481 + $0x28] sm:$0xff]
        %v641 = vld [vmem:[%s481 + $0x30] sm:$0xff]
        %v642 = vld [vmem:[%s481 + $0x38] sm:$0xff]
        %v643 = vld [vmem:[%s481 + $0x40] sm:$0xff]
        %v644 = vld [vmem:[%s481 + $0x48] sm:$0xff]
        %v645 = vld [vmem:[%s481 + $0x50] sm:$0xff]
        %v646 = vld [vmem:[%s481 + $0x58] sm:$0xff]
        %v647 = vld [vmem:[%s481 + $0x60] sm:$0xff]
        %v648 = vld [vmem:[%s481 + $0x68] sm:$0xff]
        %v649 = vld [vmem:[%s481 + $0x70] sm:$0xff]
        %v650 = vld [vmem:[%s481 + $0x78] sm:$0xff]
        %v651 = vld [vmem:[%s481 + $0x80] sm:$0xff]
        %v652 = vld [vmem:[%s481 + $0x88] sm:$0xff]
        %v653 = vld [vmem:[%s481 + $0x90] sm:$0xff]
        %v654 = vld [vmem:[%s481 + $0x98] sm:$0xff]
        %v655 = vld [vmem:[%s481 + $0xa0] sm:$0xff]
        %v656 = vld [vmem:[%s481 + $0xa8] sm:$0xff]
        %v657 = vld [vmem:[%s481 + $0xb0] sm:$0xff]
        %v658 = vld [vmem:[%s481 + $0xb8] sm:$0xff]
        %v659 = vld [vmem:[%s481 + $0xc0] sm:$0xff]
        %v660 = vld [vmem:[%s481 + $0xc8] sm:$0xff]
        %v661 = vld [vmem:[%s481 + $0xd0] sm:$0xff]
        %v662 = vld [vmem:[%s481 + $0xd8] sm:$0xff]
        %v663 = vld [vmem:[%s481 + $0xe0] sm:$0xff]
        %v664 = vld [vmem:[%s481 + $0xe8] sm:$0xff]
        %v665 = vld [vmem:[%s481 + $0xf0] sm:$0xff]
        %v666 = vld [vmem:[%s481 + $0xf8] sm:$0xff]
        %v667 = vld [vmem:[%s490] sm:$0xff]
        %v668 = vld [vmem:[%s490 + $0x8] sm:$0xff]
        %v669 = vld [vmem:[%s490 + $0x10] sm:$0xff]
        %v670 = vld [vmem:[%s490 + $0x18] sm:$0xff]
        %v671 = vld [vmem:[%s490 + $0x20] sm:$0xff]
        %v672 = vld [vmem:[%s490 + $0x28] sm:$0xff]
        %v673 = vld [vmem:[%s490 + $0x30] sm:$0xff]
        %v674 = vld [vmem:[%s490 + $0x38] sm:$0xff]
        %v675 = vld [vmem:[%s490 + $0x40] sm:$0xff]
        %v676 = vld [vmem:[%s490 + $0x48] sm:$0xff]
        %v677 = vld [vmem:[%s490 + $0x50] sm:$0xff]
        %v678 = vld [vmem:[%s490 + $0x58] sm:$0xff]
        %v679 = vld [vmem:[%s490 + $0x60] sm:$0xff]
        %v680 = vld [vmem:[%s490 + $0x68] sm:$0xff]
        %v681 = vld [vmem:[%s490 + $0x70] sm:$0xff]
        %v682 = vld [vmem:[%s490 + $0x78] sm:$0xff]
        %v683 = vld [vmem:[%s490 + $0x80] sm:$0xff]
        %v684 = vld [vmem:[%s490 + $0x88] sm:$0xff]
        %v685 = vld [vmem:[%s490 + $0x90] sm:$0xff]
        %v686 = vld [vmem:[%s490 + $0x98] sm:$0xff]
        %v687 = vld [vmem:[%s490 + $0xa0] sm:$0xff]
        %v688 = vld [vmem:[%s490 + $0xa8] sm:$0xff]
        %v689 = vld [vmem:[%s490 + $0xb0] sm:$0xff]
        %v690 = vld [vmem:[%s490 + $0xb8] sm:$0xff]
        %v691 = vld [vmem:[%s490 + $0xc0] sm:$0xff]
        %v692 = vld [vmem:[%s490 + $0xc8] sm:$0xff]
        %v693 = vld [vmem:[%s490 + $0xd0] sm:$0xff]
        %v694 = vld [vmem:[%s490 + $0xd8] sm:$0xff]
        %v695 = vld [vmem:[%s490 + $0xe0] sm:$0xff]
        %v696 = vld [vmem:[%s490 + $0xe8] sm:$0xff]
        %v697 = vld [vmem:[%s490 + $0xf0] sm:$0xff]
        %v698 = vld [vmem:[%s490 + $0xf8] sm:$0xff]
        %v699 = vld [vmem:[%s590] sm:$0x1]
        %v701 = vlaneseq
        %v702 = vshrl.u32 %v701, 7
        %v703 = vsub.s32 0, %v702
        %v704 = vrot.slane %v699, %v703
        %706 = vmatprep.subr.mxu0 0.0
        %707 = vmatpush1.msra.mxu0 %v667
        %708 = vmatprep.subr.mxu0 0.0
        %709 = vmatpush1.msra.mxu0 %v668
        %710 = vmatprep.subr.mxu0 0.0
        %711 = vmatpush1.msra.mxu0 %v669
        %712 = vmatprep.subr.mxu0 0.0
        %713 = vmatpush1.msra.mxu0 %v670
        %714 = vmatprep.subr.mxu0 0.0
        %715 = vmatpush1.msra.mxu0 %v671
        %716 = vmatprep.subr.mxu0 0.0
        %717 = vmatpush1.msra.mxu0 %v672
        %718 = vmatprep.subr.mxu0 0.0
        %719 = vmatpush1.msra.mxu0 %v673
        %720 = vmatprep.subr.mxu0 0.0
        %721 = vmatpush1.msra.mxu0 %v674
        %722 = vmatprep.subr.mxu0 0.0
        %723 = vmatpush1.msra.mxu0 %v675
        %724 = vmatprep.subr.mxu0 0.0
        %725 = vmatpush1.msra.mxu0 %v676
        %726 = vmatprep.subr.mxu0 0.0
        %727 = vmatpush1.msra.mxu0 %v677
        %728 = vmatprep.subr.mxu0 0.0
        %729 = vmatpush1.msra.mxu0 %v678
        %730 = vmatprep.subr.mxu0 0.0
        %731 = vmatpush1.msra.mxu0 %v679
        %732 = vmatprep.subr.mxu0 0.0
        %733 = vmatpush1.msra.mxu0 %v680
        %734 = vmatprep.subr.mxu0 0.0
        %735 = vmatpush1.msra.mxu0 %v681
        %736 = vmatprep.subr.mxu0 0.0
        %737 = vmatpush1.msra.mxu0 %v682
        %738 = vmatprep.subr.mxu0 0.0
        %739 = vmatpush1.msra.mxu0 %v683
        %740 = vmatprep.subr.mxu0 0.0
        %741 = vmatpush1.msra.mxu0 %v684
        %742 = vmatprep.subr.mxu0 0.0
        %743 = vmatpush1.msra.mxu0 %v685
        %744 = vmatprep.subr.mxu0 0.0
        %745 = vmatpush1.msra.mxu0 %v686
        %746 = vmatprep.subr.mxu0 0.0
        %747 = vmatpush1.msra.mxu0 %v687
        %748 = vmatprep.subr.mxu0 0.0
        %749 = vmatpush1.msra.mxu0 %v688
        %750 = vmatprep.subr.mxu0 0.0
        %751 = vmatpush1.msra.mxu0 %v689
        %752 = vmatprep.subr.mxu0 0.0
        %753 = vmatpush1.msra.mxu0 %v690
        %754 = vmatprep.subr.mxu0 0.0
        %755 = vmatpush1.msra.mxu0 %v691
        %756 = vmatprep.subr.mxu0 0.0
        %757 = vmatpush1.msra.mxu0 %v692
        %758 = vmatprep.subr.mxu0 0.0
        %759 = vmatpush1.msra.mxu0 %v693
        %760 = vmatprep.subr.mxu0 0.0
        %761 = vmatpush1.msra.mxu0 %v694
        %762 = vmatprep.subr.mxu0 0.0
        %763 = vmatpush1.msra.mxu0 %v695
        %764 = vmatprep.subr.mxu0 0.0
        %765 = vmatpush1.msra.mxu0 %v696
        %766 = vmatprep.subr.mxu0 0.0
        %767 = vmatpush1.msra.mxu0 %v697
        %768 = vmatprep.subr.mxu0 0.0
        %769 = vmatpush1.msra.mxu0 %v698
        %770 = vmatprep.mubr.f32.mxu0 %v636
        %771 = vmatmul.mubr.f32.gmra.mrb[0].mxu0 %v635
        %v772 = vpop.f32.mrb[0].mxu0
        %v773 = vadd.f32 %v704, %v772
        %v774 = vpop.f32.mrb[0].mxu0
        %775 = vmatprep.mubr.f32.mxu0 %v638
        %776 = vmatmul.mubr.f32.gmra.mrb[0].mxu0 %v637
        %v777 = vpop.f32.mrb[0].mxu0
        %v778 = vadd.f32 %v704, %v777
        %v779 = vpop.f32.mrb[0].mxu0
        %780 = vmatprep.mubr.f32.mxu0 %v640
        %781 = vmatmul.mubr.f32.gmra.mrb[0].mxu0 %v639
        %v782 = vpop.f32.mrb[0].mxu0
        %v783 = vadd.f32 %v704, %v782
        %v784 = vpop.f32.mrb[0].mxu0
        %785 = vmatprep.mubr.f32.mxu0 %v642
        %786 = vmatmul.mubr.f32.gmra.mrb[0].mxu0 %v641
        %v787 = vpop.f32.mrb[0].mxu0
        %v788 = vadd.f32 %v704, %v787
        %v789 = vpop.f32.mrb[0].mxu0
        %790 = vmatprep.mubr.f32.mxu0 %v644
        %791 = vmatmul.mubr.f32.gmra.mrb[0].mxu0 %v643
        %v792 = vpop.f32.mrb[0].mxu0
        %v793 = vadd.f32 %v704, %v792
        %v794 = vpop.f32.mrb[0].mxu0
        %795 = vmatprep.mubr.f32.mxu0 %v646
        %796 = vmatmul.mubr.f32.gmra.mrb[0].mxu0 %v645
        %v797 = vpop.f32.mrb[0].mxu0
        %v798 = vadd.f32 %v704, %v797
        %v799 = vpop.f32.mrb[0].mxu0
        %800 = vmatprep.mubr.f32.mxu0 %v648
        %801 = vmatmul.mubr.f32.gmra.mrb[0].mxu0 %v647
        %v802 = vpop.f32.mrb[0].mxu0
        %v803 = vadd.f32 %v704, %v802
        %v804 = vpop.f32.mrb[0].mxu0
        %805 = vmatprep.mubr.f32.mxu0 %v650
        %806 = vmatmul.mubr.f32.gmra.mrb[0].mxu0 %v649
        %v807 = vpop.f32.mrb[0].mxu0
        %v808 = vadd.f32 %v704, %v807
        %v809 = vpop.f32.mrb[0].mxu0
        %810 = vmatprep.mubr.f32.mxu0 %v652
        %811 = vmatmul.mubr.f32.gmra.mrb[0].mxu0 %v651
        %v812 = vpop.f32.mrb[0].mxu0
        %v813 = vadd.f32 %v704, %v812
        %v814 = vpop.f32.mrb[0].mxu0
        %815 = vmatprep.mubr.f32.mxu0 %v654
        %816 = vmatmul.mubr.f32.gmra.mrb[0].mxu0 %v653
        %v817 = vpop.f32.mrb[0].mxu0
        %v818 = vadd.f32 %v704, %v817
        %v819 = vpop.f32.mrb[0].mxu0
        %820 = vmatprep.mubr.f32.mxu0 %v656
        %821 = vmatmul.mubr.f32.gmra.mrb[0].mxu0 %v655
        %v822 = vpop.f32.mrb[0].mxu0
        %v823 = vadd.f32 %v704, %v822
        %v824 = vpop.f32.mrb[0].mxu0
        %825 = vmatprep.mubr.f32.mxu0 %v658
        %826 = vmatmul.mubr.f32.gmra.mrb[0].mxu0 %v657
        %v827 = vpop.f32.mrb[0].mxu0
        %v828 = vadd.f32 %v704, %v827
        %v829 = vpop.f32.mrb[0].mxu0
        %830 = vmatprep.mubr.f32.mxu0 %v660
        %831 = vmatmul.mubr.f32.gmra.mrb[0].mxu0 %v659
        %v832 = vpop.f32.mrb[0].mxu0
        %v833 = vadd.f32 %v704, %v832
        %v834 = vpop.f32.mrb[0].mxu0
        %835 = vmatprep.mubr.f32.mxu0 %v662
        %836 = vmatmul.mubr.f32.gmra.mrb[0].mxu0 %v661
        %v837 = vpop.f32.mrb[0].mxu0
        %v838 = vadd.f32 %v704, %v837
        %v839 = vpop.f32.mrb[0].mxu0
        %840 = vmatprep.mubr.f32.mxu0 %v664
        %841 = vmatmul.mubr.f32.gmra.mrb[0].mxu0 %v663
        %v842 = vpop.f32.mrb[0].mxu0
        %v843 = vadd.f32 %v704, %v842
        %v844 = vpop.f32.mrb[0].mxu0
        %845 = vmatprep.mubr.f32.mxu0 %v666
        %846 = vmatmul.mubr.f32.gmra.mrb[0].mxu0 %v665
        %v847 = vpop.f32.mrb[0].mxu0
        %v848 = vadd.f32 %v704, %v847
        %v849 = vpop.f32.mrb[0].mxu0
        %850 = vdwg.mxu0
        %v851 = vld [vmem:[%s499] sm:$0xff]
        %v852 = vld [vmem:[%s499 + $0x8] sm:$0xff]
        %v853 = vld [vmem:[%s499 + $0x10] sm:$0xff]
        %v854 = vld [vmem:[%s499 + $0x18] sm:$0xff]
        %v855 = vld [vmem:[%s499 + $0x20] sm:$0xff]
        %v856 = vld [vmem:[%s499 + $0x28] sm:$0xff]
        %v857 = vld [vmem:[%s499 + $0x30] sm:$0xff]
        %v858 = vld [vmem:[%s499 + $0x38] sm:$0xff]
        %v859 = vld [vmem:[%s499 + $0x40] sm:$0xff]
        %v860 = vld [vmem:[%s499 + $0x48] sm:$0xff]
        %v861 = vld [vmem:[%s499 + $0x50] sm:$0xff]
        %v862 = vld [vmem:[%s499 + $0x58] sm:$0xff]
        %v863 = vld [vmem:[%s499 + $0x60] sm:$0xff]
        %v864 = vld [vmem:[%s499 + $0x68] sm:$0xff]
        %v865 = vld [vmem:[%s499 + $0x70] sm:$0xff]
        %v866 = vld [vmem:[%s499 + $0x78] sm:$0xff]
        %v867 = vld [vmem:[%s499 + $0x80] sm:$0xff]
        %v868 = vld [vmem:[%s499 + $0x88] sm:$0xff]
        %v869 = vld [vmem:[%s499 + $0x90] sm:$0xff]
        %v870 = vld [vmem:[%s499 + $0x98] sm:$0xff]
        %v871 = vld [vmem:[%s499 + $0xa0] sm:$0xff]
        %v872 = vld [vmem:[%s499 + $0xa8] sm:$0xff]
        %v873 = vld [vmem:[%s499 + $0xb0] sm:$0xff]
        %v874 = vld [vmem:[%s499 + $0xb8] sm:$0xff]
        %v875 = vld [vmem:[%s499 + $0xc0] sm:$0xff]
        %v876 = vld [vmem:[%s499 + $0xc8] sm:$0xff]
        %v877 = vld [vmem:[%s499 + $0xd0] sm:$0xff]
        %v878 = vld [vmem:[%s499 + $0xd8] sm:$0xff]
        %v879 = vld [vmem:[%s499 + $0xe0] sm:$0xff]
        %v880 = vld [vmem:[%s499 + $0xe8] sm:$0xff]
        %v881 = vld [vmem:[%s499 + $0xf0] sm:$0xff]
        %v882 = vld [vmem:[%s499 + $0xf8] sm:$0xff]
        %v883 = vld [vmem:[%s593] sm:$0x1]
        %v885 = vlaneseq
        %v886 = vshrl.u32 %v885, 7
        %v887 = vsub.s32 0, %v886
        %v888 = vrot.slane %v883, %v887
        %890 = vmatprep.subr.mxu0 0.0
        %891 = vmatpush1.msra.mxu0 %v851
        %892 = vmatprep.subr.mxu0 0.0
        %893 = vmatpush1.msra.mxu0 %v852
        %894 = vmatprep.subr.mxu0 0.0
        %895 = vmatpush1.msra.mxu0 %v853
        %896 = vmatprep.subr.mxu0 0.0
        %897 = vmatpush1.msra.mxu0 %v854
        %898 = vmatprep.subr.mxu0 0.0
        %899 = vmatpush1.msra.mxu0 %v855
        %900 = vmatprep.subr.mxu0 0.0
        %901 = vmatpush1.msra.mxu0 %v856
        %902 = vmatprep.subr.mxu0 0.0
        %903 = vmatpush1.msra.mxu0 %v857
        %904 = vmatprep.subr.mxu0 0.0
        %905 = vmatpush1.msra.mxu0 %v858
        %906 = vmatprep.subr.mxu0 0.0
        %907 = vmatpush1.msra.mxu0 %v859
        %908 = vmatprep.subr.mxu0 0.0
        %909 = vmatpush1.msra.mxu0 %v860
        %910 = vmatprep.subr.mxu0 0.0
        %911 = vmatpush1.msra.mxu0 %v861
        %912 = vmatprep.subr.mxu0 0.0
        %913 = vmatpush1.msra.mxu0 %v862
        %914 = vmatprep.subr.mxu0 0.0
        %915 = vmatpush1.msra.mxu0 %v863
        %916 = vmatprep.subr.mxu0 0.0
        %917 = vmatpush1.msra.mxu0 %v864
        %918 = vmatprep.subr.mxu0 0.0
        %919 = vmatpush1.msra.mxu0 %v865
        %920 = vmatprep.subr.mxu0 0.0
        %921 = vmatpush1.msra.mxu0 %v866
        %922 = vmatprep.subr.mxu0 0.0
        %923 = vmatpush1.msra.mxu0 %v867
        %924 = vmatprep.subr.mxu0 0.0
        %925 = vmatpush1.msra.mxu0 %v868
        %926 = vmatprep.subr.mxu0 0.0
        %927 = vmatpush1.msra.mxu0 %v869
        %928 = vmatprep.subr.mxu0 0.0
        %929 = vmatpush1.msra.mxu0 %v870
        %930 = vmatprep.subr.mxu0 0.0
        %931 = vmatpush1.msra.mxu0 %v871
        %932 = vmatprep.subr.mxu0 0.0
        %933 = vmatpush1.msra.mxu0 %v872
        %934 = vmatprep.subr.mxu0 0.0
        %935 = vmatpush1.msra.mxu0 %v873
        %936 = vmatprep.subr.mxu0 0.0
        %937 = vmatpush1.msra.mxu0 %v874
        %938 = vmatprep.subr.mxu0 0.0
        %939 = vmatpush1.msra.mxu0 %v875
        %940 = vmatprep.subr.mxu0 0.0
        %941 = vmatpush1.msra.mxu0 %v876
        %942 = vmatprep.subr.mxu0 0.0
        %943 = vmatpush1.msra.mxu0 %v877
        %944 = vmatprep.subr.mxu0 0.0
        %945 = vmatpush1.msra.mxu0 %v878
        %946 = vmatprep.subr.mxu0 0.0
        %947 = vmatpush1.msra.mxu0 %v879
        %948 = vmatprep.subr.mxu0 0.0
        %949 = vmatpush1.msra.mxu0 %v880
        %950 = vmatprep.subr.mxu0 0.0
        %951 = vmatpush1.msra.mxu0 %v881
        %952 = vmatprep.subr.mxu0 0.0
        %953 = vmatpush1.msra.mxu0 %v882
        %954 = vmatprep.mubr.f32.mxu0 %v636
        %955 = vmatmul.mubr.f32.gmra.mrb[0].mxu0 %v635
        %v956 = vpop.f32.mrb[0].mxu0
        %v957 = vadd.f32 %v888, %v956
        %v958 = vpop.f32.mrb[0].mxu0
        %959 = vmatprep.mubr.f32.mxu0 %v638
        %960 = vmatmul.mubr.f32.gmra.mrb[0].mxu0 %v637
        %v961 = vpop.f32.mrb[0].mxu0
        %v962 = vadd.f32 %v888, %v961
        %v963 = vpop.f32.mrb[0].mxu0
        %964 = vmatprep.mubr.f32.mxu0 %v640
        %965 = vmatmul.mubr.f32.gmra.mrb[0].mxu0 %v639
        %v966 = vpop.f32.mrb[0].mxu0
        %v967 = vadd.f32 %v888, %v966
        %v968 = vpop.f32.mrb[0].mxu0
        %969 = vmatprep.mubr.f32.mxu0 %v642
        %970 = vmatmul.mubr.f32.gmra.mrb[0].mxu0 %v641
        %v971 = vpop.f32.mrb[0].mxu0
        %v972 = vadd.f32 %v888, %v971
        %v973 = vpop.f32.mrb[0].mxu0
        %974 = vmatprep.mubr.f32.mxu0 %v644
        %975 = vmatmul.mubr.f32.gmra.mrb[0].mxu0 %v643
        %v976 = vpop.f32.mrb[0].mxu0
        %v977 = vadd.f32 %v888, %v976
        %v978 = vpop.f32.mrb[0].mxu0
        %979 = vmatprep.mubr.f32.mxu0 %v646
        %980 = vmatmul.mubr.f32.gmra.mrb[0].mxu0 %v645
        %v981 = vpop.f32.mrb[0].mxu0
        %v982 = vadd.f32 %v888, %v981
        %v983 = vpop.f32.mrb[0].mxu0
        %984 = vmatprep.mubr.f32.mxu0 %v648
        %985 = vmatmul.mubr.f32.gmra.mrb[0].mxu0 %v647
        %v986 = vpop.f32.mrb[0].mxu0
        %v987 = vadd.f32 %v888, %v986
        %v988 = vpop.f32.mrb[0].mxu0
        %989 = vmatprep.mubr.f32.mxu0 %v650
        %990 = vmatmul.mubr.f32.gmra.mrb[0].mxu0 %v649
        %v991 = vpop.f32.mrb[0].mxu0
        %v992 = vadd.f32 %v888, %v991
        %v993 = vpop.f32.mrb[0].mxu0
        %994 = vmatprep.mubr.f32.mxu0 %v652
        %995 = vmatmul.mubr.f32.gmra.mrb[0].mxu0 %v651
        %v996 = vpop.f32.mrb[0].mxu0
        %v997 = vadd.f32 %v888, %v996
        %v998 = vpop.f32.mrb[0].mxu0
        %999 = vmatprep.mubr.f32.mxu0 %v654
        %1000 = vmatmul.mubr.f32.gmra.mrb[0].mxu0 %v653
        %v1001 = vpop.f32.mrb[0].mxu0
        %v1002 = vadd.f32 %v888, %v1001
        %v1003 = vpop.f32.mrb[0].mxu0
        %1004 = vmatprep.mubr.f32.mxu0 %v656
        %1005 = vmatmul.mubr.f32.gmra.mrb[0].mxu0 %v655
        %v1006 = vpop.f32.mrb[0].mxu0
        %v1007 = vadd.f32 %v888, %v1006
        %v1008 = vpop.f32.mrb[0].mxu0
        %1009 = vmatprep.mubr.f32.mxu0 %v658
        %1010 = vmatmul.mubr.f32.gmra.mrb[0].mxu0 %v657
        %v1011 = vpop.f32.mrb[0].mxu0
        %v1012 = vadd.f32 %v888, %v1011
        %v1013 = vpop.f32.mrb[0].mxu0
        %1014 = vmatprep.mubr.f32.mxu0 %v660
        %1015 = vmatmul.mubr.f32.gmra.mrb[0].mxu0 %v659
        %v1016 = vpop.f32.mrb[0].mxu0
        %v1017 = vadd.f32 %v888, %v1016
        %v1018 = vpop.f32.mrb[0].mxu0
        %1019 = vmatprep.mubr.f32.mxu0 %v662
        %1020 = vmatmul.mubr.f32.gmra.mrb[0].mxu0 %v661
        %v1021 = vpop.f32.mrb[0].mxu0
        %v1022 = vadd.f32 %v888, %v1021
        %v1023 = vpop.f32.mrb[0].mxu0
        %1024 = vmatprep.mubr.f32.mxu0 %v664
        %1025 = vmatmul.mubr.f32.gmra.mrb[0].mxu0 %v663
        %v1026 = vpop.f32.mrb[0].mxu0
        %v1027 = vadd.f32 %v888, %v1026
        %v1028 = vpop.f32.mrb[0].mxu0
        %1029 = vmatprep.mubr.f32.mxu0 %v666
        %1030 = vmatmul.mubr.f32.gmra.mrb[0].mxu0 %v665
        %v1031 = vpop.f32.mrb[0].mxu0
        %v1032 = vadd.f32 %v888, %v1031
        %v1033 = vpop.f32.mrb[0].mxu0
        %1034 = vdwg.mxu0
        %v1035 = vld [vmem:[%s508] sm:$0xff]
        %v1036 = vld [vmem:[%s508 + $0x8] sm:$0xff]
        %v1037 = vld [vmem:[%s508 + $0x10] sm:$0xff]
        %v1038 = vld [vmem:[%s508 + $0x18] sm:$0xff]
        %v1039 = vld [vmem:[%s508 + $0x20] sm:$0xff]
        %v1040 = vld [vmem:[%s508 + $0x28] sm:$0xff]
        %v1041 = vld [vmem:[%s508 + $0x30] sm:$0xff]
        %v1042 = vld [vmem:[%s508 + $0x38] sm:$0xff]
        %v1043 = vld [vmem:[%s508 + $0x40] sm:$0xff]
        %v1044 = vld [vmem:[%s508 + $0x48] sm:$0xff]
        %v1045 = vld [vmem:[%s508 + $0x50] sm:$0xff]
        %v1046 = vld [vmem:[%s508 + $0x58] sm:$0xff]
        %v1047 = vld [vmem:[%s508 + $0x60] sm:$0xff]
        %v1048 = vld [vmem:[%s508 + $0x68] sm:$0xff]
        %v1049 = vld [vmem:[%s508 + $0x70] sm:$0xff]
        %v1050 = vld [vmem:[%s508 + $0x78] sm:$0xff]
        %v1051 = vld [vmem:[%s508 + $0x80] sm:$0xff]
        %v1052 = vld [vmem:[%s508 + $0x88] sm:$0xff]
        %v1053 = vld [vmem:[%s508 + $0x90] sm:$0xff]
        %v1054 = vld [vmem:[%s508 + $0x98] sm:$0xff]
        %v1055 = vld [vmem:[%s508 + $0xa0] sm:$0xff]
        %v1056 = vld [vmem:[%s508 + $0xa8] sm:$0xff]
        %v1057 = vld [vmem:[%s508 + $0xb0] sm:$0xff]
        %v1058 = vld [vmem:[%s508 + $0xb8] sm:$0xff]
        %v1059 = vld [vmem:[%s508 + $0xc0] sm:$0xff]
        %v1060 = vld [vmem:[%s508 + $0xc8] sm:$0xff]
        %v1061 = vld [vmem:[%s508 + $0xd0] sm:$0xff]
        %v1062 = vld [vmem:[%s508 + $0xd8] sm:$0xff]
        %v1063 = vld [vmem:[%s508 + $0xe0] sm:$0xff]
        %v1064 = vld [vmem:[%s508 + $0xe8] sm:$0xff]
        %v1065 = vld [vmem:[%s508 + $0xf0] sm:$0xff]
        %v1066 = vld [vmem:[%s508 + $0xf8] sm:$0xff]
        %v1067 = vld [vmem:[%s596] sm:$0x1]
        %v1069 = vlaneseq
        %v1070 = vshrl.u32 %v1069, 7
        %v1071 = vsub.s32 0, %v1070
        %v1072 = vrot.slane %v1067, %v1071
        %1074 = vmatprep.subr.mxu0 0.0
        %1075 = vmatpush1.msra.mxu0 %v1035
        %1076 = vmatprep.subr.mxu0 0.0
        %1077 = vmatpush1.msra.mxu0 %v1036
        %1078 = vmatprep.subr.mxu0 0.0
        %1079 = vmatpush1.msra.mxu0 %v1037
        %1080 = vmatprep.subr.mxu0 0.0
        %1081 = vmatpush1.msra.mxu0 %v1038
        %1082 = vmatprep.subr.mxu0 0.0
        %1083 = vmatpush1.msra.mxu0 %v1039
        %1084 = vmatprep.subr.mxu0 0.0
        %1085 = vmatpush1.msra.mxu0 %v1040
        %1086 = vmatprep.subr.mxu0 0.0
        %1087 = vmatpush1.msra.mxu0 %v1041
        %1088 = vmatprep.subr.mxu0 0.0
        %1089 = vmatpush1.msra.mxu0 %v1042
        %1090 = vmatprep.subr.mxu0 0.0
        %1091 = vmatpush1.msra.mxu0 %v1043
        %1092 = vmatprep.subr.mxu0 0.0
        %1093 = vmatpush1.msra.mxu0 %v1044
        %1094 = vmatprep.subr.mxu0 0.0
        %1095 = vmatpush1.msra.mxu0 %v1045
        %1096 = vmatprep.subr.mxu0 0.0
        %1097 = vmatpush1.msra.mxu0 %v1046
        %1098 = vmatprep.subr.mxu0 0.0
        %1099 = vmatpush1.msra.mxu0 %v1047
        %1100 = vmatprep.subr.mxu0 0.0
        %1101 = vmatpush1.msra.mxu0 %v1048
        %1102 = vmatprep.subr.mxu0 0.0
        %1103 = vmatpush1.msra.mxu0 %v1049
        %1104 = vmatprep.subr.mxu0 0.0
        %1105 = vmatpush1.msra.mxu0 %v1050
        %1106 = vmatprep.subr.mxu0 0.0
        %1107 = vmatpush1.msra.mxu0 %v1051
        %1108 = vmatprep.subr.mxu0 0.0
        %1109 = vmatpush1.msra.mxu0 %v1052
        %1110 = vmatprep.subr.mxu0 0.0
        %1111 = vmatpush1.msra.mxu0 %v1053
        %1112 = vmatprep.subr.mxu0 0.0
        %1113 = vmatpush1.msra.mxu0 %v1054
        %1114 = vmatprep.subr.mxu0 0.0
        %1115 = vmatpush1.msra.mxu0 %v1055
        %1116 = vmatprep.subr.mxu0 0.0
        %1117 = vmatpush1.msra.mxu0 %v1056
        %1118 = vmatprep.subr.mxu0 0.0
        %1119 = vmatpush1.msra.mxu0 %v1057
        %1120 = vmatprep.subr.mxu0 0.0
        %1121 = vmatpush1.msra.mxu0 %v1058
        %1122 = vmatprep.subr.mxu0 0.0
        %1123 = vmatpush1.msra.mxu0 %v1059
        %1124 = vmatprep.subr.mxu0 0.0
        %1125 = vmatpush1.msra.mxu0 %v1060
        %1126 = vmatprep.subr.mxu0 0.0
        %1127 = vmatpush1.msra.mxu0 %v1061
        %1128 = vmatprep.subr.mxu0 0.0
        %1129 = vmatpush1.msra.mxu0 %v1062
        %1130 = vmatprep.subr.mxu0 0.0
        %1131 = vmatpush1.msra.mxu0 %v1063
        %1132 = vmatprep.subr.mxu0 0.0
        %1133 = vmatpush1.msra.mxu0 %v1064
        %1134 = vmatprep.subr.mxu0 0.0
        %1135 = vmatpush1.msra.mxu0 %v1065
        %1136 = vmatprep.subr.mxu0 0.0
        %1137 = vmatpush1.msra.mxu0 %v1066
        %1138 = vmatprep.mubr.f32.mxu0 %v636
        %1139 = vmatmul.mubr.f32.gmra.mrb[0].mxu0 %v635
        %v1140 = vpop.f32.mrb[0].mxu0
        %v1141 = vadd.f32 %v1072, %v1140
        %v1142 = vpop.f32.mrb[0].mxu0
        %1143 = vmatprep.mubr.f32.mxu0 %v638
        %1144 = vmatmul.mubr.f32.gmra.mrb[0].mxu0 %v637
        %v1145 = vpop.f32.mrb[0].mxu0
        %v1146 = vadd.f32 %v1072, %v1145
        %v1147 = vpop.f32.mrb[0].mxu0
        %1148 = vmatprep.mubr.f32.mxu0 %v640
        %1149 = vmatmul.mubr.f32.gmra.mrb[0].mxu0 %v639
        %v1150 = vpop.f32.mrb[0].mxu0
        %v1151 = vadd.f32 %v1072, %v1150
        %v1152 = vpop.f32.mrb[0].mxu0
        %1153 = vmatprep.mubr.f32.mxu0 %v642
        %1154 = vmatmul.mubr.f32.gmra.mrb[0].mxu0 %v641
        %v1155 = vpop.f32.mrb[0].mxu0
        %v1156 = vadd.f32 %v1072, %v1155
        %v1157 = vpop.f32.mrb[0].mxu0
        %1158 = vmatprep.mubr.f32.mxu0 %v644
        %1159 = vmatmul.mubr.f32.gmra.mrb[0].mxu0 %v643
        %v1160 = vpop.f32.mrb[0].mxu0
        %v1161 = vadd.f32 %v1072, %v1160
        %v1162 = vpop.f32.mrb[0].mxu0
        %1163 = vmatprep.mubr.f32.mxu0 %v646
        %1164 = vmatmul.mubr.f32.gmra.mrb[0].mxu0 %v645
        %v1165 = vpop.f32.mrb[0].mxu0
        %v1166 = vadd.f32 %v1072, %v1165
        %v1167 = vpop.f32.mrb[0].mxu0
        %1168 = vmatprep.mubr.f32.mxu0 %v648
        %1169 = vmatmul.mubr.f32.gmra.mrb[0].mxu0 %v647
        %v1170 = vpop.f32.mrb[0].mxu0
        %v1171 = vadd.f32 %v1072, %v1170
        %v1172 = vpop.f32.mrb[0].mxu0
        %1173 = vmatprep.mubr.f32.mxu0 %v650
        %1174 = vmatmul.mubr.f32.gmra.mrb[0].mxu0 %v649
        %v1175 = vpop.f32.mrb[0].mxu0
        %v1176 = vadd.f32 %v1072, %v1175
        %v1177 = vpop.f32.mrb[0].mxu0
        %1178 = vmatprep.mubr.f32.mxu0 %v652
        %1179 = vmatmul.mubr.f32.gmra.mrb[0].mxu0 %v651
        %v1180 = vpop.f32.mrb[0].mxu0
        %v1181 = vadd.f32 %v1072, %v1180
        %v1182 = vpop.f32.mrb[0].mxu0
        %1183 = vmatprep.mubr.f32.mxu0 %v654
        %1184 = vmatmul.mubr.f32.gmra.mrb[0].mxu0 %v653
        %v1185 = vpop.f32.mrb[0].mxu0
        %v1186 = vadd.f32 %v1072, %v1185
        %v1187 = vpop.f32.mrb[0].mxu0
        %1188 = vmatprep.mubr.f32.mxu0 %v656
        %1189 = vmatmul.mubr.f32.gmra.mrb[0].mxu0 %v655
        %v1190 = vpop.f32.mrb[0].mxu0
        %v1191 = vadd.f32 %v1072, %v1190
        %v1192 = vpop.f32.mrb[0].mxu0
        %1193 = vmatprep.mubr.f32.mxu0 %v658
        %1194 = vmatmul.mubr.f32.gmra.mrb[0].mxu0 %v657
        %v1195 = vpop.f32.mrb[0].mxu0
        %v1196 = vadd.f32 %v1072, %v1195
        %v1197 = vpop.f32.mrb[0].mxu0
        %1198 = vmatprep.mubr.f32.mxu0 %v660
        %1199 = vmatmul.mubr.f32.gmra.mrb[0].mxu0 %v659
        %v1200 = vpop.f32.mrb[0].mxu0
        %v1201 = vadd.f32 %v1072, %v1200
        %v1202 = vpop.f32.mrb[0].mxu0
        %1203 = vmatprep.mubr.f32.mxu0 %v662
        %1204 = vmatmul.mubr.f32.gmra.mrb[0].mxu0 %v661
        %v1205 = vpop.f32.mrb[0].mxu0
        %v1206 = vadd.f32 %v1072, %v1205
        %v1207 = vpop.f32.mrb[0].mxu0
        %1208 = vmatprep.mubr.f32.mxu0 %v664
        %1209 = vmatmul.mubr.f32.gmra.mrb[0].mxu0 %v663
        %v1210 = vpop.f32.mrb[0].mxu0
        %v1211 = vadd.f32 %v1072, %v1210
        %v1212 = vpop.f32.mrb[0].mxu0
        %1213 = vmatprep.mubr.f32.mxu0 %v666
        %1214 = vmatmul.mubr.f32.gmra.mrb[0].mxu0 %v665
        %v1215 = vpop.f32.mrb[0].mxu0
        %v1216 = vadd.f32 %v1072, %v1215
        %v1217 = vpop.f32.mrb[0].mxu0
        %1218 = vdwg.mxu0
        %v1219 = vmul.f32 %v773, 0.125
        %v1220 = vmul.f32 %v778, 0.125
        %v1221 = vmul.f32 %v783, 0.125
        %v1222 = vmul.f32 %v788, 0.125
        %v1223 = vmul.f32 %v793, 0.125
        %v1224 = vmul.f32 %v798, 0.125
        %v1225 = vmul.f32 %v803, 0.125
        %v1226 = vmul.f32 %v808, 0.125
        %v1227 = vmul.f32 %v813, 0.125
        %v1228 = vmul.f32 %v818, 0.125
        %v1229 = vmul.f32 %v823, 0.125
        %v1230 = vmul.f32 %v828, 0.125
        %v1231 = vmul.f32 %v833, 0.125
        %v1232 = vmul.f32 %v838, 0.125
        %v1233 = vmul.f32 %v843, 0.125
        %v1234 = vmul.f32 %v848, 0.125
        %vm1235 = vcmask 523264
        %v1237 = vsel %vm1235, %v1219, 0
        %v1240 = vsel %vm1235, %v1220, 0
        %v1243 = vsel %vm1235, %v1221, 0
        %v1246 = vsel %vm1235, %v1222, 0
        %v1249 = vsel %vm1235, %v1223, 0
        %v1252 = vsel %vm1235, %v1224, 0
        %v1255 = vsel %vm1235, %v1225, 0
        %v1258 = vsel %vm1235, %v1226, 0
        %v1261 = vsel %vm1235, %v1227, 0
        %v1264 = vsel %vm1235, %v1228, 0
        %v1267 = vsel %vm1235, %v1229, 0
        %v1270 = vsel %vm1235, %v1230, 0
        %v1273 = vsel %vm1235, %v1231, 0
        %v1276 = vsel %vm1235, %v1232, 0
        %v1279 = vsel %vm1235, %v1233, 0
        %v1282 = vsel %vm1235, %v1234, 0
        %v1285 = vsel %vm1235, %v957, 0
        %v1288 = vsel %vm1235, %v962, 0
        %v1291 = vsel %vm1235, %v967, 0
        %v1294 = vsel %vm1235, %v972, 0
        %v1297 = vsel %vm1235, %v977, 0
        %v1300 = vsel %vm1235, %v982, 0
        %v1303 = vsel %vm1235, %v987, 0
        %v1306 = vsel %vm1235, %v992, 0
        %v1309 = vsel %vm1235, %v997, 0
        %v1312 = vsel %vm1235, %v1002, 0
        %v1315 = vsel %vm1235, %v1007, 0
        %v1318 = vsel %vm1235, %v1012, 0
        %v1321 = vsel %vm1235, %v1017, 0
        %v1324 = vsel %vm1235, %v1022, 0
        %v1327 = vsel %vm1235, %v1027, 0
        %v1330 = vsel %vm1235, %v1032, 0
        %1332 = vmatprep.subr.mxu0 0.0
        %1333 = vmatpush1.xpose.msra.mxu0 %v1285
        %1334 = vmatprep.subr.mxu0 0.0
        %1335 = vmatpush1.xpose.msra.mxu0 %v1288
        %1336 = vmatprep.subr.mxu0 0.0
        %1337 = vmatpush1.xpose.msra.mxu0 %v1291
        %1338 = vmatprep.subr.mxu0 0.0
        %1339 = vmatpush1.xpose.msra.mxu0 %v1294
        %1340 = vmatprep.subr.mxu0 0.0
        %1341 = vmatpush1.xpose.msra.mxu0 %v1297
        %1342 = vmatprep.subr.mxu0 0.0
        %1343 = vmatpush1.xpose.msra.mxu0 %v1300
        %1344 = vmatprep.subr.mxu0 0.0
        %1345 = vmatpush1.xpose.msra.mxu0 %v1303
        %1346 = vmatprep.subr.mxu0 0.0
        %1347 = vmatpush1.xpose.msra.mxu0 %v1306
        %1348 = vmatprep.subr.mxu0 0.0
        %1349 = vmatpush1.xpose.msra.mxu0 %v1309
        %1350 = vmatprep.subr.mxu0 0.0
        %1351 = vmatpush1.xpose.msra.mxu0 %v1312
        %1352 = vmatprep.subr.mxu0 0.0
        %1353 = vmatpush1.xpose.msra.mxu0 %v1315
        %1354 = vmatprep.subr.mxu0 0.0
        %1355 = vmatpush1.xpose.msra.mxu0 %v1318
        %1356 = vmatprep.subr.mxu0 0.0
        %1357 = vmatpush1.xpose.msra.mxu0 %v1321
        %1358 = vmatprep.subr.mxu0 0.0
        %1359 = vmatpush1.xpose.msra.mxu0 %v1324
        %1360 = vmatprep.subr.mxu0 0.0
        %1361 = vmatpush1.xpose.msra.mxu0 %v1327
        %1362 = vmatprep.subr.mxu0 0.0
        %1363 = vmatpush1.xpose.msra.mxu0 %v1330
        %1364 = vmatprep.subr.mxu0 0.0
        %1365 = vmatpush1.xpose.msra.mxu0 0.0
        %1366 = vmatprep.subr.mxu0 0.0
        %1367 = vmatpush1.xpose.msra.mxu0 0.0
        %1368 = vmatprep.subr.mxu0 0.0
        %1369 = vmatpush1.xpose.msra.mxu0 0.0
        %1370 = vmatprep.subr.mxu0 0.0
        %1371 = vmatpush1.xpose.msra.mxu0 0.0
        %1372 = vmatprep.subr.mxu0 0.0
        %1373 = vmatpush1.xpose.msra.mxu0 0.0
        %1374 = vmatprep.subr.mxu0 0.0
        %1375 = vmatpush1.xpose.msra.mxu0 0.0
        %1376 = vmatprep.subr.mxu0 0.0
        %1377 = vmatpush1.xpose.msra.mxu0 0.0
        %1378 = vmatprep.subr.mxu0 0.0
        %1379 = vmatpush1.xpose.msra.mxu0 0.0
        %1380 = vmatprep.subr.mxu0 0.0
        %1381 = vmatpush1.xpose.msra.mxu0 0.0
        %1382 = vmatprep.subr.mxu0 0.0
        %1383 = vmatpush1.xpose.msra.mxu0 0.0
        %1384 = vmatprep.subr.mxu0 0.0
        %1385 = vmatpush1.xpose.msra.mxu0 0.0
        %1386 = vmatprep.subr.mxu0 0.0
        %1387 = vmatpush1.xpose.msra.mxu0 0.0
        %1388 = vmatprep.subr.mxu0 0.0
        %1389 = vmatpush1.xpose.msra.mxu0 0.0
        %1390 = vmatprep.subr.mxu0 0.0
        %1391 = vmatpush1.xpose.msra.mxu0 0.0
        %1392 = vmatprep.subr.mxu0 0.0
        %1393 = vmatpush1.xpose.msra.mxu0 0.0
        %1394 = vmatprep.subr.mxu0 0.0
        %1395 = vmatpush1.xpose.msra.mxu0 0.0
        %1396 = vmatprep.mubr.f32.mxu0 0.0
        %1397 = vmatmul.mubr.f32.gmra.mrb[0].mxu0 %v1237
        %v1398 = vpop.f32.mrb[0].mxu0
        %v1399 = vadd.f32 0.0, %v1398
        %v1400 = vpop.f32.mrb[0].mxu0
        %1401 = vmatprep.mubr.f32.mxu0 0.0
        %1402 = vmatmul.mubr.f32.gmra.mrb[0].mxu0 %v1240
        %v1403 = vpop.f32.mrb[0].mxu0
        %v1404 = vadd.f32 0.0, %v1403
        %v1405 = vpop.f32.mrb[0].mxu0
        %1406 = vmatprep.mubr.f32.mxu0 0.0
        %1407 = vmatmul.mubr.f32.gmra.mrb[0].mxu0 %v1243
        %v1408 = vpop.f32.mrb[0].mxu0
        %v1409 = vadd.f32 0.0, %v1408
        %v1410 = vpop.f32.mrb[0].mxu0
        %1411 = vmatprep.mubr.f32.mxu0 0.0
        %1412 = vmatmul.mubr.f32.gmra.mrb[0].mxu0 %v1246
        %v1413 = vpop.f32.mrb[0].mxu0
        %v1414 = vadd.f32 0.0, %v1413
        %v1415 = vpop.f32.mrb[0].mxu0
        %1416 = vmatprep.mubr.f32.mxu0 0.0
        %1417 = vmatmul.mubr.f32.gmra.mrb[0].mxu0 %v1249
        %v1418 = vpop.f32.mrb[0].mxu0
        %v1419 = vadd.f32 0.0, %v1418
        %v1420 = vpop.f32.mrb[0].mxu0
        %1421 = vmatprep.mubr.f32.mxu0 0.0
        %1422 = vmatmul.mubr.f32.gmra.mrb[0].mxu0 %v1252
        %v1423 = vpop.f32.mrb[0].mxu0
        %v1424 = vadd.f32 0.0, %v1423
        %v1425 = vpop.f32.mrb[0].mxu0
        %1426 = vmatprep.mubr.f32.mxu0 0.0
        %1427 = vmatmul.mubr.f32.gmra.mrb[0].mxu0 %v1255
        %v1428 = vpop.f32.mrb[0].mxu0
        %v1429 = vadd.f32 0.0, %v1428
        %v1430 = vpop.f32.mrb[0].mxu0
        %1431 = vmatprep.mubr.f32.mxu0 0.0
        %1432 = vmatmul.mubr.f32.gmra.mrb[0].mxu0 %v1258
        %v1433 = vpop.f32.mrb[0].mxu0
        %v1434 = vadd.f32 0.0, %v1433
        %v1435 = vpop.f32.mrb[0].mxu0
        %1436 = vmatprep.mubr.f32.mxu0 0.0
        %1437 = vmatmul.mubr.f32.gmra.mrb[0].mxu0 %v1261
        %v1438 = vpop.f32.mrb[0].mxu0
        %v1439 = vadd.f32 0.0, %v1438
        %v1440 = vpop.f32.mrb[0].mxu0
        %1441 = vmatprep.mubr.f32.mxu0 0.0
        %1442 = vmatmul.mubr.f32.gmra.mrb[0].mxu0 %v1264
        %v1443 = vpop.f32.mrb[0].mxu0
        %v1444 = vadd.f32 0.0, %v1443
        %v1445 = vpop.f32.mrb[0].mxu0
        %1446 = vmatprep.mubr.f32.mxu0 0.0
        %1447 = vmatmul.mubr.f32.gmra.mrb[0].mxu0 %v1267
        %v1448 = vpop.f32.mrb[0].mxu0
        %v1449 = vadd.f32 0.0, %v1448
        %v1450 = vpop.f32.mrb[0].mxu0
        %1451 = vmatprep.mubr.f32.mxu0 0.0
        %1452 = vmatmul.mubr.f32.gmra.mrb[0].mxu0 %v1270
        %v1453 = vpop.f32.mrb[0].mxu0
        %v1454 = vadd.f32 0.0, %v1453
        %v1455 = vpop.f32.mrb[0].mxu0
        %1456 = vmatprep.mubr.f32.mxu0 0.0
        %1457 = vmatmul.mubr.f32.gmra.mrb[0].mxu0 %v1273
        %v1458 = vpop.f32.mrb[0].mxu0
        %v1459 = vadd.f32 0.0, %v1458
        %v1460 = vpop.f32.mrb[0].mxu0
        %1461 = vmatprep.mubr.f32.mxu0 0.0
        %1462 = vmatmul.mubr.f32.gmra.mrb[0].mxu0 %v1276
        %v1463 = vpop.f32.mrb[0].mxu0
        %v1464 = vadd.f32 0.0, %v1463
        %v1465 = vpop.f32.mrb[0].mxu0
        %1466 = vmatprep.mubr.f32.mxu0 0.0
        %1467 = vmatmul.mubr.f32.gmra.mrb[0].mxu0 %v1279
        %v1468 = vpop.f32.mrb[0].mxu0
        %v1469 = vadd.f32 0.0, %v1468
        %v1470 = vpop.f32.mrb[0].mxu0
        %1471 = vmatprep.mubr.f32.mxu0 0.0
        %1472 = vmatmul.mubr.f32.gmra.mrb[0].mxu0 %v1282
        %v1473 = vpop.f32.mrb[0].mxu0
        %v1474 = vadd.f32 0.0, %v1473
        %v1475 = vpop.f32.mrb[0].mxu0
        %1476 = vdwg.mxu0
        %1477 = vmax.xlane.f32.xlu0 %v1399
        %v1478 = vpop.xlane.xlu0 %1477
        %1479 = vmax.xlane.f32.xlu0 %v1404
        %v1480 = vpop.xlane.xlu0 %1479
        %1481 = vmax.xlane.f32.xlu0 %v1409
        %v1482 = vpop.xlane.xlu0 %1481
        %1483 = vmax.xlane.f32.xlu0 %v1414
        %v1484 = vpop.xlane.xlu0 %1483
        %1485 = vmax.xlane.f32.xlu0 %v1419
        %v1486 = vpop.xlane.xlu0 %1485
        %1487 = vmax.xlane.f32.xlu0 %v1424
        %v1488 = vpop.xlane.xlu0 %1487
        %1489 = vmax.xlane.f32.xlu0 %v1429
        %v1490 = vpop.xlane.xlu0 %1489
        %1491 = vmax.xlane.f32.xlu0 %v1434
        %v1492 = vpop.xlane.xlu0 %1491
        %1493 = vmax.xlane.f32.xlu0 %v1439
        %v1494 = vpop.xlane.xlu0 %1493
        %1495 = vmax.xlane.f32.xlu0 %v1444
        %v1496 = vpop.xlane.xlu0 %1495
        %1497 = vmax.xlane.f32.xlu0 %v1449
        %v1498 = vpop.xlane.xlu0 %1497
        %1499 = vmax.xlane.f32.xlu0 %v1454
        %v1500 = vpop.xlane.xlu0 %1499
        %1501 = vmax.xlane.f32.xlu0 %v1459
        %v1502 = vpop.xlane.xlu0 %1501
        %1503 = vmax.xlane.f32.xlu0 %v1464
        %v1504 = vpop.xlane.xlu0 %1503
        %1505 = vmax.xlane.f32.xlu0 %v1469
        %v1506 = vpop.xlane.xlu0 %1505
        %1507 = vmax.xlane.f32.xlu0 %v1474
        %v1508 = vpop.xlane.xlu0 %1507
        %v1509 = vsub.f32 %v1399, %v1478
        %v1510 = vsub.f32 %v1404, %v1480
        %v1511 = vsub.f32 %v1409, %v1482
        %v1512 = vsub.f32 %v1414, %v1484
        %v1513 = vsub.f32 %v1419, %v1486
        %v1514 = vsub.f32 %v1424, %v1488
        %v1515 = vsub.f32 %v1429, %v1490
        %v1516 = vsub.f32 %v1434, %v1492
        %v1517 = vsub.f32 %v1439, %v1494
        %v1518 = vsub.f32 %v1444, %v1496
        %v1519 = vsub.f32 %v1449, %v1498
        %v1520 = vsub.f32 %v1454, %v1500
        %v1521 = vsub.f32 %v1459, %v1502
        %v1522 = vsub.f32 %v1464, %v1504
        %v1523 = vsub.f32 %v1469, %v1506
        %v1524 = vsub.f32 %v1474, %v1508
        %v1525 = vmul.f32 %v1509, 1.442695
        %v1526 = vpow.pop %v1525
        %v1527 = vmul.f32 %v1510, 1.442695
        %v1528 = vpow.pop %v1527
        %v1529 = vmul.f32 %v1511, 1.442695
        %v1530 = vpow.pop %v1529
        %v1531 = vmul.f32 %v1512, 1.442695
        %v1532 = vpow.pop %v1531
        %v1533 = vmul.f32 %v1513, 1.442695
        %v1534 = vpow.pop %v1533
        %v1535 = vmul.f32 %v1514, 1.442695
        %v1536 = vpow.pop %v1535
        %v1537 = vmul.f32 %v1515, 1.442695
        %v1538 = vpow.pop %v1537
        %v1539 = vmul.f32 %v1516, 1.442695
        %v1540 = vpow.pop %v1539
        %v1541 = vmul.f32 %v1517, 1.442695
        %v1542 = vpow.pop %v1541
        %v1543 = vmul.f32 %v1518, 1.442695
        %v1544 = vpow.pop %v1543
        %v1545 = vmul.f32 %v1519, 1.442695
        %v1546 = vpow.pop %v1545
        %v1547 = vmul.f32 %v1520, 1.442695
        %v1548 = vpow.pop %v1547
        %v1549 = vmul.f32 %v1521, 1.442695
        %v1550 = vpow.pop %v1549
        %v1551 = vmul.f32 %v1522, 1.442695
        %v1552 = vpow.pop %v1551
        %v1553 = vmul.f32 %v1523, 1.442695
        %v1554 = vpow.pop %v1553
        %v1555 = vmul.f32 %v1524, 1.442695
        %v1556 = vpow.pop %v1555
        %1557 = vadd.xlane.f32.xlu0 %v1526
        %v1558 = vpop.xlane.xlu0 %1557
        %1559 = vadd.xlane.f32.xlu0 %v1528
        %v1560 = vpop.xlane.xlu0 %1559
        %1561 = vadd.xlane.f32.xlu0 %v1530
        %v1562 = vpop.xlane.xlu0 %1561
        %1563 = vadd.xlane.f32.xlu0 %v1532
        %v1564 = vpop.xlane.xlu0 %1563
        %1565 = vadd.xlane.f32.xlu0 %v1534
        %v1566 = vpop.xlane.xlu0 %1565
        %1567 = vadd.xlane.f32.xlu0 %v1536
        %v1568 = vpop.xlane.xlu0 %1567
        %1569 = vadd.xlane.f32.xlu0 %v1538
        %v1570 = vpop.xlane.xlu0 %1569
        %1571 = vadd.xlane.f32.xlu0 %v1540
        %v1572 = vpop.xlane.xlu0 %1571
        %1573 = vadd.xlane.f32.xlu0 %v1542
        %v1574 = vpop.xlane.xlu0 %1573
        %1575 = vadd.xlane.f32.xlu0 %v1544
        %v1576 = vpop.xlane.xlu0 %1575
        %1577 = vadd.xlane.f32.xlu0 %v1546
        %v1578 = vpop.xlane.xlu0 %1577
        %1579 = vadd.xlane.f32.xlu0 %v1548
        %v1580 = vpop.xlane.xlu0 %1579
        %1581 = vadd.xlane.f32.xlu0 %v1550
        %v1582 = vpop.xlane.xlu0 %1581
        %1583 = vadd.xlane.f32.xlu0 %v1552
        %v1584 = vpop.xlane.xlu0 %1583
        %1585 = vadd.xlane.f32.xlu0 %v1554
        %v1586 = vpop.xlane.xlu0 %1585
        %1587 = vadd.xlane.f32.xlu0 %v1556
        %v1588 = vpop.xlane.xlu0 %1587
        %v1589 = vrcp.pop %v1558
        %v1590 = vmul.f32 1.0, %v1589
        %v1591 = vrcp.pop %v1560
        %v1592 = vmul.f32 1.0, %v1591
        %v1593 = vrcp.pop %v1562
        %v1594 = vmul.f32 1.0, %v1593
        %v1595 = vrcp.pop %v1564
        %v1596 = vmul.f32 1.0, %v1595
        %v1597 = vrcp.pop %v1566
        %v1598 = vmul.f32 1.0, %v1597
        %v1599 = vrcp.pop %v1568
        %v1600 = vmul.f32 1.0, %v1599
        %v1601 = vrcp.pop %v1570
        %v1602 = vmul.f32 1.0, %v1601
        %v1603 = vrcp.pop %v1572
        %v1604 = vmul.f32 1.0, %v1603
        %v1605 = vrcp.pop %v1574
        %v1606 = vmul.f32 1.0, %v1605
        %v1607 = vrcp.pop %v1576
        %v1608 = vmul.f32 1.0, %v1607
        %v1609 = vrcp.pop %v1578
        %v1610 = vmul.f32 1.0, %v1609
        %v1611 = vrcp.pop %v1580
        %v1612 = vmul.f32 1.0, %v1611
        %v1613 = vrcp.pop %v1582
        %v1614 = vmul.f32 1.0, %v1613
        %v1615 = vrcp.pop %v1584
        %v1616 = vmul.f32 1.0, %v1615
        %v1617 = vrcp.pop %v1586
        %v1618 = vmul.f32 1.0, %v1617
        %v1619 = vrcp.pop %v1588
        %v1620 = vmul.f32 1.0, %v1619
        %v1621 = vmul.f32 %v1526, %v1590
        %v1622 = vmul.f32 %v1528, %v1592
        %v1623 = vmul.f32 %v1530, %v1594
        %v1624 = vmul.f32 %v1532, %v1596
        %v1625 = vmul.f32 %v1534, %v1598
        %v1626 = vmul.f32 %v1536, %v1600
        %v1627 = vmul.f32 %v1538, %v1602
        %v1628 = vmul.f32 %v1540, %v1604
        %v1629 = vmul.f32 %v1542, %v1606
        %v1630 = vmul.f32 %v1544, %v1608
        %v1631 = vmul.f32 %v1546, %v1610
        %v1632 = vmul.f32 %v1548, %v1612
        %v1633 = vmul.f32 %v1550, %v1614
        %v1634 = vmul.f32 %v1552, %v1616
        %v1635 = vmul.f32 %v1554, %v1618
        %v1636 = vmul.f32 %v1556, %v1620
        %1637 = vst [vmem:[%s587] sm:$0xff] %v1621
        %1638 = vst [vmem:[%s587 + $0x8] sm:$0xff] %v1622
        %1639 = vst [vmem:[%s587 + $0x10] sm:$0xff] %v1623
        %1640 = vst [vmem:[%s587 + $0x18] sm:$0xff] %v1624
        %1641 = vst [vmem:[%s587 + $0x20] sm:$0xff] %v1625
        %1642 = vst [vmem:[%s587 + $0x28] sm:$0xff] %v1626
        %1643 = vst [vmem:[%s587 + $0x30] sm:$0xff] %v1627
        %1644 = vst [vmem:[%s587 + $0x38] sm:$0xff] %v1628
        %1645 = vst [vmem:[%s587 + $0x40] sm:$0xff] %v1629
        %1646 = vst [vmem:[%s587 + $0x48] sm:$0xff] %v1630
        %1647 = vst [vmem:[%s587 + $0x50] sm:$0xff] %v1631
        %1648 = vst [vmem:[%s587 + $0x58] sm:$0xff] %v1632
        %1649 = vst [vmem:[%s587 + $0x60] sm:$0xff] %v1633
        %1650 = vst [vmem:[%s587 + $0x68] sm:$0xff] %v1634
        %1651 = vst [vmem:[%s587 + $0x70] sm:$0xff] %v1635
        %1652 = vst [vmem:[%s587 + $0x78] sm:$0xff] %v1636
        %1653 = vmatprep.subr.mxu0 0.0
        %1654 = vmatpush1.msra.mxu0 %v1141
        %1655 = vmatprep.subr.mxu0 0.0
        %1656 = vmatpush1.msra.mxu0 %v1146
        %1657 = vmatprep.subr.mxu0 0.0
        %1658 = vmatpush1.msra.mxu0 %v1151
        %1659 = vmatprep.subr.mxu0 0.0
        %1660 = vmatpush1.msra.mxu0 %v1156
        %1661 = vmatprep.subr.mxu0 0.0
        %1662 = vmatpush1.msra.mxu0 %v1161
        %1663 = vmatprep.subr.mxu0 0.0
        %1664 = vmatpush1.msra.mxu0 %v1166
        %1665 = vmatprep.subr.mxu0 0.0
        %1666 = vmatpush1.msra.mxu0 %v1171
        %1667 = vmatprep.subr.mxu0 0.0
        %1668 = vmatpush1.msra.mxu0 %v1176
        %1669 = vmatprep.subr.mxu0 0.0
        %1670 = vmatpush1.msra.mxu0 %v1181
        %1671 = vmatprep.subr.mxu0 0.0
        %1672 = vmatpush1.msra.mxu0 %v1186
        %1673 = vmatprep.subr.mxu0 0.0
        %1674 = vmatpush1.msra.mxu0 %v1191
        %1675 = vmatprep.subr.mxu0 0.0
        %1676 = vmatpush1.msra.mxu0 %v1196
        %1677 = vmatprep.subr.mxu0 0.0
        %1678 = vmatpush1.msra.mxu0 %v1201
        %1679 = vmatprep.subr.mxu0 0.0
        %1680 = vmatpush1.msra.mxu0 %v1206
        %1681 = vmatprep.subr.mxu0 0.0
        %1682 = vmatpush1.msra.mxu0 %v1211
        %1683 = vmatprep.subr.mxu0 0.0
        %1684 = vmatpush1.msra.mxu0 %v1216
        %1685 = vmatprep.subr.mxu0 0.0
        %1686 = vmatpush1.msra.mxu0 0.0
        %1687 = vmatprep.subr.mxu0 0.0
        %1688 = vmatpush1.msra.mxu0 0.0
        %1689 = vmatprep.subr.mxu0 0.0
        %1690 = vmatpush1.msra.mxu0 0.0
        %1691 = vmatprep.subr.mxu0 0.0
        %1692 = vmatpush1.msra.mxu0 0.0
        %1693 = vmatprep.subr.mxu0 0.0
        %1694 = vmatpush1.msra.mxu0 0.0
        %1695 = vmatprep.subr.mxu0 0.0
        %1696 = vmatpush1.msra.mxu0 0.0
        %1697 = vmatprep.subr.mxu0 0.0
        %1698 = vmatpush1.msra.mxu0 0.0
        %1699 = vmatprep.subr.mxu0 0.0
        %1700 = vmatpush1.msra.mxu0 0.0
        %1701 = vmatprep.subr.mxu0 0.0
        %1702 = vmatpush1.msra.mxu0 0.0
        %1703 = vmatprep.subr.mxu0 0.0
        %1704 = vmatpush1.msra.mxu0 0.0
        %1705 = vmatprep.subr.mxu0 0.0
        %1706 = vmatpush1.msra.mxu0 0.0
        %1707 = vmatprep.subr.mxu0 0.0
        %1708 = vmatpush1.msra.mxu0 0.0
        %1709 = vmatprep.subr.mxu0 0.0
        %1710 = vmatpush1.msra.mxu0 0.0
        %1711 = vmatprep.subr.mxu0 0.0
        %1712 = vmatpush1.msra.mxu0 0.0
        %1713 = vmatprep.subr.mxu0 0.0
        %1714 = vmatpush1.msra.mxu0 0.0
        %1715 = vmatprep.subr.mxu0 0.0
        %1716 = vmatpush1.msra.mxu0 0.0
        %1717 = vmatprep.mubr.f32.mxu0 0.0
        %1718 = vmatmul.mubr.f32.gmra.mrb[0].mxu0 %v1621
        %v1719 = vpop.f32.mrb[0].mxu0
        %v1720 = vadd.f32 0.0, %v1719
        %v1721 = vpop.f32.mrb[0].mxu0
        %1722 = vmatprep.mubr.f32.mxu0 0.0
        %1723 = vmatmul.mubr.f32.gmra.mrb[0].mxu0 %v1622
        %v1724 = vpop.f32.mrb[0].mxu0
        %v1725 = vadd.f32 0.0, %v1724
        %v1726 = vpop.f32.mrb[0].mxu0
        %1727 = vmatprep.mubr.f32.mxu0 0.0
        %1728 = vmatmul.mubr.f32.gmra.mrb[0].mxu0 %v1623
        %v1729 = vpop.f32.mrb[0].mxu0
        %v1730 = vadd.f32 0.0, %v1729
        %v1731 = vpop.f32.mrb[0].mxu0
        %1732 = vmatprep.mubr.f32.mxu0 0.0
        %1733 = vmatmul.mubr.f32.gmra.mrb[0].mxu0 %v1624
        %v1734 = vpop.f32.mrb[0].mxu0
        %v1735 = vadd.f32 0.0, %v1734
        %v1736 = vpop.f32.mrb[0].mxu0
        %1737 = vmatprep.mubr.f32.mxu0 0.0
        %1738 = vmatmul.mubr.f32.gmra.mrb[0].mxu0 %v1625
        %v1739 = vpop.f32.mrb[0].mxu0
        %v1740 = vadd.f32 0.0, %v1739
        %v1741 = vpop.f32.mrb[0].mxu0
        %1742 = vmatprep.mubr.f32.mxu0 0.0
        %1743 = vmatmul.mubr.f32.gmra.mrb[0].mxu0 %v1626
        %v1744 = vpop.f32.mrb[0].mxu0
        %v1745 = vadd.f32 0.0, %v1744
        %v1746 = vpop.f32.mrb[0].mxu0
        %1747 = vmatprep.mubr.f32.mxu0 0.0
        %1748 = vmatmul.mubr.f32.gmra.mrb[0].mxu0 %v1627
        %v1749 = vpop.f32.mrb[0].mxu0
        %v1750 = vadd.f32 0.0, %v1749
        %v1751 = vpop.f32.mrb[0].mxu0
        %1752 = vmatprep.mubr.f32.mxu0 0.0
        %1753 = vmatmul.mubr.f32.gmra.mrb[0].mxu0 %v1628
        %v1754 = vpop.f32.mrb[0].mxu0
        %v1755 = vadd.f32 0.0, %v1754
        %v1756 = vpop.f32.mrb[0].mxu0
        %1757 = vmatprep.mubr.f32.mxu0 0.0
        %1758 = vmatmul.mubr.f32.gmra.mrb[0].mxu0 %v1629
        %v1759 = vpop.f32.mrb[0].mxu0
        %v1760 = vadd.f32 0.0, %v1759
        %v1761 = vpop.f32.mrb[0].mxu0
        %1762 = vmatprep.mubr.f32.mxu0 0.0
        %1763 = vmatmul.mubr.f32.gmra.mrb[0].mxu0 %v1630
        %v1764 = vpop.f32.mrb[0].mxu0
        %v1765 = vadd.f32 0.0, %v1764
        %v1766 = vpop.f32.mrb[0].mxu0
        %1767 = vmatprep.mubr.f32.mxu0 0.0
        %1768 = vmatmul.mubr.f32.gmra.mrb[0].mxu0 %v1631
        %v1769 = vpop.f32.mrb[0].mxu0
        %v1770 = vadd.f32 0.0, %v1769
        %v1771 = vpop.f32.mrb[0].mxu0
        %1772 = vmatprep.mubr.f32.mxu0 0.0
        %1773 = vmatmul.mubr.f32.gmra.mrb[0].mxu0 %v1632
        %v1774 = vpop.f32.mrb[0].mxu0
        %v1775 = vadd.f32 0.0, %v1774
        %v1776 = vpop.f32.mrb[0].mxu0
        %1777 = vmatprep.mubr.f32.mxu0 0.0
        %1778 = vmatmul.mubr.f32.gmra.mrb[0].mxu0 %v1633
        %v1779 = vpop.f32.mrb[0].mxu0
        %v1780 = vadd.f32 0.0, %v1779
        %v1781 = vpop.f32.mrb[0].mxu0
        %1782 = vmatprep.mubr.f32.mxu0 0.0
        %1783 = vmatmul.mubr.f32.gmra.mrb[0].mxu0 %v1634
        %v1784 = vpop.f32.mrb[0].mxu0
        %v1785 = vadd.f32 0.0, %v1784
        %v1786 = vpop.f32.mrb[0].mxu0
        %1787 = vmatprep.mubr.f32.mxu0 0.0
        %1788 = vmatmul.mubr.f32.gmra.mrb[0].mxu0 %v1635
        %v1789 = vpop.f32.mrb[0].mxu0
        %v1790 = vadd.f32 0.0, %v1789
        %v1791 = vpop.f32.mrb[0].mxu0
        %1792 = vmatprep.mubr.f32.mxu0 0.0
        %1793 = vmatmul.mubr.f32.gmra.mrb[0].mxu0 %v1636
        %v1794 = vpop.f32.mrb[0].mxu0
        %v1795 = vadd.f32 0.0, %v1794
        %v1796 = vpop.f32.mrb[0].mxu0
        %1797 = vdwg.mxu0
        %v1798 = vld [vmem:[%s517] sm:$0xff]
        %v1799 = vld [vmem:[%s517 + $0x8] sm:$0xff]
        %v1800 = vld [vmem:[%s517 + $0x10] sm:$0xff]
        %v1801 = vld [vmem:[%s517 + $0x18] sm:$0xff]
        %v1802 = vld [vmem:[%s517 + $0x20] sm:$0xff]
        %v1803 = vld [vmem:[%s517 + $0x28] sm:$0xff]
        %v1804 = vld [vmem:[%s517 + $0x30] sm:$0xff]
        %v1805 = vld [vmem:[%s517 + $0x38] sm:$0xff]
        %v1806 = vld [vmem:[%s517 + $0x40] sm:$0xff]
        %v1807 = vld [vmem:[%s517 + $0x48] sm:$0xff]
        %v1808 = vld [vmem:[%s517 + $0x50] sm:$0xff]
        %v1809 = vld [vmem:[%s517 + $0x58] sm:$0xff]
        %v1810 = vld [vmem:[%s517 + $0x60] sm:$0xff]
        %v1811 = vld [vmem:[%s517 + $0x68] sm:$0xff]
        %v1812 = vld [vmem:[%s517 + $0x70] sm:$0xff]
        %v1813 = vld [vmem:[%s517 + $0x78] sm:$0xff]
        %1814 = vrot.lane.b32.xlu0 %v1219, 64
        %v1815 = vpop.permute.xlu0 %1814
        %1816 = vrot.lane.b32.xlu0 %v1220, 64
        %v1817 = vpop.permute.xlu0 %1816
        %1818 = vrot.lane.b32.xlu0 %v1221, 64
        %v1819 = vpop.permute.xlu0 %1818
        %1820 = vrot.lane.b32.xlu0 %v1222, 64
        %v1821 = vpop.permute.xlu0 %1820
        %1822 = vrot.lane.b32.xlu0 %v1223, 64
        %v1823 = vpop.permute.xlu0 %1822
        %1824 = vrot.lane.b32.xlu0 %v1224, 64
        %v1825 = vpop.permute.xlu0 %1824
        %1826 = vrot.lane.b32.xlu0 %v1225, 64
        %v1827 = vpop.permute.xlu0 %1826
        %1828 = vrot.lane.b32.xlu0 %v1226, 64
        %v1829 = vpop.permute.xlu0 %1828
        %1830 = vrot.lane.b32.xlu0 %v1227, 64
        %v1831 = vpop.permute.xlu0 %1830
        %1832 = vrot.lane.b32.xlu0 %v1228, 64
        %v1833 = vpop.permute.xlu0 %1832
        %1834 = vrot.lane.b32.xlu0 %v1229, 64
        %v1835 = vpop.permute.xlu0 %1834
        %1836 = vrot.lane.b32.xlu0 %v1230, 64
        %v1837 = vpop.permute.xlu0 %1836
        %1838 = vrot.lane.b32.xlu0 %v1231, 64
        %v1839 = vpop.permute.xlu0 %1838
        %1840 = vrot.lane.b32.xlu0 %v1232, 64
        %v1841 = vpop.permute.xlu0 %1840
        %1842 = vrot.lane.b32.xlu0 %v1233, 64
        %v1843 = vpop.permute.xlu0 %1842
        %1844 = vrot.lane.b32.xlu0 %v1234, 64
        %v1845 = vpop.permute.xlu0 %1844
        %1846 = vrot.lane.b32.xlu0 %v957, 64
        %v1847 = vpop.permute.xlu0 %1846
        %1848 = vrot.lane.b32.xlu0 %v962, 64
        %v1849 = vpop.permute.xlu0 %1848
        %1850 = vrot.lane.b32.xlu0 %v967, 64
        %v1851 = vpop.permute.xlu0 %1850
        %1852 = vrot.lane.b32.xlu0 %v972, 64
        %v1853 = vpop.permute.xlu0 %1852
        %1854 = vrot.lane.b32.xlu0 %v977, 64
        %v1855 = vpop.permute.xlu0 %1854
        %1856 = vrot.lane.b32.xlu0 %v982, 64
        %v1857 = vpop.permute.xlu0 %1856
        %1858 = vrot.lane.b32.xlu0 %v987, 64
        %v1859 = vpop.permute.xlu0 %1858
        %1860 = vrot.lane.b32.xlu0 %v992, 64
        %v1861 = vpop.permute.xlu0 %1860
        %1862 = vrot.lane.b32.xlu0 %v997, 64
        %v1863 = vpop.permute.xlu0 %1862
        %1864 = vrot.lane.b32.xlu0 %v1002, 64
        %v1865 = vpop.permute.xlu0 %1864
        %1866 = vrot.lane.b32.xlu0 %v1007, 64
        %v1867 = vpop.permute.xlu0 %1866
        %1868 = vrot.lane.b32.xlu0 %v1012, 64
        %v1869 = vpop.permute.xlu0 %1868
        %1870 = vrot.lane.b32.xlu0 %v1017, 64
        %v1871 = vpop.permute.xlu0 %1870
        %1872 = vrot.lane.b32.xlu0 %v1022, 64
        %v1873 = vpop.permute.xlu0 %1872
        %1874 = vrot.lane.b32.xlu0 %v1027, 64
        %v1875 = vpop.permute.xlu0 %1874
        %1876 = vrot.lane.b32.xlu0 %v1032, 64
        %v1877 = vpop.permute.xlu0 %1876
        %v1878 = vsel %vm1235, %v1815, 0
        %v1880 = vsel %vm1235, %v1817, 0
        %v1882 = vsel %vm1235, %v1819, 0
        %v1884 = vsel %vm1235, %v1821, 0
        %v1886 = vsel %vm1235, %v1823, 0
        %v1888 = vsel %vm1235, %v1825, 0
        %v1890 = vsel %vm1235, %v1827, 0
        %v1892 = vsel %vm1235, %v1829, 0
        %v1894 = vsel %vm1235, %v1831, 0
        %v1896 = vsel %vm1235, %v1833, 0
        %v1898 = vsel %vm1235, %v1835, 0
        %v1900 = vsel %vm1235, %v1837, 0
        %v1902 = vsel %vm1235, %v1839, 0
        %v1904 = vsel %vm1235, %v1841, 0
        %v1906 = vsel %vm1235, %v1843, 0
        %v1908 = vsel %vm1235, %v1845, 0
        %v1910 = vsel %vm1235, %v1847, 0
        %v1912 = vsel %vm1235, %v1849, 0
        %v1914 = vsel %vm1235, %v1851, 0
        %v1916 = vsel %vm1235, %v1853, 0
        %v1918 = vsel %vm1235, %v1855, 0
        %v1920 = vsel %vm1235, %v1857, 0
        %v1922 = vsel %vm1235, %v1859, 0
        %v1924 = vsel %vm1235, %v1861, 0
        %v1926 = vsel %vm1235, %v1863, 0
        %v1928 = vsel %vm1235, %v1865, 0
        %v1930 = vsel %vm1235, %v1867, 0
        %v1932 = vsel %vm1235, %v1869, 0
        %v1934 = vsel %vm1235, %v1871, 0
        %v1936 = vsel %vm1235, %v1873, 0
        %v1938 = vsel %vm1235, %v1875, 0
        %v1940 = vsel %vm1235, %v1877, 0
        %1942 = vmatprep.subr.mxu0 0.0
        %1943 = vmatpush1.xpose.msra.mxu0 %v1910
        %1944 = vmatprep.subr.mxu0 0.0
        %1945 = vmatpush1.xpose.msra.mxu0 %v1912
        %1946 = vmatprep.subr.mxu0 0.0
        %1947 = vmatpush1.xpose.msra.mxu0 %v1914
        %1948 = vmatprep.subr.mxu0 0.0
        %1949 = vmatpush1.xpose.msra.mxu0 %v1916
        %1950 = vmatprep.subr.mxu0 0.0
        %1951 = vmatpush1.xpose.msra.mxu0 %v1918
        %1952 = vmatprep.subr.mxu0 0.0
        %1953 = vmatpush1.xpose.msra.mxu0 %v1920
        %1954 = vmatprep.subr.mxu0 0.0
        %1955 = vmatpush1.xpose.msra.mxu0 %v1922
        %1956 = vmatprep.subr.mxu0 0.0
        %1957 = vmatpush1.xpose.msra.mxu0 %v1924
        %1958 = vmatprep.subr.mxu0 0.0
        %1959 = vmatpush1.xpose.msra.mxu0 %v1926
        %1960 = vmatprep.subr.mxu0 0.0
        %1961 = vmatpush1.xpose.msra.mxu0 %v1928
        %1962 = vmatprep.subr.mxu0 0.0
        %1963 = vmatpush1.xpose.msra.mxu0 %v1930
        %1964 = vmatprep.subr.mxu0 0.0
        %1965 = vmatpush1.xpose.msra.mxu0 %v1932
        %1966 = vmatprep.subr.mxu0 0.0
        %1967 = vmatpush1.xpose.msra.mxu0 %v1934
        %1968 = vmatprep.subr.mxu0 0.0
        %1969 = vmatpush1.xpose.msra.mxu0 %v1936
        %1970 = vmatprep.subr.mxu0 0.0
        %1971 = vmatpush1.xpose.msra.mxu0 %v1938
        %1972 = vmatprep.subr.mxu0 0.0
        %1973 = vmatpush1.xpose.msra.mxu0 %v1940
        %1974 = vmatprep.subr.mxu0 0.0
        %1975 = vmatpush1.xpose.msra.mxu0 0.0
        %1976 = vmatprep.subr.mxu0 0.0
        %1977 = vmatpush1.xpose.msra.mxu0 0.0
        %1978 = vmatprep.subr.mxu0 0.0
        %1979 = vmatpush1.xpose.msra.mxu0 0.0
        %1980 = vmatprep.subr.mxu0 0.0
        %1981 = vmatpush1.xpose.msra.mxu0 0.0
        %1982 = vmatprep.subr.mxu0 0.0
        %1983 = vmatpush1.xpose.msra.mxu0 0.0
        %1984 = vmatprep.subr.mxu0 0.0
        %1985 = vmatpush1.xpose.msra.mxu0 0.0
        %1986 = vmatprep.subr.mxu0 0.0
        %1987 = vmatpush1.xpose.msra.mxu0 0.0
        %1988 = vmatprep.subr.mxu0 0.0
        %1989 = vmatpush1.xpose.msra.mxu0 0.0
        %1990 = vmatprep.subr.mxu0 0.0
        %1991 = vmatpush1.xpose.msra.mxu0 0.0
        %1992 = vmatprep.subr.mxu0 0.0
        %1993 = vmatpush1.xpose.msra.mxu0 0.0
        %1994 = vmatprep.subr.mxu0 0.0
        %1995 = vmatpush1.xpose.msra.mxu0 0.0
        %1996 = vmatprep.subr.mxu0 0.0
        %1997 = vmatpush1.xpose.msra.mxu0 0.0
        %1998 = vmatprep.subr.mxu0 0.0
        %1999 = vmatpush1.xpose.msra.mxu0 0.0
        %2000 = vmatprep.subr.mxu0 0.0
        %2001 = vmatpush1.xpose.msra.mxu0 0.0
        %2002 = vmatprep.subr.mxu0 0.0
        %2003 = vmatpush1.xpose.msra.mxu0 0.0
        %2004 = vmatprep.subr.mxu0 0.0
        %2005 = vmatpush1.xpose.msra.mxu0 0.0
        %2006 = vmatprep.mubr.f32.mxu0 0.0
        %2007 = vmatmul.mubr.f32.gmra.mrb[0].mxu0 %v1878
        %v2008 = vpop.f32.mrb[0].mxu0
        %v2009 = vadd.f32 0.0, %v2008
        %v2010 = vpop.f32.mrb[0].mxu0
        %2011 = vmatprep.mubr.f32.mxu0 0.0
        %2012 = vmatmul.mubr.f32.gmra.mrb[0].mxu0 %v1880
        %v2013 = vpop.f32.mrb[0].mxu0
        %v2014 = vadd.f32 0.0, %v2013
        %v2015 = vpop.f32.mrb[0].mxu0
        %2016 = vmatprep.mubr.f32.mxu0 0.0
        %2017 = vmatmul.mubr.f32.gmra.mrb[0].mxu0 %v1882
        %v2018 = vpop.f32.mrb[0].mxu0
        %v2019 = vadd.f32 0.0, %v2018
        %v2020 = vpop.f32.mrb[0].mxu0
        %2021 = vmatprep.mubr.f32.mxu0 0.0
        %2022 = vmatmul.mubr.f32.gmra.mrb[0].mxu0 %v1884
        %v2023 = vpop.f32.mrb[0].mxu0
        %v2024 = vadd.f32 0.0, %v2023
        %v2025 = vpop.f32.mrb[0].mxu0
        %2026 = vmatprep.mubr.f32.mxu0 0.0
        %2027 = vmatmul.mubr.f32.gmra.mrb[0].mxu0 %v1886
        %v2028 = vpop.f32.mrb[0].mxu0
        %v2029 = vadd.f32 0.0, %v2028
        %v2030 = vpop.f32.mrb[0].mxu0
        %2031 = vmatprep.mubr.f32.mxu0 0.0
        %2032 = vmatmul.mubr.f32.gmra.mrb[0].mxu0 %v1888
        %v2033 = vpop.f32.mrb[0].mxu0
        %v2034 = vadd.f32 0.0, %v2033
        %v2035 = vpop.f32.mrb[0].mxu0
        %2036 = vmatprep.mubr.f32.mxu0 0.0
        %2037 = vmatmul.mubr.f32.gmra.mrb[0].mxu0 %v1890
        %v2038 = vpop.f32.mrb[0].mxu0
        %v2039 = vadd.f32 0.0, %v2038
        %v2040 = vpop.f32.mrb[0].mxu0
        %2041 = vmatprep.mubr.f32.mxu0 0.0
        %2042 = vmatmul.mubr.f32.gmra.mrb[0].mxu0 %v1892
        %v2043 = vpop.f32.mrb[0].mxu0
        %v2044 = vadd.f32 0.0, %v2043
        %v2045 = vpop.f32.mrb[0].mxu0
        %2046 = vmatprep.mubr.f32.mxu0 0.0
        %2047 = vmatmul.mubr.f32.gmra.mrb[0].mxu0 %v1894
        %v2048 = vpop.f32.mrb[0].mxu0
        %v2049 = vadd.f32 0.0, %v2048
        %v2050 = vpop.f32.mrb[0].mxu0
        %2051 = vmatprep.mubr.f32.mxu0 0.0
        %2052 = vmatmul.mubr.f32.gmra.mrb[0].mxu0 %v1896
        %v2053 = vpop.f32.mrb[0].mxu0
        %v2054 = vadd.f32 0.0, %v2053
        %v2055 = vpop.f32.mrb[0].mxu0
        %2056 = vmatprep.mubr.f32.mxu0 0.0
        %2057 = vmatmul.mubr.f32.gmra.mrb[0].mxu0 %v1898
        %v2058 = vpop.f32.mrb[0].mxu0
        %v2059 = vadd.f32 0.0, %v2058
        %v2060 = vpop.f32.mrb[0].mxu0
        %2061 = vmatprep.mubr.f32.mxu0 0.0
        %2062 = vmatmul.mubr.f32.gmra.mrb[0].mxu0 %v1900
        %v2063 = vpop.f32.mrb[0].mxu0
        %v2064 = vadd.f32 0.0, %v2063
        %v2065 = vpop.f32.mrb[0].mxu0
        %2066 = vmatprep.mubr.f32.mxu0 0.0
        %2067 = vmatmul.mubr.f32.gmra.mrb[0].mxu0 %v1902
        %v2068 = vpop.f32.mrb[0].mxu0
        %v2069 = vadd.f32 0.0, %v2068
        %v2070 = vpop.f32.mrb[0].mxu0
        %2071 = vmatprep.mubr.f32.mxu0 0.0
        %2072 = vmatmul.mubr.f32.gmra.mrb[0].mxu0 %v1904
        %v2073 = vpop.f32.mrb[0].mxu0
        %v2074 = vadd.f32 0.0, %v2073
        %v2075 = vpop.f32.mrb[0].mxu0
        %2076 = vmatprep.mubr.f32.mxu0 0.0
        %2077 = vmatmul.mubr.f32.gmra.mrb[0].mxu0 %v1906
        %v2078 = vpop.f32.mrb[0].mxu0
        %v2079 = vadd.f32 0.0, %v2078
        %v2080 = vpop.f32.mrb[0].mxu0
        %2081 = vmatprep.mubr.f32.mxu0 0.0
        %2082 = vmatmul.mubr.f32.gmra.mrb[0].mxu0 %v1908
        %v2083 = vpop.f32.mrb[0].mxu0
        %v2084 = vadd.f32 0.0, %v2083
        %v2085 = vpop.f32.mrb[0].mxu0
        %2086 = vdwg.mxu0
        %2087 = vmax.xlane.f32.xlu0 %v2009
        %v2088 = vpop.xlane.xlu0 %2087
        %2089 = vmax.xlane.f32.xlu0 %v2014
        %v2090 = vpop.xlane.xlu0 %2089
        %2091 = vmax.xlane.f32.xlu0 %v2019
        %v2092 = vpop.xlane.xlu0 %2091
        %2093 = vmax.xlane.f32.xlu0 %v2024
        %v2094 = vpop.xlane.xlu0 %2093
        %2095 = vmax.xlane.f32.xlu0 %v2029
        %v2096 = vpop.xlane.xlu0 %2095
        %2097 = vmax.xlane.f32.xlu0 %v2034
        %v2098 = vpop.xlane.xlu0 %2097
        %2099 = vmax.xlane.f32.xlu0 %v2039
        %v2100 = vpop.xlane.xlu0 %2099
        %2101 = vmax.xlane.f32.xlu0 %v2044
        %v2102 = vpop.xlane.xlu0 %2101
        %2103 = vmax.xlane.f32.xlu0 %v2049
        %v2104 = vpop.xlane.xlu0 %2103
        %2105 = vmax.xlane.f32.xlu0 %v2054
        %v2106 = vpop.xlane.xlu0 %2105
        %2107 = vmax.xlane.f32.xlu0 %v2059
        %v2108 = vpop.xlane.xlu0 %2107
        %2109 = vmax.xlane.f32.xlu0 %v2064
        %v2110 = vpop.xlane.xlu0 %2109
        %2111 = vmax.xlane.f32.xlu0 %v2069
        %v2112 = vpop.xlane.xlu0 %2111
        %2113 = vmax.xlane.f32.xlu0 %v2074
        %v2114 = vpop.xlane.xlu0 %2113
        %2115 = vmax.xlane.f32.xlu0 %v2079
        %v2116 = vpop.xlane.xlu0 %2115
        %2117 = vmax.xlane.f32.xlu0 %v2084
        %v2118 = vpop.xlane.xlu0 %2117
        %v2119 = vsub.f32 %v2009, %v2088
        %v2120 = vsub.f32 %v2014, %v2090
        %v2121 = vsub.f32 %v2019, %v2092
        %v2122 = vsub.f32 %v2024, %v2094
        %v2123 = vsub.f32 %v2029, %v2096
        %v2124 = vsub.f32 %v2034, %v2098
        %v2125 = vsub.f32 %v2039, %v2100
        %v2126 = vsub.f32 %v2044, %v2102
        %v2127 = vsub.f32 %v2049, %v2104
        %v2128 = vsub.f32 %v2054, %v2106
        %v2129 = vsub.f32 %v2059, %v2108
        %v2130 = vsub.f32 %v2064, %v2110
        %v2131 = vsub.f32 %v2069, %v2112
        %v2132 = vsub.f32 %v2074, %v2114
        %v2133 = vsub.f32 %v2079, %v2116
        %v2134 = vsub.f32 %v2084, %v2118
        %v2135 = vmul.f32 %v2119, 1.442695
        %v2136 = vpow.pop %v2135
        %v2137 = vmul.f32 %v2120, 1.442695
        %v2138 = vpow.pop %v2137
        %v2139 = vmul.f32 %v2121, 1.442695
        %v2140 = vpow.pop %v2139
        %v2141 = vmul.f32 %v2122, 1.442695
        %v2142 = vpow.pop %v2141
        %v2143 = vmul.f32 %v2123, 1.442695
        %v2144 = vpow.pop %v2143
        %v2145 = vmul.f32 %v2124, 1.442695
        %v2146 = vpow.pop %v2145
        %v2147 = vmul.f32 %v2125, 1.442695
        %v2148 = vpow.pop %v2147
        %v2149 = vmul.f32 %v2126, 1.442695
        %v2150 = vpow.pop %v2149
        %v2151 = vmul.f32 %v2127, 1.442695
        %v2152 = vpow.pop %v2151
        %v2153 = vmul.f32 %v2128, 1.442695
        %v2154 = vpow.pop %v2153
        %v2155 = vmul.f32 %v2129, 1.442695
        %v2156 = vpow.pop %v2155
        %v2157 = vmul.f32 %v2130, 1.442695
        %v2158 = vpow.pop %v2157
        %v2159 = vmul.f32 %v2131, 1.442695
        %v2160 = vpow.pop %v2159
        %v2161 = vmul.f32 %v2132, 1.442695
        %v2162 = vpow.pop %v2161
        %v2163 = vmul.f32 %v2133, 1.442695
        %v2164 = vpow.pop %v2163
        %v2165 = vmul.f32 %v2134, 1.442695
        %v2166 = vpow.pop %v2165
        %2167 = vadd.xlane.f32.xlu0 %v2136
        %v2168 = vpop.xlane.xlu0 %2167
        %2169 = vadd.xlane.f32.xlu0 %v2138
        %v2170 = vpop.xlane.xlu0 %2169
        %2171 = vadd.xlane.f32.xlu0 %v2140
        %v2172 = vpop.xlane.xlu0 %2171
        %2173 = vadd.xlane.f32.xlu0 %v2142
        %v2174 = vpop.xlane.xlu0 %2173
        %2175 = vadd.xlane.f32.xlu0 %v2144
        %v2176 = vpop.xlane.xlu0 %2175
        %2177 = vadd.xlane.f32.xlu0 %v2146
        %v2178 = vpop.xlane.xlu0 %2177
        %2179 = vadd.xlane.f32.xlu0 %v2148
        %v2180 = vpop.xlane.xlu0 %2179
        %2181 = vadd.xlane.f32.xlu0 %v2150
        %v2182 = vpop.xlane.xlu0 %2181
        %2183 = vadd.xlane.f32.xlu0 %v2152
        %v2184 = vpop.xlane.xlu0 %2183
        %2185 = vadd.xlane.f32.xlu0 %v2154
        %v2186 = vpop.xlane.xlu0 %2185
        %2187 = vadd.xlane.f32.xlu0 %v2156
        %v2188 = vpop.xlane.xlu0 %2187
        %2189 = vadd.xlane.f32.xlu0 %v2158
        %v2190 = vpop.xlane.xlu0 %2189
        %2191 = vadd.xlane.f32.xlu0 %v2160
        %v2192 = vpop.xlane.xlu0 %2191
        %2193 = vadd.xlane.f32.xlu0 %v2162
        %v2194 = vpop.xlane.xlu0 %2193
        %2195 = vadd.xlane.f32.xlu0 %v2164
        %v2196 = vpop.xlane.xlu0 %2195
        %2197 = vadd.xlane.f32.xlu0 %v2166
        %v2198 = vpop.xlane.xlu0 %2197
        %v2199 = vrcp.pop %v2168
        %v2200 = vmul.f32 1.0, %v2199
        %v2201 = vrcp.pop %v2170
        %v2202 = vmul.f32 1.0, %v2201
        %v2203 = vrcp.pop %v2172
        %v2204 = vmul.f32 1.0, %v2203
        %v2205 = vrcp.pop %v2174
        %v2206 = vmul.f32 1.0, %v2205
        %v2207 = vrcp.pop %v2176
        %v2208 = vmul.f32 1.0, %v2207
        %v2209 = vrcp.pop %v2178
        %v2210 = vmul.f32 1.0, %v2209
        %v2211 = vrcp.pop %v2180
        %v2212 = vmul.f32 1.0, %v2211
        %v2213 = vrcp.pop %v2182
        %v2214 = vmul.f32 1.0, %v2213
        %v2215 = vrcp.pop %v2184
        %v2216 = vmul.f32 1.0, %v2215
        %v2217 = vrcp.pop %v2186
        %v2218 = vmul.f32 1.0, %v2217
        %v2219 = vrcp.pop %v2188
        %v2220 = vmul.f32 1.0, %v2219
        %v2221 = vrcp.pop %v2190
        %v2222 = vmul.f32 1.0, %v2221
        %v2223 = vrcp.pop %v2192
        %v2224 = vmul.f32 1.0, %v2223
        %v2225 = vrcp.pop %v2194
        %v2226 = vmul.f32 1.0, %v2225
        %v2227 = vrcp.pop %v2196
        %v2228 = vmul.f32 1.0, %v2227
        %v2229 = vrcp.pop %v2198
        %v2230 = vmul.f32 1.0, %v2229
        %v2231 = vmul.f32 %v2136, %v2200
        %v2232 = vmul.f32 %v2138, %v2202
        %v2233 = vmul.f32 %v2140, %v2204
        %v2234 = vmul.f32 %v2142, %v2206
        %v2235 = vmul.f32 %v2144, %v2208
        %v2236 = vmul.f32 %v2146, %v2210
        %v2237 = vmul.f32 %v2148, %v2212
        %v2238 = vmul.f32 %v2150, %v2214
        %v2239 = vmul.f32 %v2152, %v2216
        %v2240 = vmul.f32 %v2154, %v2218
        %v2241 = vmul.f32 %v2156, %v2220
        %v2242 = vmul.f32 %v2158, %v2222
        %v2243 = vmul.f32 %v2160, %v2224
        %v2244 = vmul.f32 %v2162, %v2226
        %v2245 = vmul.f32 %v2164, %v2228
        %v2246 = vmul.f32 %v2166, %v2230
        %s2247 = scalar_lea.vmem %s587, 128 [#allocation13]
        %2248 = vst [vmem:[%s2247] sm:$0xff] %v2231
        %2249 = vst [vmem:[%s2247 + $0x8] sm:$0xff] %v2232
        %2250 = vst [vmem:[%s2247 + $0x10] sm:$0xff] %v2233
        %2251 = vst [vmem:[%s2247 + $0x18] sm:$0xff] %v2234
        %2252 = vst [vmem:[%s2247 + $0x20] sm:$0xff] %v2235
        %2253 = vst [vmem:[%s2247 + $0x28] sm:$0xff] %v2236
        %2254 = vst [vmem:[%s2247 + $0x30] sm:$0xff] %v2237
        %2255 = vst [vmem:[%s2247 + $0x38] sm:$0xff] %v2238
        %2256 = vst [vmem:[%s2247 + $0x40] sm:$0xff] %v2239
        %2257 = vst [vmem:[%s2247 + $0x48] sm:$0xff] %v2240
        %2258 = vst [vmem:[%s2247 + $0x50] sm:$0xff] %v2241
        %2259 = vst [vmem:[%s2247 + $0x58] sm:$0xff] %v2242
        %2260 = vst [vmem:[%s2247 + $0x60] sm:$0xff] %v2243
        %2261 = vst [vmem:[%s2247 + $0x68] sm:$0xff] %v2244
        %2262 = vst [vmem:[%s2247 + $0x70] sm:$0xff] %v2245
        %2263 = vst [vmem:[%s2247 + $0x78] sm:$0xff] %v2246
        %2280 = vrot.lane.b32.xlu0 %v1141, 64
        %v2281 = vpop.permute.xlu0 %2280
        %2282 = vrot.lane.b32.xlu0 %v1146, 64
        %v2283 = vpop.permute.xlu0 %2282
        %2284 = vrot.lane.b32.xlu0 %v1151, 64
        %v2285 = vpop.permute.xlu0 %2284
        %2286 = vrot.lane.b32.xlu0 %v1156, 64
        %v2287 = vpop.permute.xlu0 %2286
        %2288 = vrot.lane.b32.xlu0 %v1161, 64
        %v2289 = vpop.permute.xlu0 %2288
        %2290 = vrot.lane.b32.xlu0 %v1166, 64
        %v2291 = vpop.permute.xlu0 %2290
        %2292 = vrot.lane.b32.xlu0 %v1171, 64
        %v2293 = vpop.permute.xlu0 %2292
        %2294 = vrot.lane.b32.xlu0 %v1176, 64
        %v2295 = vpop.permute.xlu0 %2294
        %2296 = vrot.lane.b32.xlu0 %v1181, 64
        %v2297 = vpop.permute.xlu0 %2296
        %2298 = vrot.lane.b32.xlu0 %v1186, 64
        %v2299 = vpop.permute.xlu0 %2298
        %2300 = vrot.lane.b32.xlu0 %v1191, 64
        %v2301 = vpop.permute.xlu0 %2300
        %2302 = vrot.lane.b32.xlu0 %v1196, 64
        %v2303 = vpop.permute.xlu0 %2302
        %2304 = vrot.lane.b32.xlu0 %v1201, 64
        %v2305 = vpop.permute.xlu0 %2304
        %2306 = vrot.lane.b32.xlu0 %v1206, 64
        %v2307 = vpop.permute.xlu0 %2306
        %2308 = vrot.lane.b32.xlu0 %v1211, 64
        %v2309 = vpop.permute.xlu0 %2308
        %2310 = vrot.lane.b32.xlu0 %v1216, 64
        %v2311 = vpop.permute.xlu0 %2310
        %2328 = vmatprep.subr.mxu0 0.0
        %2329 = vmatpush1.msra.mxu0 %v2281
        %2330 = vmatprep.subr.mxu0 0.0
        %2331 = vmatpush1.msra.mxu0 %v2283
        %2332 = vmatprep.subr.mxu0 0.0
        %2333 = vmatpush1.msra.mxu0 %v2285
        %2334 = vmatprep.subr.mxu0 0.0
        %2335 = vmatpush1.msra.mxu0 %v2287
        %2336 = vmatprep.subr.mxu0 0.0
        %2337 = vmatpush1.msra.mxu0 %v2289
        %2338 = vmatprep.subr.mxu0 0.0
        %2339 = vmatpush1.msra.mxu0 %v2291
        %2340 = vmatprep.subr.mxu0 0.0
        %2341 = vmatpush1.msra.mxu0 %v2293
        %2342 = vmatprep.subr.mxu0 0.0
        %2343 = vmatpush1.msra.mxu0 %v2295
        %2344 = vmatprep.subr.mxu0 0.0
        %2345 = vmatpush1.msra.mxu0 %v2297
        %2346 = vmatprep.subr.mxu0 0.0
        %2347 = vmatpush1.msra.mxu0 %v2299
        %2348 = vmatprep.subr.mxu0 0.0
        %2349 = vmatpush1.msra.mxu0 %v2301
        %2350 = vmatprep.subr.mxu0 0.0
        %2351 = vmatpush1.msra.mxu0 %v2303
        %2352 = vmatprep.subr.mxu0 0.0
        %2353 = vmatpush1.msra.mxu0 %v2305
        %2354 = vmatprep.subr.mxu0 0.0
        %2355 = vmatpush1.msra.mxu0 %v2307
        %2356 = vmatprep.subr.mxu0 0.0
        %2357 = vmatpush1.msra.mxu0 %v2309
        %2358 = vmatprep.subr.mxu0 0.0
        %2359 = vmatpush1.msra.mxu0 %v2311
        %2360 = vmatprep.subr.mxu0 0.0
        %2361 = vmatpush1.msra.mxu0 0.0
        %2362 = vmatprep.subr.mxu0 0.0
        %2363 = vmatpush1.msra.mxu0 0.0
        %2364 = vmatprep.subr.mxu0 0.0
        %2365 = vmatpush1.msra.mxu0 0.0
        %2366 = vmatprep.subr.mxu0 0.0
        %2367 = vmatpush1.msra.mxu0 0.0
        %2368 = vmatprep.subr.mxu0 0.0
        %2369 = vmatpush1.msra.mxu0 0.0
        %2370 = vmatprep.subr.mxu0 0.0
        %2371 = vmatpush1.msra.mxu0 0.0
        %2372 = vmatprep.subr.mxu0 0.0
        %2373 = vmatpush1.msra.mxu0 0.0
        %2374 = vmatprep.subr.mxu0 0.0
        %2375 = vmatpush1.msra.mxu0 0.0
        %2376 = vmatprep.subr.mxu0 0.0
        %2377 = vmatpush1.msra.mxu0 0.0
        %2378 = vmatprep.subr.mxu0 0.0
        %2379 = vmatpush1.msra.mxu0 0.0
        %2380 = vmatprep.subr.mxu0 0.0
        %2381 = vmatpush1.msra.mxu0 0.0
        %2382 = vmatprep.subr.mxu0 0.0
        %2383 = vmatpush1.msra.mxu0 0.0
        %2384 = vmatprep.subr.mxu0 0.0
        %2385 = vmatpush1.msra.mxu0 0.0
        %2386 = vmatprep.subr.mxu0 0.0
        %2387 = vmatpush1.msra.mxu0 0.0
        %2388 = vmatprep.subr.mxu0 0.0
        %2389 = vmatpush1.msra.mxu0 0.0
        %2390 = vmatprep.subr.mxu0 0.0
        %2391 = vmatpush1.msra.mxu0 0.0
        %2392 = vmatprep.mubr.f32.mxu0 0.0
        %2393 = vmatmul.mubr.f32.gmra.mrb[0].mxu0 %v2231
        %v2394 = vpop.f32.mrb[0].mxu0
        %v2395 = vadd.f32 0.0, %v2394
        %v2396 = vpop.f32.mrb[0].mxu0
        %2397 = vmatprep.mubr.f32.mxu0 0.0
        %2398 = vmatmul.mubr.f32.gmra.mrb[0].mxu0 %v2232
        %v2399 = vpop.f32.mrb[0].mxu0
        %v2400 = vadd.f32 0.0, %v2399
        %v2401 = vpop.f32.mrb[0].mxu0
        %2402 = vmatprep.mubr.f32.mxu0 0.0
        %2403 = vmatmul.mubr.f32.gmra.mrb[0].mxu0 %v2233
        %v2404 = vpop.f32.mrb[0].mxu0
        %v2405 = vadd.f32 0.0, %v2404
        %v2406 = vpop.f32.mrb[0].mxu0
        %2407 = vmatprep.mubr.f32.mxu0 0.0
        %2408 = vmatmul.mubr.f32.gmra.mrb[0].mxu0 %v2234
        %v2409 = vpop.f32.mrb[0].mxu0
        %v2410 = vadd.f32 0.0, %v2409
        %v2411 = vpop.f32.mrb[0].mxu0
        %2412 = vmatprep.mubr.f32.mxu0 0.0
        %2413 = vmatmul.mubr.f32.gmra.mrb[0].mxu0 %v2235
        %v2414 = vpop.f32.mrb[0].mxu0
        %v2415 = vadd.f32 0.0, %v2414
        %v2416 = vpop.f32.mrb[0].mxu0
        %2417 = vmatprep.mubr.f32.mxu0 0.0
        %2418 = vmatmul.mubr.f32.gmra.mrb[0].mxu0 %v2236
        %v2419 = vpop.f32.mrb[0].mxu0
        %v2420 = vadd.f32 0.0, %v2419
        %v2421 = vpop.f32.mrb[0].mxu0
        %2422 = vmatprep.mubr.f32.mxu0 0.0
        %2423 = vmatmul.mubr.f32.gmra.mrb[0].mxu0 %v2237
        %v2424 = vpop.f32.mrb[0].mxu0
        %v2425 = vadd.f32 0.0, %v2424
        %v2426 = vpop.f32.mrb[0].mxu0
        %2427 = vmatprep.mubr.f32.mxu0 0.0
        %2428 = vmatmul.mubr.f32.gmra.mrb[0].mxu0 %v2238
        %v2429 = vpop.f32.mrb[0].mxu0
        %v2430 = vadd.f32 0.0, %v2429
        %v2431 = vpop.f32.mrb[0].mxu0
        %2432 = vmatprep.mubr.f32.mxu0 0.0
        %2433 = vmatmul.mubr.f32.gmra.mrb[0].mxu0 %v2239
        %v2434 = vpop.f32.mrb[0].mxu0
        %v2435 = vadd.f32 0.0, %v2434
        %v2436 = vpop.f32.mrb[0].mxu0
        %2437 = vmatprep.mubr.f32.mxu0 0.0
        %2438 = vmatmul.mubr.f32.gmra.mrb[0].mxu0 %v2240
        %v2439 = vpop.f32.mrb[0].mxu0
        %v2440 = vadd.f32 0.0, %v2439
        %v2441 = vpop.f32.mrb[0].mxu0
        %2442 = vmatprep.mubr.f32.mxu0 0.0
        %2443 = vmatmul.mubr.f32.gmra.mrb[0].mxu0 %v2241
        %v2444 = vpop.f32.mrb[0].mxu0
        %v2445 = vadd.f32 0.0, %v2444
        %v2446 = vpop.f32.mrb[0].mxu0
        %2447 = vmatprep.mubr.f32.mxu0 0.0
        %2448 = vmatmul.mubr.f32.gmra.mrb[0].mxu0 %v2242
        %v2449 = vpop.f32.mrb[0].mxu0
        %v2450 = vadd.f32 0.0, %v2449
        %v2451 = vpop.f32.mrb[0].mxu0
        %2452 = vmatprep.mubr.f32.mxu0 0.0
        %2453 = vmatmul.mubr.f32.gmra.mrb[0].mxu0 %v2243
        %v2454 = vpop.f32.mrb[0].mxu0
        %v2455 = vadd.f32 0.0, %v2454
        %v2456 = vpop.f32.mrb[0].mxu0
        %2457 = vmatprep.mubr.f32.mxu0 0.0
        %2458 = vmatmul.mubr.f32.gmra.mrb[0].mxu0 %v2244
        %v2459 = vpop.f32.mrb[0].mxu0
        %v2460 = vadd.f32 0.0, %v2459
        %v2461 = vpop.f32.mrb[0].mxu0
        %2462 = vmatprep.mubr.f32.mxu0 0.0
        %2463 = vmatmul.mubr.f32.gmra.mrb[0].mxu0 %v2245
        %v2464 = vpop.f32.mrb[0].mxu0
        %v2465 = vadd.f32 0.0, %v2464
        %v2466 = vpop.f32.mrb[0].mxu0
        %2467 = vmatprep.mubr.f32.mxu0 0.0
        %2468 = vmatmul.mubr.f32.gmra.mrb[0].mxu0 %v2246
        %v2469 = vpop.f32.mrb[0].mxu0
        %v2470 = vadd.f32 0.0, %v2469
        %v2471 = vpop.f32.mrb[0].mxu0
        %2472 = vdwg.mxu0
        %v2473 = vld [vmem:[%s517 + $0x80] sm:$0xff]
        %v2474 = vld [vmem:[%s517 + $0x88] sm:$0xff]
        %v2475 = vld [vmem:[%s517 + $0x90] sm:$0xff]
        %v2476 = vld [vmem:[%s517 + $0x98] sm:$0xff]
        %v2477 = vld [vmem:[%s517 + $0xa0] sm:$0xff]
        %v2478 = vld [vmem:[%s517 + $0xa8] sm:$0xff]
        %v2479 = vld [vmem:[%s517 + $0xb0] sm:$0xff]
        %v2480 = vld [vmem:[%s517 + $0xb8] sm:$0xff]
        %v2481 = vld [vmem:[%s517 + $0xc0] sm:$0xff]
        %v2482 = vld [vmem:[%s517 + $0xc8] sm:$0xff]
        %v2483 = vld [vmem:[%s517 + $0xd0] sm:$0xff]
        %v2484 = vld [vmem:[%s517 + $0xd8] sm:$0xff]
        %v2485 = vld [vmem:[%s517 + $0xe0] sm:$0xff]
        %v2486 = vld [vmem:[%s517 + $0xe8] sm:$0xff]
        %v2487 = vld [vmem:[%s517 + $0xf0] sm:$0xff]
        %v2488 = vld [vmem:[%s517 + $0xf8] sm:$0xff]
        %v2490 = vsel %vm1235, %v2395, 0
        %v2493 = vsel %vm1235, %v2400, 0
        %v2496 = vsel %vm1235, %v2405, 0
        %v2499 = vsel %vm1235, %v2410, 0
        %v2502 = vsel %vm1235, %v2415, 0
        %v2505 = vsel %vm1235, %v2420, 0
        %v2508 = vsel %vm1235, %v2425, 0
        %v2511 = vsel %vm1235, %v2430, 0
        %v2514 = vsel %vm1235, %v2435, 0
        %v2517 = vsel %vm1235, %v2440, 0
        %v2520 = vsel %vm1235, %v2445, 0
        %v2523 = vsel %vm1235, %v2450, 0
        %v2526 = vsel %vm1235, %v2455, 0
        %v2529 = vsel %vm1235, %v2460, 0
        %v2532 = vsel %vm1235, %v2465, 0
        %v2535 = vsel %vm1235, %v2470, 0
        %2537 = vmatprep.subr.mxu0 %v2474
        %2538 = vmatpush1.msra.mxu0 %v2473
        %2539 = vmatprep.subr.mxu0 %v2476
        %2540 = vmatpush1.msra.mxu0 %v2475
        %2541 = vmatprep.subr.mxu0 %v2478
        %2542 = vmatpush1.msra.mxu0 %v2477
        %2543 = vmatprep.subr.mxu0 %v2480
        %2544 = vmatpush1.msra.mxu0 %v2479
        %2545 = vmatprep.subr.mxu0 %v2482
        %2546 = vmatpush1.msra.mxu0 %v2481
        %2547 = vmatprep.subr.mxu0 %v2484
        %2548 = vmatpush1.msra.mxu0 %v2483
        %2549 = vmatprep.subr.mxu0 %v2486
        %2550 = vmatpush1.msra.mxu0 %v2485
        %2551 = vmatprep.subr.mxu0 %v2488
        %2552 = vmatpush1.msra.mxu0 %v2487
        %2553 = vmatprep.subr.mxu0 0.0
        %2554 = vmatpush1.msra.mxu0 0.0
        %2555 = vmatprep.subr.mxu0 0.0
        %2556 = vmatpush1.msra.mxu0 0.0
        %2557 = vmatprep.subr.mxu0 0.0
        %2558 = vmatpush1.msra.mxu0 0.0
        %2559 = vmatprep.subr.mxu0 0.0
        %2560 = vmatpush1.msra.mxu0 0.0
        %2561 = vmatprep.subr.mxu0 0.0
        %2562 = vmatpush1.msra.mxu0 0.0
        %2563 = vmatprep.subr.mxu0 0.0
        %2564 = vmatpush1.msra.mxu0 0.0
        %2565 = vmatprep.subr.mxu0 0.0
        %2566 = vmatpush1.msra.mxu0 0.0
        %2567 = vmatprep.subr.mxu0 0.0
        %2568 = vmatpush1.msra.mxu0 0.0
        %2569 = vmatprep.subr.mxu0 0.0
        %2570 = vmatpush1.msra.mxu0 0.0
        %2571 = vmatprep.subr.mxu0 0.0
        %2572 = vmatpush1.msra.mxu0 0.0
        %2573 = vmatprep.subr.mxu0 0.0
        %2574 = vmatpush1.msra.mxu0 0.0
        %2575 = vmatprep.subr.mxu0 0.0
        %2576 = vmatpush1.msra.mxu0 0.0
        %2577 = vmatprep.subr.mxu0 0.0
        %2578 = vmatpush1.msra.mxu0 0.0
        %2579 = vmatprep.subr.mxu0 0.0
        %2580 = vmatpush1.msra.mxu0 0.0
        %2581 = vmatprep.subr.mxu0 0.0
        %2582 = vmatpush1.msra.mxu0 0.0
        %2583 = vmatprep.subr.mxu0 0.0
        %2584 = vmatpush1.msra.mxu0 0.0
        %2585 = vmatprep.subr.mxu0 0.0
        %2586 = vmatpush1.msra.mxu0 0.0
        %2587 = vmatprep.subr.mxu0 0.0
        %2588 = vmatpush1.msra.mxu0 0.0
        %2589 = vmatprep.subr.mxu0 0.0
        %2590 = vmatpush1.msra.mxu0 0.0
        %2591 = vmatprep.subr.mxu0 0.0
        %2592 = vmatpush1.msra.mxu0 0.0
        %2593 = vmatprep.subr.mxu0 0.0
        %2594 = vmatpush1.msra.mxu0 0.0
        %2595 = vmatprep.subr.mxu0 0.0
        %2596 = vmatpush1.msra.mxu0 0.0
        %2597 = vmatprep.subr.mxu0 0.0
        %2598 = vmatpush1.msra.mxu0 0.0
        %2599 = vmatprep.subr.mxu0 0.0
        %2600 = vmatpush1.msra.mxu0 0.0
        %2601 = vmatprep.mubr.f32.mxu0 0.0
        %2602 = vmatmul.mubr.f32.gmra.mrb[0].mxu0 %v2490
        %v2603 = vpop.f32.mrb[0].mxu0
        %v2604 = vadd.f32 0.0, %v2603
        %v2605 = vpop.f32.mrb[0].mxu0
        %v2606 = vadd.f32 0.0, %v2605
        %2607 = vmatprep.mubr.f32.mxu0 0.0
        %2608 = vmatmul.mubr.f32.gmra.mrb[0].mxu0 %v2493
        %v2609 = vpop.f32.mrb[0].mxu0
        %v2610 = vadd.f32 0.0, %v2609
        %v2611 = vpop.f32.mrb[0].mxu0
        %v2612 = vadd.f32 0.0, %v2611
        %2613 = vmatprep.mubr.f32.mxu0 0.0
        %2614 = vmatmul.mubr.f32.gmra.mrb[0].mxu0 %v2496
        %v2615 = vpop.f32.mrb[0].mxu0
        %v2616 = vadd.f32 0.0, %v2615
        %v2617 = vpop.f32.mrb[0].mxu0
        %v2618 = vadd.f32 0.0, %v2617
        %2619 = vmatprep.mubr.f32.mxu0 0.0
        %2620 = vmatmul.mubr.f32.gmra.mrb[0].mxu0 %v2499
        %v2621 = vpop.f32.mrb[0].mxu0
        %v2622 = vadd.f32 0.0, %v2621
        %v2623 = vpop.f32.mrb[0].mxu0
        %v2624 = vadd.f32 0.0, %v2623
        %2625 = vmatprep.mubr.f32.mxu0 0.0
        %2626 = vmatmul.mubr.f32.gmra.mrb[0].mxu0 %v2502
        %v2627 = vpop.f32.mrb[0].mxu0
        %v2628 = vadd.f32 0.0, %v2627
        %v2629 = vpop.f32.mrb[0].mxu0
        %v2630 = vadd.f32 0.0, %v2629
        %2631 = vmatprep.mubr.f32.mxu0 0.0
        %2632 = vmatmul.mubr.f32.gmra.mrb[0].mxu0 %v2505
        %v2633 = vpop.f32.mrb[0].mxu0
        %v2634 = vadd.f32 0.0, %v2633
        %v2635 = vpop.f32.mrb[0].mxu0
        %v2636 = vadd.f32 0.0, %v2635
        %2637 = vmatprep.mubr.f32.mxu0 0.0
        %2638 = vmatmul.mubr.f32.gmra.mrb[0].mxu0 %v2508
        %v2639 = vpop.f32.mrb[0].mxu0
        %v2640 = vadd.f32 0.0, %v2639
        %v2641 = vpop.f32.mrb[0].mxu0
        %v2642 = vadd.f32 0.0, %v2641
        %2643 = vmatprep.mubr.f32.mxu0 0.0
        %2644 = vmatmul.mubr.f32.gmra.mrb[0].mxu0 %v2511
        %v2645 = vpop.f32.mrb[0].mxu0
        %v2646 = vadd.f32 0.0, %v2645
        %v2647 = vpop.f32.mrb[0].mxu0
        %v2648 = vadd.f32 0.0, %v2647
        %2649 = vmatprep.mubr.f32.mxu0 0.0
        %2650 = vmatmul.mubr.f32.gmra.mrb[0].mxu0 %v2514
        %v2651 = vpop.f32.mrb[0].mxu0
        %v2652 = vadd.f32 0.0, %v2651
        %v2653 = vpop.f32.mrb[0].mxu0
        %v2654 = vadd.f32 0.0, %v2653
        %2655 = vmatprep.mubr.f32.mxu0 0.0
        %2656 = vmatmul.mubr.f32.gmra.mrb[0].mxu0 %v2517
        %v2657 = vpop.f32.mrb[0].mxu0
        %v2658 = vadd.f32 0.0, %v2657
        %v2659 = vpop.f32.mrb[0].mxu0
        %v2660 = vadd.f32 0.0, %v2659
        %2661 = vmatprep.mubr.f32.mxu0 0.0
        %2662 = vmatmul.mubr.f32.gmra.mrb[0].mxu0 %v2520
        %v2663 = vpop.f32.mrb[0].mxu0
        %v2664 = vadd.f32 0.0, %v2663
        %v2665 = vpop.f32.mrb[0].mxu0
        %v2666 = vadd.f32 0.0, %v2665
        %2667 = vmatprep.mubr.f32.mxu0 0.0
        %2668 = vmatmul.mubr.f32.gmra.mrb[0].mxu0 %v2523
        %v2669 = vpop.f32.mrb[0].mxu0
        %v2670 = vadd.f32 0.0, %v2669
        %v2671 = vpop.f32.mrb[0].mxu0
        %v2672 = vadd.f32 0.0, %v2671
        %2673 = vmatprep.mubr.f32.mxu0 0.0
        %2674 = vmatmul.mubr.f32.gmra.mrb[0].mxu0 %v2526
        %v2675 = vpop.f32.mrb[0].mxu0
        %v2676 = vadd.f32 0.0, %v2675
        %v2677 = vpop.f32.mrb[0].mxu0
        %v2678 = vadd.f32 0.0, %v2677
        %2679 = vmatprep.mubr.f32.mxu0 0.0
        %2680 = vmatmul.mubr.f32.gmra.mrb[0].mxu0 %v2529
        %v2681 = vpop.f32.mrb[0].mxu0
        %v2682 = vadd.f32 0.0, %v2681
        %v2683 = vpop.f32.mrb[0].mxu0
        %v2684 = vadd.f32 0.0, %v2683
        %2685 = vmatprep.mubr.f32.mxu0 0.0
        %2686 = vmatmul.mubr.f32.gmra.mrb[0].mxu0 %v2532
        %v2687 = vpop.f32.mrb[0].mxu0
        %v2688 = vadd.f32 0.0, %v2687
        %v2689 = vpop.f32.mrb[0].mxu0
        %v2690 = vadd.f32 0.0, %v2689
        %2691 = vmatprep.mubr.f32.mxu0 0.0
        %2692 = vmatmul.mubr.f32.gmra.mrb[0].mxu0 %v2535
        %v2693 = vpop.f32.mrb[0].mxu0
        %v2694 = vadd.f32 0.0, %v2693
        %v2695 = vpop.f32.mrb[0].mxu0
        %v2696 = vadd.f32 0.0, %v2695
        %2697 = vdwg.mxu0
        %v2699 = vsel %vm1235, %v1720, 0
        %v2702 = vsel %vm1235, %v1725, 0
        %v2705 = vsel %vm1235, %v1730, 0
        %v2708 = vsel %vm1235, %v1735, 0
        %v2711 = vsel %vm1235, %v1740, 0
        %v2714 = vsel %vm1235, %v1745, 0
        %v2717 = vsel %vm1235, %v1750, 0
        %v2720 = vsel %vm1235, %v1755, 0
        %v2723 = vsel %vm1235, %v1760, 0
        %v2726 = vsel %vm1235, %v1765, 0
        %v2729 = vsel %vm1235, %v1770, 0
        %v2732 = vsel %vm1235, %v1775, 0
        %v2735 = vsel %vm1235, %v1780, 0
        %v2738 = vsel %vm1235, %v1785, 0
        %v2741 = vsel %vm1235, %v1790, 0
        %v2744 = vsel %vm1235, %v1795, 0
        %2746 = vmatprep.subr.mxu0 %v1799
        %2747 = vmatpush1.msra.mxu0 %v1798
        %2748 = vmatprep.subr.mxu0 %v1801
        %2749 = vmatpush1.msra.mxu0 %v1800
        %2750 = vmatprep.subr.mxu0 %v1803
        %2751 = vmatpush1.msra.mxu0 %v1802
        %2752 = vmatprep.subr.mxu0 %v1805
        %2753 = vmatpush1.msra.mxu0 %v1804
        %2754 = vmatprep.subr.mxu0 %v1807
        %2755 = vmatpush1.msra.mxu0 %v1806
        %2756 = vmatprep.subr.mxu0 %v1809
        %2757 = vmatpush1.msra.mxu0 %v1808
        %2758 = vmatprep.subr.mxu0 %v1811
        %2759 = vmatpush1.msra.mxu0 %v1810
        %2760 = vmatprep.subr.mxu0 %v1813
        %2761 = vmatpush1.msra.mxu0 %v1812
        %2762 = vmatprep.subr.mxu0 0.0
        %2763 = vmatpush1.msra.mxu0 0.0
        %2764 = vmatprep.subr.mxu0 0.0
        %2765 = vmatpush1.msra.mxu0 0.0
        %2766 = vmatprep.subr.mxu0 0.0
        %2767 = vmatpush1.msra.mxu0 0.0
        %2768 = vmatprep.subr.mxu0 0.0
        %2769 = vmatpush1.msra.mxu0 0.0
        %2770 = vmatprep.subr.mxu0 0.0
        %2771 = vmatpush1.msra.mxu0 0.0
        %2772 = vmatprep.subr.mxu0 0.0
        %2773 = vmatpush1.msra.mxu0 0.0
        %2774 = vmatprep.subr.mxu0 0.0
        %2775 = vmatpush1.msra.mxu0 0.0
        %2776 = vmatprep.subr.mxu0 0.0
        %2777 = vmatpush1.msra.mxu0 0.0
        %2778 = vmatprep.subr.mxu0 0.0
        %2779 = vmatpush1.msra.mxu0 0.0
        %2780 = vmatprep.subr.mxu0 0.0
        %2781 = vmatpush1.msra.mxu0 0.0
        %2782 = vmatprep.subr.mxu0 0.0
        %2783 = vmatpush1.msra.mxu0 0.0
        %2784 = vmatprep.subr.mxu0 0.0
        %2785 = vmatpush1.msra.mxu0 0.0
        %2786 = vmatprep.subr.mxu0 0.0
        %2787 = vmatpush1.msra.mxu0 0.0
        %2788 = vmatprep.subr.mxu0 0.0
        %2789 = vmatpush1.msra.mxu0 0.0
        %2790 = vmatprep.subr.mxu0 0.0
        %2791 = vmatpush1.msra.mxu0 0.0
        %2792 = vmatprep.subr.mxu0 0.0
        %2793 = vmatpush1.msra.mxu0 0.0
        %2794 = vmatprep.subr.mxu0 0.0
        %2795 = vmatpush1.msra.mxu0 0.0
        %2796 = vmatprep.subr.mxu0 0.0
        %2797 = vmatpush1.msra.mxu0 0.0
        %2798 = vmatprep.subr.mxu0 0.0
        %2799 = vmatpush1.msra.mxu0 0.0
        %2800 = vmatprep.subr.mxu0 0.0
        %2801 = vmatpush1.msra.mxu0 0.0
        %2802 = vmatprep.subr.mxu0 0.0
        %2803 = vmatpush1.msra.mxu0 0.0
        %2804 = vmatprep.subr.mxu0 0.0
        %2805 = vmatpush1.msra.mxu0 0.0
        %2806 = vmatprep.subr.mxu0 0.0
        %2807 = vmatpush1.msra.mxu0 0.0
        %2808 = vmatprep.subr.mxu0 0.0
        %2809 = vmatpush1.msra.mxu0 0.0
        %2810 = vmatprep.mubr.f32.mxu0 0.0
        %2811 = vmatmul.mubr.f32.gmra.mrb[0].mxu0 %v2699
        %v2812 = vpop.f32.mrb[0].mxu0
        %v2813 = vadd.f32 %v2604, %v2812
        %v2814 = vpop.f32.mrb[0].mxu0
        %v2815 = vadd.f32 %v2606, %v2814
        %2816 = vmatprep.mubr.f32.mxu0 0.0
        %2817 = vmatmul.mubr.f32.gmra.mrb[0].mxu0 %v2702
        %v2818 = vpop.f32.mrb[0].mxu0
        %v2819 = vadd.f32 %v2610, %v2818
        %v2820 = vpop.f32.mrb[0].mxu0
        %v2821 = vadd.f32 %v2612, %v2820
        %2822 = vmatprep.mubr.f32.mxu0 0.0
        %2823 = vmatmul.mubr.f32.gmra.mrb[0].mxu0 %v2705
        %v2824 = vpop.f32.mrb[0].mxu0
        %v2825 = vadd.f32 %v2616, %v2824
        %v2826 = vpop.f32.mrb[0].mxu0
        %v2827 = vadd.f32 %v2618, %v2826
        %2828 = vmatprep.mubr.f32.mxu0 0.0
        %2829 = vmatmul.mubr.f32.gmra.mrb[0].mxu0 %v2708
        %v2830 = vpop.f32.mrb[0].mxu0
        %v2831 = vadd.f32 %v2622, %v2830
        %v2832 = vpop.f32.mrb[0].mxu0
        %v2833 = vadd.f32 %v2624, %v2832
        %2834 = vmatprep.mubr.f32.mxu0 0.0
        %2835 = vmatmul.mubr.f32.gmra.mrb[0].mxu0 %v2711
        %v2836 = vpop.f32.mrb[0].mxu0
        %v2837 = vadd.f32 %v2628, %v2836
        %v2838 = vpop.f32.mrb[0].mxu0
        %v2839 = vadd.f32 %v2630, %v2838
        %2840 = vmatprep.mubr.f32.mxu0 0.0
        %2841 = vmatmul.mubr.f32.gmra.mrb[0].mxu0 %v2714
        %v2842 = vpop.f32.mrb[0].mxu0
        %v2843 = vadd.f32 %v2634, %v2842
        %v2844 = vpop.f32.mrb[0].mxu0
        %v2845 = vadd.f32 %v2636, %v2844
        %2846 = vmatprep.mubr.f32.mxu0 0.0
        %2847 = vmatmul.mubr.f32.gmra.mrb[0].mxu0 %v2717
        %v2848 = vpop.f32.mrb[0].mxu0
        %v2849 = vadd.f32 %v2640, %v2848
        %v2850 = vpop.f32.mrb[0].mxu0
        %v2851 = vadd.f32 %v2642, %v2850
        %2852 = vmatprep.mubr.f32.mxu0 0.0
        %2853 = vmatmul.mubr.f32.gmra.mrb[0].mxu0 %v2720
        %v2854 = vpop.f32.mrb[0].mxu0
        %v2855 = vadd.f32 %v2646, %v2854
        %v2856 = vpop.f32.mrb[0].mxu0
        %v2857 = vadd.f32 %v2648, %v2856
        %2858 = vmatprep.mubr.f32.mxu0 0.0
        %2859 = vmatmul.mubr.f32.gmra.mrb[0].mxu0 %v2723
        %v2860 = vpop.f32.mrb[0].mxu0
        %v2861 = vadd.f32 %v2652, %v2860
        %v2862 = vpop.f32.mrb[0].mxu0
        %v2863 = vadd.f32 %v2654, %v2862
        %2864 = vmatprep.mubr.f32.mxu0 0.0
        %2865 = vmatmul.mubr.f32.gmra.mrb[0].mxu0 %v2726
        %v2866 = vpop.f32.mrb[0].mxu0
        %v2867 = vadd.f32 %v2658, %v2866
        %v2868 = vpop.f32.mrb[0].mxu0
        %v2869 = vadd.f32 %v2660, %v2868
        %2870 = vmatprep.mubr.f32.mxu0 0.0
        %2871 = vmatmul.mubr.f32.gmra.mrb[0].mxu0 %v2729
        %v2872 = vpop.f32.mrb[0].mxu0
        %v2873 = vadd.f32 %v2664, %v2872
        %v2874 = vpop.f32.mrb[0].mxu0
        %v2875 = vadd.f32 %v2666, %v2874
        %2876 = vmatprep.mubr.f32.mxu0 0.0
        %2877 = vmatmul.mubr.f32.gmra.mrb[0].mxu0 %v2732
        %v2878 = vpop.f32.mrb[0].mxu0
        %v2879 = vadd.f32 %v2670, %v2878
        %v2880 = vpop.f32.mrb[0].mxu0
        %v2881 = vadd.f32 %v2672, %v2880
        %2882 = vmatprep.mubr.f32.mxu0 0.0
        %2883 = vmatmul.mubr.f32.gmra.mrb[0].mxu0 %v2735
        %v2884 = vpop.f32.mrb[0].mxu0
        %v2885 = vadd.f32 %v2676, %v2884
        %v2886 = vpop.f32.mrb[0].mxu0
        %v2887 = vadd.f32 %v2678, %v2886
        %2888 = vmatprep.mubr.f32.mxu0 0.0
        %2889 = vmatmul.mubr.f32.gmra.mrb[0].mxu0 %v2738
        %v2890 = vpop.f32.mrb[0].mxu0
        %v2891 = vadd.f32 %v2682, %v2890
        %v2892 = vpop.f32.mrb[0].mxu0
        %v2893 = vadd.f32 %v2684, %v2892
        %2894 = vmatprep.mubr.f32.mxu0 0.0
        %2895 = vmatmul.mubr.f32.gmra.mrb[0].mxu0 %v2741
        %v2896 = vpop.f32.mrb[0].mxu0
        %v2897 = vadd.f32 %v2688, %v2896
        %v2898 = vpop.f32.mrb[0].mxu0
        %v2899 = vadd.f32 %v2690, %v2898
        %2900 = vmatprep.mubr.f32.mxu0 0.0
        %2901 = vmatmul.mubr.f32.gmra.mrb[0].mxu0 %v2744
        %v2902 = vpop.f32.mrb[0].mxu0
        %v2903 = vadd.f32 %v2694, %v2902
        %v2904 = vpop.f32.mrb[0].mxu0
        %v2905 = vadd.f32 %v2696, %v2904
        %2906 = vdwg.mxu0
        %v2907 = vld [vmem:[#allocation2] sm:$0xff]
        %v2908 = vld [vmem:[#allocation2 + $0x8] sm:$0xff]
        %v2909 = vld [vmem:[#allocation2 + $0x10] sm:$0xff]
        %v2910 = vld [vmem:[#allocation2 + $0x18] sm:$0xff]
        %v2911 = vld [vmem:[#allocation2 + $0x20] sm:$0xff]
        %v2912 = vld [vmem:[#allocation2 + $0x28] sm:$0xff]
        %v2913 = vld [vmem:[#allocation2 + $0x30] sm:$0xff]
        %v2914 = vld [vmem:[#allocation2 + $0x38] sm:$0xff]
        %v2915 = vld [vmem:[#allocation2 + $0x40] sm:$0xff]
        %v2916 = vld [vmem:[#allocation2 + $0x48] sm:$0xff]
        %v2917 = vld [vmem:[#allocation2 + $0x50] sm:$0xff]
        %v2918 = vld [vmem:[#allocation2 + $0x58] sm:$0xff]
        %v2919 = vld [vmem:[#allocation2 + $0x60] sm:$0xff]
        %v2920 = vld [vmem:[#allocation2 + $0x68] sm:$0xff]
        %v2921 = vld [vmem:[#allocation2 + $0x70] sm:$0xff]
        %v2922 = vld [vmem:[#allocation2 + $0x78] sm:$0xff]
        %v2923 = vld [vmem:[#allocation2 + $0x80] sm:$0xff]
        %v2924 = vld [vmem:[#allocation2 + $0x88] sm:$0xff]
        %v2925 = vld [vmem:[#allocation2 + $0x90] sm:$0xff]
        %v2926 = vld [vmem:[#allocation2 + $0x98] sm:$0xff]
        %v2927 = vld [vmem:[#allocation2 + $0xa0] sm:$0xff]
        %v2928 = vld [vmem:[#allocation2 + $0xa8] sm:$0xff]
        %v2929 = vld [vmem:[#allocation2 + $0xb0] sm:$0xff]
        %v2930 = vld [vmem:[#allocation2 + $0xb8] sm:$0xff]
        %v2931 = vld [vmem:[#allocation2 + $0xc0] sm:$0xff]
        %v2932 = vld [vmem:[#allocation2 + $0xc8] sm:$0xff]
        %v2933 = vld [vmem:[#allocation2 + $0xd0] sm:$0xff]
        %v2934 = vld [vmem:[#allocation2 + $0xd8] sm:$0xff]
        %v2935 = vld [vmem:[#allocation2 + $0xe0] sm:$0xff]
        %v2936 = vld [vmem:[#allocation2 + $0xe8] sm:$0xff]
        %v2937 = vld [vmem:[#allocation2 + $0xf0] sm:$0xff]
        %v2938 = vld [vmem:[#allocation2 + $0xf8] sm:$0xff]
        %v2939 = vadd.f32 %v2907, %v2813
        %v2940 = vadd.f32 %v2908, %v2815
        %v2941 = vadd.f32 %v2909, %v2819
        %v2942 = vadd.f32 %v2910, %v2821
        %v2943 = vadd.f32 %v2911, %v2825
        %v2944 = vadd.f32 %v2912, %v2827
        %v2945 = vadd.f32 %v2913, %v2831
        %v2946 = vadd.f32 %v2914, %v2833
        %v2947 = vadd.f32 %v2915, %v2837
        %v2948 = vadd.f32 %v2916, %v2839
        %v2949 = vadd.f32 %v2917, %v2843
        %v2950 = vadd.f32 %v2918, %v2845
        %v2951 = vadd.f32 %v2919, %v2849
        %v2952 = vadd.f32 %v2920, %v2851
        %v2953 = vadd.f32 %v2921, %v2855
        %v2954 = vadd.f32 %v2922, %v2857
        %v2955 = vadd.f32 %v2923, %v2861
        %v2956 = vadd.f32 %v2924, %v2863
        %v2957 = vadd.f32 %v2925, %v2867
        %v2958 = vadd.f32 %v2926, %v2869
        %v2959 = vadd.f32 %v2927, %v2873
        %v2960 = vadd.f32 %v2928, %v2875
        %v2961 = vadd.f32 %v2929, %v2879
        %v2962 = vadd.f32 %v2930, %v2881
        %v2963 = vadd.f32 %v2931, %v2885
        %v2964 = vadd.f32 %v2932, %v2887
        %v2965 = vadd.f32 %v2933, %v2891
        %v2966 = vadd.f32 %v2934, %v2893
        %v2967 = vadd.f32 %v2935, %v2897
        %v2968 = vadd.f32 %v2936, %v2899
        %v2969 = vadd.f32 %v2937, %v2903
        %v2970 = vadd.f32 %v2938, %v2905
        %2971 = vst [vmem:[#allocation2] sm:$0xff] %v2939
        %2972 = vst [vmem:[#allocation2 + $0x8] sm:$0xff] %v2940
        %2973 = vst [vmem:[#allocation2 + $0x10] sm:$0xff] %v2941
        %2974 = vst [vmem:[#allocation2 + $0x18] sm:$0xff] %v2942
        %2975 = vst [vmem:[#allocation2 + $0x20] sm:$0xff] %v2943
        %2976 = vst [vmem:[#allocation2 + $0x28] sm:$0xff] %v2944
        %2977 = vst [vmem:[#allocation2 + $0x30] sm:$0xff] %v2945
        %2978 = vst [vmem:[#allocation2 + $0x38] sm:$0xff] %v2946
        %2979 = vst [vmem:[#allocation2 + $0x40] sm:$0xff] %v2947
        %2980 = vst [vmem:[#allocation2 + $0x48] sm:$0xff] %v2948
        %2981 = vst [vmem:[#allocation2 + $0x50] sm:$0xff] %v2949
        %2982 = vst [vmem:[#allocation2 + $0x58] sm:$0xff] %v2950
        %2983 = vst [vmem:[#allocation2 + $0x60] sm:$0xff] %v2951
        %2984 = vst [vmem:[#allocation2 + $0x68] sm:$0xff] %v2952
        %2985 = vst [vmem:[#allocation2 + $0x70] sm:$0xff] %v2953
        %2986 = vst [vmem:[#allocation2 + $0x78] sm:$0xff] %v2954
        %2987 = vst [vmem:[#allocation2 + $0x80] sm:$0xff] %v2955
        %2988 = vst [vmem:[#allocation2 + $0x88] sm:$0xff] %v2956
        %2989 = vst [vmem:[#allocation2 + $0x90] sm:$0xff] %v2957
        %2990 = vst [vmem:[#allocation2 + $0x98] sm:$0xff] %v2958
        %2991 = vst [vmem:[#allocation2 + $0xa0] sm:$0xff] %v2959
        %2992 = vst [vmem:[#allocation2 + $0xa8] sm:$0xff] %v2960
        %2993 = vst [vmem:[#allocation2 + $0xb0] sm:$0xff] %v2961
        %2994 = vst [vmem:[#allocation2 + $0xb8] sm:$0xff] %v2962
        %2995 = vst [vmem:[#allocation2 + $0xc0] sm:$0xff] %v2963
        %2996 = vst [vmem:[#allocation2 + $0xc8] sm:$0xff] %v2964
        %2997 = vst [vmem:[#allocation2 + $0xd0] sm:$0xff] %v2965
        %2998 = vst [vmem:[#allocation2 + $0xd8] sm:$0xff] %v2966
        %2999 = vst [vmem:[#allocation2 + $0xe0] sm:$0xff] %v2967
        %3000 = vst [vmem:[#allocation2 + $0xe8] sm:$0xff] %v2968
        %3001 = vst [vmem:[#allocation2 + $0xf0] sm:$0xff] %v2969
        %3002 = vst [vmem:[#allocation2 + $0xf8] sm:$0xff] %v2970
        %p3003 = scmp.eq.s32.totalorder %s42, 1
        // Predicated region
        $region81: #{tpu_custom_call.1} parent=55 // pred_check
          %p3004 = pneg %p3003
        $region82: #{tpu_custom_call.1} parent=55 // pred_check_branch
          %3006 = sbr.rel (%p3004) target = $region84
        $region83: #{tpu_custom_call.1} parent=55 // pred_region
          %v3007 = vld [vmem:[#allocation2] sm:$0xff]
          %v3008 = vld [vmem:[#allocation2 + $0x8] sm:$0xff]
          %v3009 = vld [vmem:[#allocation2 + $0x10] sm:$0xff]
          %v3010 = vld [vmem:[#allocation2 + $0x18] sm:$0xff]
          %v3011 = vld [vmem:[#allocation2 + $0x20] sm:$0xff]
          %v3012 = vld [vmem:[#allocation2 + $0x28] sm:$0xff]
          %v3013 = vld [vmem:[#allocation2 + $0x30] sm:$0xff]
          %v3014 = vld [vmem:[#allocation2 + $0x38] sm:$0xff]
          %v3015 = vld [vmem:[#allocation2 + $0x40] sm:$0xff]
          %v3016 = vld [vmem:[#allocation2 + $0x48] sm:$0xff]
          %v3017 = vld [vmem:[#allocation2 + $0x50] sm:$0xff]
          %v3018 = vld [vmem:[#allocation2 + $0x58] sm:$0xff]
          %v3019 = vld [vmem:[#allocation2 + $0x60] sm:$0xff]
          %v3020 = vld [vmem:[#allocation2 + $0x68] sm:$0xff]
          %v3021 = vld [vmem:[#allocation2 + $0x70] sm:$0xff]
          %v3022 = vld [vmem:[#allocation2 + $0x78] sm:$0xff]
          %v3023 = vld [vmem:[#allocation2 + $0x80] sm:$0xff]
          %v3024 = vld [vmem:[#allocation2 + $0x88] sm:$0xff]
          %v3025 = vld [vmem:[#allocation2 + $0x90] sm:$0xff]
          %v3026 = vld [vmem:[#allocation2 + $0x98] sm:$0xff]
          %v3027 = vld [vmem:[#allocation2 + $0xa0] sm:$0xff]
          %v3028 = vld [vmem:[#allocation2 + $0xa8] sm:$0xff]
          %v3029 = vld [vmem:[#allocation2 + $0xb0] sm:$0xff]
          %v3030 = vld [vmem:[#allocation2 + $0xb8] sm:$0xff]
          %v3031 = vld [vmem:[#allocation2 + $0xc0] sm:$0xff]
          %v3032 = vld [vmem:[#allocation2 + $0xc8] sm:$0xff]
          %v3033 = vld [vmem:[#allocation2 + $0xd0] sm:$0xff]
          %v3034 = vld [vmem:[#allocation2 + $0xd8] sm:$0xff]
          %v3035 = vld [vmem:[#allocation2 + $0xe0] sm:$0xff]
          %v3036 = vld [vmem:[#allocation2 + $0xe8] sm:$0xff]
          %v3037 = vld [vmem:[#allocation2 + $0xf0] sm:$0xff]
          %v3038 = vld [vmem:[#allocation2 + $0xf8] sm:$0xff]
          %v3039 = vld [vmem:[%s8] sm:$0x3]
          %v3041 = vlaneseq
          %v3042 = vshrl.u32 %v3041, 7
          %v3043 = vsub.s32 0, %v3042
          %v3044 = vrot.slane %v3039, %v3043
          %v3045 = vlaneseq
          %v3046 = vshrl.u32 %v3045, 7
          %v3047 = vsub.s32 1, %v3046
          %v3048 = vrot.slane %v3039, %v3047
          %v3051 = vadd.f32 %v3007, %v3044
          %v3052 = vadd.f32 %v3008, %v3048
          %v3053 = vadd.f32 %v3009, %v3044
          %v3054 = vadd.f32 %v3010, %v3048
          %v3055 = vadd.f32 %v3011, %v3044
          %v3056 = vadd.f32 %v3012, %v3048
          %v3057 = vadd.f32 %v3013, %v3044
          %v3058 = vadd.f32 %v3014, %v3048
          %v3059 = vadd.f32 %v3015, %v3044
          %v3060 = vadd.f32 %v3016, %v3048
          %v3061 = vadd.f32 %v3017, %v3044
          %v3062 = vadd.f32 %v3018, %v3048
          %v3063 = vadd.f32 %v3019, %v3044
          %v3064 = vadd.f32 %v3020, %v3048
          %v3065 = vadd.f32 %v3021, %v3044
          %v3066 = vadd.f32 %v3022, %v3048
          %v3067 = vadd.f32 %v3023, %v3044
          %v3068 = vadd.f32 %v3024, %v3048
          %v3069 = vadd.f32 %v3025, %v3044
          %v3070 = vadd.f32 %v3026, %v3048
          %v3071 = vadd.f32 %v3027, %v3044
          %v3072 = vadd.f32 %v3028, %v3048
          %v3073 = vadd.f32 %v3029, %v3044
          %v3074 = vadd.f32 %v3030, %v3048
          %v3075 = vadd.f32 %v3031, %v3044
          %v3076 = vadd.f32 %v3032, %v3048
          %v3077 = vadd.f32 %v3033, %v3044
          %v3078 = vadd.f32 %v3034, %v3048
          %v3079 = vadd.f32 %v3035, %v3044
          %v3080 = vadd.f32 %v3036, %v3048
          %v3081 = vadd.f32 %v3037, %v3044
          %v3082 = vadd.f32 %v3038, %v3048
          %3083 = vst [vmem:[%s580] sm:$0xff] %v3051
          %3084 = vst [vmem:[%s580 + $0x8] sm:$0xff] %v3052
          %3085 = vst [vmem:[%s580 + $0x10] sm:$0xff] %v3053
          %3086 = vst [vmem:[%s580 + $0x18] sm:$0xff] %v3054
          %3087 = vst [vmem:[%s580 + $0x20] sm:$0xff] %v3055
          %3088 = vst [vmem:[%s580 + $0x28] sm:$0xff] %v3056
          %3089 = vst [vmem:[%s580 + $0x30] sm:$0xff] %v3057
          %3090 = vst [vmem:[%s580 + $0x38] sm:$0xff] %v3058
          %3091 = vst [vmem:[%s580 + $0x40] sm:$0xff] %v3059
          %3092 = vst [vmem:[%s580 + $0x48] sm:$0xff] %v3060
          %3093 = vst [vmem:[%s580 + $0x50] sm:$0xff] %v3061
          %3094 = vst [vmem:[%s580 + $0x58] sm:$0xff] %v3062
          %3095 = vst [vmem:[%s580 + $0x60] sm:$0xff] %v3063
          %3096 = vst [vmem:[%s580 + $0x68] sm:$0xff] %v3064
          %3097 = vst [vmem:[%s580 + $0x70] sm:$0xff] %v3065
          %3098 = vst [vmem:[%s580 + $0x78] sm:$0xff] %v3066
          %3099 = vst [vmem:[%s580 + $0x80] sm:$0xff] %v3067
          %3100 = vst [vmem:[%s580 + $0x88] sm:$0xff] %v3068
          %3101 = vst [vmem:[%s580 + $0x90] sm:$0xff] %v3069
          %3102 = vst [vmem:[%s580 + $0x98] sm:$0xff] %v3070
          %3103 = vst [vmem:[%s580 + $0xa0] sm:$0xff] %v3071
          %3104 = vst [vmem:[%s580 + $0xa8] sm:$0xff] %v3072
          %3105 = vst [vmem:[%s580 + $0xb0] sm:$0xff] %v3073
          %3106 = vst [vmem:[%s580 + $0xb8] sm:$0xff] %v3074
          %3107 = vst [vmem:[%s580 + $0xc0] sm:$0xff] %v3075
          %3108 = vst [vmem:[%s580 + $0xc8] sm:$0xff] %v3076
          %3109 = vst [vmem:[%s580 + $0xd0] sm:$0xff] %v3077
          %3110 = vst [vmem:[%s580 + $0xd8] sm:$0xff] %v3078
          %3111 = vst [vmem:[%s580 + $0xe0] sm:$0xff] %v3079
          %3112 = vst [vmem:[%s580 + $0xe8] sm:$0xff] %v3080
          %3113 = vst [vmem:[%s580 + $0xf0] sm:$0xff] %v3081
          %3114 = vst [vmem:[%s580 + $0xf8] sm:$0xff] %v3082
        $region84: #{tpu_custom_call.1} parent=55 // pred_fallthru
          _
        %s3115 = sand.u32 %s286, 1
        %s3116 = scalar_lea.sflag [#allocation5], %s3115
        %s3117 = sand.u32 %s286, 1
        %s3118 = smul.addr %s3117, 256
        %s3119 = scalar_lea.vmem [#allocation12], %s3118
        %s3120 = sand.u32 %s314, 1
        %s3121 = scalar_lea.sflag [#allocation14], %s3120
        %s3122 = sand.u32 %s314, 1
        %s3123 = smul.addr %s3122, 256
        %s3124 = scalar_lea.vmem [#allocation13], %s3123
        // Predicated region
        $region85: #{tpu_custom_call.1} parent=55 // pred_check
          %p3125 = pneg %p296
        $region86: #{tpu_custom_call.1} parent=55 // pred_check_branch
          %3127 = sbr.rel (%p3125) target = $region88
        $region87: #{tpu_custom_call.1} parent=55 // pred_region
          %s3129 = ssub.s32 4096, 4096
          %3130 = vsyncadd %s3116, %s3129
          %s3131 = smul.addr %s41, 32
          %s3132 = smul.addr %s3131, 128
          %s3133 = scalar_lea.hbm %s9, %s3132
          %s3134 = sshll.u32 %s3119, 4
          %s3135 = int_to_ptr.vmem [resolvable:$true] %s3134
          %3140 = dma.vmem_to_hbm [thread:$0]  %s3135, 4096, %s3133, %s3116, 256, 256, 16
        $region88: #{tpu_custom_call.1} parent=55 // pred_fallthru
          _
        // Predicated region
        $region89: #{tpu_custom_call.1} parent=55 // pred_check
          %p3141 = pneg %p324
        $region90: #{tpu_custom_call.1} parent=55 // pred_check_branch
          %3143 = sbr.rel (%p3141) target = $region92
        $region91: #{tpu_custom_call.1} parent=55 // pred_region
          %s3144 = smul.u32 2, %s42
          %s3146 = ssub.s32 4096, 4096
          %3147 = vsyncadd %s3121, %s3146
          %s3148 = smul.addr %s3144, 16
          %s3149 = smul.addr %s41, 64
          %s3150 = sadd.s32 %s3148, %s3149
          %s3151 = smul.addr %s3150, 128
          %s3152 = scalar_lea.hbm %s10, %s3151
          %s3153 = sshll.u32 %s3124, 4
          %s3154 = int_to_ptr.vmem [resolvable:$true] %s3153
          %3159 = dma.vmem_to_hbm [thread:$0]  %s3154, 4096, %s3152, %s3121, 128, 128, 8
        $region92: #{tpu_custom_call.1} parent=55 // pred_fallthru
          _
      $region56: #{tpu_custom_call.1} parent=5 // pred_fallthru
        _
      %p3160 = scmp.le.s32.totalorder 2, %s32
      // Predicated region
      $region93: #{tpu_custom_call.1} parent=5 // pred_check
        %p3161 = pneg %p3160
      $region94: #{tpu_custom_call.1} parent=5 // pred_check_branch
        %3163 = sbr.rel (%p3161) target = $region96
      $region95: #{tpu_custom_call.1} parent=5 // pred_region
        %s3164 = ssub.s32 %s32, 2
        // Predicated region
        $region97: #{tpu_custom_call.1} parent=95 // pred_check
          %p3165 = pneg %p302
        $region98: #{tpu_custom_call.1} parent=95 // pred_check_branch
          %3167 = sbr.rel (%p3165) target = $region100
        $region99: #{tpu_custom_call.1} parent=95 // pred_region
          %s3168 = sand.u32 %s287, 1
          %s3169 = scalar_lea.sflag [#allocation5], %s3168
          %s3170 = sand.u32 %s287, 1
          %s3171 = smul.addr %s3170, 256
          %s3172 = scalar_lea.vmem [#allocation12], %s3171
          %3173 = dma.done %s3169, 4096
        $region100: #{tpu_custom_call.1} parent=95 // pred_fallthru
          _
        // Predicated region
        $region101: #{tpu_custom_call.1} parent=95 // pred_check
          %p3174 = pneg %p330
        $region102: #{tpu_custom_call.1} parent=95 // pred_check_branch
          %3176 = sbr.rel (%p3174) target = $region104
        $region103: #{tpu_custom_call.1} parent=95 // pred_region
          %s3177 = sand.u32 %s315, 1
          %s3178 = scalar_lea.sflag [#allocation14], %s3177
          %s3179 = sand.u32 %s315, 1
          %s3180 = smul.addr %s3179, 256
          %s3181 = scalar_lea.vmem [#allocation13], %s3180
          %3182 = dma.done %s3178, 4096
        $region104: #{tpu_custom_call.1} parent=95 // pred_fallthru
          _
      $region96: #{tpu_custom_call.1} parent=5 // pred_fallthru
        _
    $region6: #{tpu_custom_call.1} parent=1 // loop_footer
      %s36 = sadd.s32 1, %s32
    $region7: #{tpu_custom_call.1} parent=1 // loop_footer_branch
      %31 = sbr.rel target = $region3
    $region8: #{tpu_custom_call.1} parent=1 // loop_exit
      _
    %3183 = vsyncpa [#allocation4], 1
    %s3184 = scalar_lea.sflag [#allocation4], 1
    %3185 = vsyncpa %s3184, 1
    %3186 = vsyncpa [#allocation7], 1
    %s3187 = scalar_lea.sflag [#allocation7], 1
    %3188 = vsyncpa %s3187, 1
    %3189 = vsyncpa [#allocation10], 1
    %s3190 = scalar_lea.sflag [#allocation10], 1
    %3191 = vsyncpa %s3190, 1
    %3192 = vsyncpa [#allocation5], 1
    %s3193 = scalar_lea.sflag [#allocation5], 1
    %3194 = vsyncpa %s3193, 1
    %3195 = vsyncpa [#allocation14], 1
    %s3196 = scalar_lea.sflag [#allocation14], 1
    %3197 = vsyncpa %s3196, 1

</llo_original>
